<compile_context>
chip_gen: v7x
topology: tpu7x:2x2x1
jax: 0.10.0
libtpu: 0.0.40
codegen_flags: <defaults>
</compile_context>

<pallas_src>
import functools

import jax
import jax.numpy as jnp
from jax.experimental import pallas as pl
from jax.experimental.pallas import tpu as pltpu


RPN_HEAD_PAD = 128   # lane-dense padded width of the fused RPN head output
ROI_HEAD_PAD = 128   # lane-dense padded width of the fused ROI head output


# ----------------------------------------------------------------------------
# Fused kernel: backbone conv -> RPN (conv + heads + sigmoid) -> GAP -> ROI head
# ----------------------------------------------------------------------------
def _fused_rcnn_kernel(img_ref, wbb_ref, bbb_ref, wrpn_ref, brpn_ref,
                       wrh_ref, brh_ref,
                       w6_ref, b6_ref, w7_ref, b7_ref, wroi_ref, broi_ref,
                       feat_ref, rpn_ref, roi_ref,
                       ipad_ref, fpad_ref,
                       *, num_sigmoid, num_classes):
    H = fpad_ref.shape[0] - 2
    W = fpad_ref.shape[1]
    HW = H * W
    Cin = ipad_ref.shape[2]
    C = fpad_ref.shape[2]

    def im2col_taps(pad_ref, ch):
        """(HW, 9*ch) bf16 im2col taps from an H-padded (H+2, W, ch) scratch.

        H offsets are clean major-dim slices; W shifts go through the XLU
        (pltpu.roll) + an edge mask, so there are no misaligned slice/reshape
        VMEM copies per tap.  Tap order is (kh, kw, c) to match the
        (3,3,ch,cout)->(9*ch,cout) weight reshape."""
        col = jax.lax.broadcasted_iota(jnp.int32, (H, W, ch), 1)
        taps = []
        for kh in range(3):
            xs = pad_ref[kh:kh + H, :, :]                      # (H, W, ch) f32
            for kw in range(3):
                if kw == 1:
                    xkw = xs
                else:
                    xkw = pltpu.roll(xs, shift=(1 - kw) % W, axis=1)
                    edge = 0 if kw == 0 else W - 1
                    xkw = jnp.where(col == edge, 0.0, xkw)
                taps.append(xkw)
        stacked = jnp.concatenate(taps, axis=-1)               # (H, W, 9*ch)
        return stacked.reshape(HW, 9 * ch).astype(jnp.bfloat16)

    # ---- backbone 3x3 'same' conv: in-kernel im2col + ONE K=9*Cin matmul ----
    ipad_ref[0] = jnp.zeros((W, Cin), jnp.float32)             # only pad rows
    ipad_ref[H + 1] = jnp.zeros((W, Cin), jnp.float32)
    ipad_ref[1:H + 1] = img_ref[0]                             # (H, W, Cin) f32
    p = im2col_taps(ipad_ref, Cin)                             # (HW, 9*Cin) bf16
    feat = jnp.dot(p, wbb_ref[...], preferred_element_type=jnp.float32)
    feat = jnp.maximum(feat + bbb_ref[0, :], 0.0)              # (HW, C) f32
    feat_ref[0] = feat.astype(feat_ref.dtype)                  # bf16 writeback

    # ---- global average pool (ROIAlign stand-in source) ----
    pooled = jnp.mean(feat, axis=0, keepdims=True)             # (1, C) f32

    # ---- RPN 3x3 conv: in-kernel im2col + ONE K=9*C matmul ----
    fpad_ref[0] = jnp.zeros((W, C), jnp.float32)
    fpad_ref[H + 1] = jnp.zeros((W, C), jnp.float32)
    fpad_ref[1:H + 1] = feat.reshape(H, W, C)
    t = im2col_taps(fpad_ref, C)                               # (HW, 9*C) bf16
    r = jnp.dot(t, wrpn_ref[...], preferred_element_type=jnp.float32)
    r = jnp.maximum(r + brpn_ref[0, :], 0.0).astype(jnp.bfloat16)   # (HW, C)

    # ---- fused objectness|bbox 1x1 heads: one lane-dense (C,128) matmul ----
    head = jnp.dot(r, wrh_ref[...], preferred_element_type=jnp.float32)
    head = head + brh_ref[0, :]                                # (HW, 128) f32
    lane = jax.lax.broadcasted_iota(jnp.int32, head.shape, 1)
    sig = pl.reciprocal(1.0 + jnp.exp(-head), approx=True)     # EUP path, f32
    rpn_ref[0] = jnp.where(lane < num_sigmoid, sig, head).astype(rpn_ref.dtype)

    # ---- fused ROI box head on the pooled row: fc6 -> fc7 -> cls|box ----
    # TODO(synk): real ROIAlign (bilinear sampling at dynamic proposal boxes)
    # has no clean static Pallas equivalent here; the GAP-pooled feature is
    # used as the per-proposal ROI feature (replicated in the wrapper).
    h = jnp.dot(pooled.astype(jnp.bfloat16), w6_ref[...],
                preferred_element_type=jnp.float32) + b6_ref[0, :]
    h = jnp.maximum(h, 0.0).astype(jnp.bfloat16)
    h = jnp.dot(h, w7_ref[...], preferred_element_type=jnp.float32) + b7_ref[0, :]
    h = jnp.maximum(h, 0.0).astype(jnp.bfloat16)
    logits = jnp.dot(h, wroi_ref[...], preferred_element_type=jnp.float32)
    logits = logits + broi_ref[0, :]                           # (1, 128) f32
    lane2 = jax.lax.broadcasted_iota(jnp.int32, logits.shape, 1)
    cls = jnp.where(lane2 < num_classes, logits, jnp.float32(-1e30))
    m = jnp.max(cls, axis=-1, keepdims=True)
    e = jnp.exp(cls - m)
    probs = e * pl.reciprocal(jnp.sum(e, axis=-1, keepdims=True), approx=True)
    # lanes [0, nc): class probabilities; lanes [nc, 5*nc): raw bbox deltas
    roi_ref[0] = jnp.where(lane2 < num_classes, probs, logits).astype(roi_ref.dtype)


def fused_rcnn(images_nhwc, wbb, bbb, wrpn, brpn, wrh, brh,
               w6, b6, w7, b7, wroi, broi, *, num_sigmoid, num_classes):
    N, H, W, Cin = images_nhwc.shape
    C = wbb.shape[1]
    HW = H * W

    def full(shape):
        return pl.BlockSpec(shape, lambda n, _s=len(shape): (0,) * _s)

    kernel = functools.partial(_fused_rcnn_kernel,
                               num_sigmoid=num_sigmoid, num_classes=num_classes)
    return pl.pallas_call(
        kernel,
        out_shape=(
            jax.ShapeDtypeStruct((N, HW, C), jnp.bfloat16),             # features
            jax.ShapeDtypeStruct((N, HW, RPN_HEAD_PAD), jnp.bfloat16),  # rpn head
            jax.ShapeDtypeStruct((N, 1, ROI_HEAD_PAD), jnp.float32),    # roi head
        ),
        grid=(N,),
        in_specs=[
            pl.BlockSpec((1, H, W, Cin), lambda n: (n, 0, 0, 0)),
            full(wbb.shape), full(bbb.shape),
            full(wrpn.shape), full(brpn.shape),
            full(wrh.shape), full(brh.shape),
            full(w6.shape), full(b6.shape),
            full(w7.shape), full(b7.shape),
            full(wroi.shape), full(broi.shape),
        ],
        out_specs=(
            pl.BlockSpec((1, HW, C), lambda n: (n, 0, 0)),
            pl.BlockSpec((1, HW, RPN_HEAD_PAD), lambda n: (n, 0, 0)),
            pl.BlockSpec((1, 1, ROI_HEAD_PAD), lambda n: (n, 0, 0)),
        ),
        scratch_shapes=[
            pltpu.VMEM((H + 2, W, Cin), jnp.float32),   # padded image
            pltpu.VMEM((H + 2, W, C), jnp.float32),     # padded features
        ],
        compiler_params=pltpu.CompilerParams(dimension_semantics=("parallel",)),
    )(images_nhwc, wbb, bbb, wrpn, brpn, wrh, brh, w6, b6, w7, b7, wroi, broi)


# ----------------------------------------------------------------------------
# GeneralizedRCNN (synthetic, inference forward)
# ----------------------------------------------------------------------------
class GeneralizedRCNNPallas:
    def __init__(self, key, in_channels=3, out_channels=32, num_anchors=3,
                 hidden=64, num_classes=5, rois_per_image=4):
        self.in_channels = in_channels
        self.out_channels = out_channels
        self.num_anchors = num_anchors
        self.num_classes = num_classes
        self.rois_per_image = rois_per_image
        ks = jax.random.split(key, 8)
        s = 0.05
        f32, bf16 = jnp.float32, jnp.bfloat16

        # backbone (single stem conv as a stand-in for ResNet+FPN), im2col form
        w_bb = jax.random.normal(ks[0], (3, 3, in_channels, out_channels)) * s
        self.w_bb = w_bb.reshape(9 * in_channels, out_channels).astype(bf16)
        self.b_bb = jnp.zeros((1, out_channels), f32)

        # rpn conv, im2col form (9*C, C)
        w_rpn = jax.random.normal(ks[1], (3, 3, out_channels, out_channels)) * s
        self.w_rpn = w_rpn.reshape(9 * out_channels, out_channels).astype(bf16)
        self.b_rpn = jnp.zeros((1, out_channels), f32)

        # fused rpn heads: objectness(A) | bbox(4A) packed into 128 lanes
        w_obj = jax.random.normal(ks[2], (out_channels, num_anchors)) * s
        w_rbx = jax.random.normal(ks[3], (out_channels, num_anchors * 4)) * s
        wh = jnp.zeros((out_channels, RPN_HEAD_PAD), f32)
        wh = wh.at[:, :num_anchors].set(w_obj)
        wh = wh.at[:, num_anchors:num_anchors * 5].set(w_rbx)
        self.w_rpn_head = wh.astype(bf16)
        self.b_rpn_head = jnp.zeros((1, RPN_HEAD_PAD), f32)

        # roi box head (fc6/fc7 + fused cls|box predictor packed into 128 lanes)
        self.w_fc6 = (jax.random.normal(ks[4], (out_channels, hidden)) * s).astype(bf16)
        self.b_fc6 = jnp.zeros((1, hidden), f32)
        self.w_fc7 = (jax.random.normal(ks[5], (hidden, hidden)) * s).astype(bf16)
        self.b_fc7 = jnp.zeros((1, hidden), f32)
        w_cls = jax.random.normal(ks[6], (hidden, num_classes)) * s
        w_box = jax.random.normal(ks[7], (hidden, num_classes * 4)) * s
        wr = jnp.zeros((hidden, ROI_HEAD_PAD), f32)
        wr = wr.at[:, :num_classes].set(w_cls)
        wr = wr.at[:, num_classes:num_classes * 5].set(w_box)
        self.w_roi_head = wr.astype(bf16)
        self.b_roi_head = jnp.zeros((1, ROI_HEAD_PAD), f32)

    def forward(self, images_nchw):
        """Eval-mode forward: returns (result, features, results_background).

        `features` is returned in NHWC bf16 (no extra full-tensor transpose)."""
        N, _, H, W = images_nchw.shape
        C, A, nc = self.out_channels, self.num_anchors, self.num_classes

        x = jnp.transpose(images_nchw, (0, 2, 3, 1))           # NCHW -> NHWC

        feat_flat, rpn_out, roi_out = fused_rcnn(
            x, self.w_bb, self.b_bb, self.w_rpn, self.b_rpn,
            self.w_rpn_head, self.b_rpn_head,
            self.w_fc6, self.b_fc6, self.w_fc7, self.b_fc7,
            self.w_roi_head, self.b_roi_head,
            num_sigmoid=A, num_classes=nc)

        features = feat_flat.reshape(N, H, W, C)               # NHWC bf16
        objectness = rpn_out[:, :, :A].reshape(N, H, W, A)
        rpn_bbox_pred = rpn_out[:, :, A:A * 5].reshape(N, H, W, A * 4)

        # ROI head already ran in-kernel on the GAP-pooled row (one per image);
        # replicate the tiny (N, 128) result per proposal and slice cls|box.
        roi_rep = jnp.repeat(roi_out.reshape(N, ROI_HEAD_PAD),
                             self.rois_per_image, axis=0)
        cls_probs = roi_rep[:, :nc]
        bbox_pred = roi_rep[:, nc:nc * 5]

        result = {
            "scores": cls_probs,
            "boxes": bbox_pred.reshape(-1, nc, 4),
            "rpn_objectness": objectness,
            "rpn_bbox_pred": rpn_bbox_pred,
        }
        results_background = cls_probs[:, :1]                  # background col
        return result, features, results_background


if __name__ == "__main__":
    key = jax.random.PRNGKey(0)
    k_param, k_img = jax.random.split(key)
    model = GeneralizedRCNNPallas(k_param)

    # small PyTorch-convention NCHW input: batch=2, channels=3, spatial=16
    images = jax.random.normal(k_img, (2, 3, 16, 16), dtype=jnp.float32)

    result, features, results_background = model.forward(images)
    jax.block_until_ready(result["scores"])
    jax.block_until_ready(result["boxes"])
    jax.block_until_ready(features)
    jax.block_until_ready(results_background)

    assert result["scores"].shape == (2 * 4, 5)
    assert result["boxes"].shape == (2 * 4, 5, 4)
    assert result["rpn_objectness"].shape == (2, 16, 16, 3)
    assert result["rpn_bbox_pred"].shape == (2, 16, 16, 12)
    assert features.shape == (2, 16, 16, 32)                   # NHWC
    assert results_background.shape == (2 * 4, 1)
    print("KERNEL_OK")
</pallas_src>

<mosaic_0001>
module attributes {stable_mosaic.version = 11 : i64} {
  func.func @_fused_rcnn_kernel(%arg0: i32, %arg1: memref<1x16x16x3xf32, #tpu.memory_space<vmem>>, %arg2: memref<27x32xbf16, #tpu.memory_space<vmem>>, %arg3: memref<1x32xf32, #tpu.memory_space<vmem>>, %arg4: memref<288x32xbf16, #tpu.memory_space<vmem>>, %arg5: memref<1x32xf32, #tpu.memory_space<vmem>>, %arg6: memref<32x128xbf16, #tpu.memory_space<vmem>>, %arg7: memref<1x128xf32, #tpu.memory_space<vmem>>, %arg8: memref<32x64xbf16, #tpu.memory_space<vmem>>, %arg9: memref<1x64xf32, #tpu.memory_space<vmem>>, %arg10: memref<64x64xbf16, #tpu.memory_space<vmem>>, %arg11: memref<1x64xf32, #tpu.memory_space<vmem>>, %arg12: memref<64x128xbf16, #tpu.memory_space<vmem>>, %arg13: memref<1x128xf32, #tpu.memory_space<vmem>>, %arg14: memref<1x256x32xbf16, #tpu.memory_space<vmem>>, %arg15: memref<1x256x128xbf16, #tpu.memory_space<vmem>>, %arg16: memref<1x1x128xf32, #tpu.memory_space<vmem>>, %arg17: memref<18x16x3xf32, #tpu.memory_space<vmem>>, %arg18: memref<18x16x32xf32, #tpu.memory_space<vmem>>) attributes {dimension_semantics = [#tpu.dimension_semantics<parallel>], iteration_bounds = array<i64: 2>, scalar_prefetch = 0 : i64, scratch_operands = 2 : i64, tpu.core_type = #tpu.core_type<tc>, window_params = [{transform_indices = @transform_0, window_bounds = array<i64: 1, 16, 16, 3>}, {pipeline_mode = #tpu.pipeline_mode<synchronous>, transform_indices = @transform_1, window_bounds = array<i64: 27, 32>}, {pipeline_mode = #tpu.pipeline_mode<synchronous>, transform_indices = @transform_2, window_bounds = array<i64: 1, 32>}, {pipeline_mode = #tpu.pipeline_mode<synchronous>, transform_indices = @transform_3, window_bounds = array<i64: 288, 32>}, {pipeline_mode = #tpu.pipeline_mode<synchronous>, transform_indices = @transform_4, window_bounds = array<i64: 1, 32>}, {pipeline_mode = #tpu.pipeline_mode<synchronous>, transform_indices = @transform_5, window_bounds = array<i64: 32, 128>}, {pipeline_mode = #tpu.pipeline_mode<synchronous>, transform_indices = @transform_6, window_bounds = array<i64: 1, 128>}, {pipeline_mode = #tpu.pipeline_mode<synchronous>, transform_indices = @transform_7, window_bounds = array<i64: 32, 64>}, {pipeline_mode = #tpu.pipeline_mode<synchronous>, transform_indices = @transform_8, window_bounds = array<i64: 1, 64>}, {pipeline_mode = #tpu.pipeline_mode<synchronous>, transform_indices = @transform_9, window_bounds = array<i64: 64, 64>}, {pipeline_mode = #tpu.pipeline_mode<synchronous>, transform_indices = @transform_10, window_bounds = array<i64: 1, 64>}, {pipeline_mode = #tpu.pipeline_mode<synchronous>, transform_indices = @transform_11, window_bounds = array<i64: 64, 128>}, {pipeline_mode = #tpu.pipeline_mode<synchronous>, transform_indices = @transform_12, window_bounds = array<i64: 1, 128>}, {transform_indices = @transform_13, window_bounds = array<i64: 1, 256, 32>}, {transform_indices = @transform_14, window_bounds = array<i64: 1, 256, 128>}, {transform_indices = @transform_15, window_bounds = array<i64: 1, 1, 128>}]} {
    %cst = arith.constant 0.000000e+00 : f32
    %0 = vector.broadcast %cst : f32 to vector<16x3xf32>
    %c0 = arith.constant 0 : index
    %c0_0 = arith.constant 0 : index
    %c0_1 = arith.constant 0 : index
    %1 = vector.load %arg17[%c0, %c0_0, %c0_1] : memref<18x16x3xf32, #tpu.memory_space<vmem>>, vector<1x16x3xf32>
    %2 = vector.shape_cast %1 : vector<1x16x3xf32> to vector<16x3xf32>
    %3 = vector.shape_cast %0 : vector<16x3xf32> to vector<1x16x3xf32>
    tpu.vector_store %arg17[%c0, %c0_0, %c0_1], %3 {strides = array<i32>} : memref<18x16x3xf32, #tpu.memory_space<vmem>>, vector<1x16x3xf32>,
    %cst_2 = arith.constant 0.000000e+00 : f32
    %4 = vector.broadcast %cst_2 : f32 to vector<16x3xf32>
    %c17 = arith.constant 17 : index
    %c0_3 = arith.constant 0 : index
    %c0_4 = arith.constant 0 : index
    %5 = vector.load %arg17[%c17, %c0_3, %c0_4] : memref<18x16x3xf32, #tpu.memory_space<vmem>>, vector<1x16x3xf32>
    %6 = vector.shape_cast %5 : vector<1x16x3xf32> to vector<16x3xf32>
    %7 = vector.shape_cast %4 : vector<16x3xf32> to vector<1x16x3xf32>
    tpu.vector_store %arg17[%c17, %c0_3, %c0_4], %7 {strides = array<i32>} : memref<18x16x3xf32, #tpu.memory_space<vmem>>, vector<1x16x3xf32>,
    %c0_5 = arith.constant 0 : index
    %c0_6 = arith.constant 0 : index
    %c0_7 = arith.constant 0 : index
    %c0_8 = arith.constant 0 : index
    %8 = vector.load %arg1[%c0_5, %c0_6, %c0_7, %c0_8] : memref<1x16x16x3xf32, #tpu.memory_space<vmem>>, vector<1x16x16x3xf32>
    %9 = vector.shape_cast %8 : vector<1x16x16x3xf32> to vector<16x16x3xf32>
    %c1 = arith.constant 1 : index
    %c0_9 = arith.constant 0 : index
    %c0_10 = arith.constant 0 : index
    %10 = vector.load %arg17[%c1, %c0_9, %c0_10] : memref<18x16x3xf32, #tpu.memory_space<vmem>>, vector<16x16x3xf32>
    tpu.vector_store %arg17[%c1, %c0_9, %c0_10], %9 {strides = array<i32>} : memref<18x16x3xf32, #tpu.memory_space<vmem>>, vector<16x16x3xf32>,
    %11 = tpu.iota {dimensions = array<i32: 1>} : vector<16x16x3xi32>
    %c0_11 = arith.constant 0 : index
    %c0_12 = arith.constant 0 : index
    %c0_13 = arith.constant 0 : index
    %12 = vector.load %arg17[%c0_11, %c0_12, %c0_13] : memref<18x16x3xf32, #tpu.memory_space<vmem>>, vector<16x16x3xf32>
    %c1_i32 = arith.constant 1 : i32
    %13 = tpu.dynamic_rotate %12 by %c1_i32 dim 1 : vector<16x16x3xf32>, i32 -> vector<16x16x3xf32>
    %c0_i32 = arith.constant 0 : i32
    %14 = vector.broadcast %c0_i32 : i32 to vector<16x16x3xi32>
    %15 = arith.cmpi eq, %11, %14 : vector<16x16x3xi32>
    %cst_14 = arith.constant 0.000000e+00 : f32
    %16 = vector.broadcast %cst_14 : f32 to vector<16x16x3xf32>
    %17 = arith.select %15, %16, %13 : vector<16x16x3xi1>, vector<16x16x3xf32>
    %c15_i32 = arith.constant 15 : i32
    %18 = tpu.dynamic_rotate %12 by %c15_i32 dim 1 : vector<16x16x3xf32>, i32 -> vector<16x16x3xf32>
    %c15_i32_15 = arith.constant 15 : i32
    %19 = vector.broadcast %c15_i32_15 : i32 to vector<16x16x3xi32>
    %20 = arith.cmpi eq, %11, %19 : vector<16x16x3xi32>
    %cst_16 = arith.constant 0.000000e+00 : f32
    %21 = vector.broadcast %cst_16 : f32 to vector<16x16x3xf32>
    %22 = arith.select %20, %21, %18 : vector<16x16x3xi1>, vector<16x16x3xf32>
    %c1_17 = arith.constant 1 : index
    %c0_18 = arith.constant 0 : index
    %c0_19 = arith.constant 0 : index
    %23 = vector.load %arg17[%c1_17, %c0_18, %c0_19] : memref<18x16x3xf32, #tpu.memory_space<vmem>>, vector<16x16x3xf32>
    %c1_i32_20 = arith.constant 1 : i32
    %24 = tpu.dynamic_rotate %23 by %c1_i32_20 dim 1 : vector<16x16x3xf32>, i32 -> vector<16x16x3xf32>
    %c0_i32_21 = arith.constant 0 : i32
    %25 = vector.broadcast %c0_i32_21 : i32 to vector<16x16x3xi32>
    %26 = arith.cmpi eq, %11, %25 : vector<16x16x3xi32>
    %cst_22 = arith.constant 0.000000e+00 : f32
    %27 = vector.broadcast %cst_22 : f32 to vector<16x16x3xf32>
    %28 = arith.select %26, %27, %24 : vector<16x16x3xi1>, vector<16x16x3xf32>
    %c15_i32_23 = arith.constant 15 : i32
    %29 = tpu.dynamic_rotate %23 by %c15_i32_23 dim 1 : vector<16x16x3xf32>, i32 -> vector<16x16x3xf32>
    %c15_i32_24 = arith.constant 15 : i32
    %30 = vector.broadcast %c15_i32_24 : i32 to vector<16x16x3xi32>
    %31 = arith.cmpi eq, %11, %30 : vector<16x16x3xi32>
    %cst_25 = arith.constant 0.000000e+00 : f32
    %32 = vector.broadcast %cst_25 : f32 to vector<16x16x3xf32>
    %33 = arith.select %31, %32, %29 : vector<16x16x3xi1>, vector<16x16x3xf32>
    %c2 = arith.constant 2 : index
    %c0_26 = arith.constant 0 : index
    %c0_27 = arith.constant 0 : index
    %34 = vector.load %arg17[%c2, %c0_26, %c0_27] : memref<18x16x3xf32, #tpu.memory_space<vmem>>, vector<16x16x3xf32>
    %c1_i32_28 = arith.constant 1 : i32
    %35 = tpu.dynamic_rotate %34 by %c1_i32_28 dim 1 : vector<16x16x3xf32>, i32 -> vector<16x16x3xf32>
    %c0_i32_29 = arith.constant 0 : i32
    %36 = vector.broadcast %c0_i32_29 : i32 to vector<16x16x3xi32>
    %37 = arith.cmpi eq, %11, %36 : vector<16x16x3xi32>
    %cst_30 = arith.constant 0.000000e+00 : f32
    %38 = vector.broadcast %cst_30 : f32 to vector<16x16x3xf32>
    %39 = arith.select %37, %38, %35 : vector<16x16x3xi1>, vector<16x16x3xf32>
    %c15_i32_31 = arith.constant 15 : i32
    %40 = tpu.dynamic_rotate %34 by %c15_i32_31 dim 1 : vector<16x16x3xf32>, i32 -> vector<16x16x3xf32>
    %c15_i32_32 = arith.constant 15 : i32
    %41 = vector.broadcast %c15_i32_32 : i32 to vector<16x16x3xi32>
    %42 = arith.cmpi eq, %11, %41 : vector<16x16x3xi32>
    %cst_33 = arith.constant 0.000000e+00 : f32
    %43 = vector.broadcast %cst_33 : f32 to vector<16x16x3xf32>
    %44 = arith.select %42, %43, %40 : vector<16x16x3xi1>, vector<16x16x3xf32>
    %45 = tpu.concatenate %17, %12, %22, %28, %23, %33, %39, %34, %44 in 2 : vector<16x16x3xf32>, vector<16x16x3xf32>, vector<16x16x3xf32>, vector<16x16x3xf32>, vector<16x16x3xf32>, vector<16x16x3xf32>, vector<16x16x3xf32>, vector<16x16x3xf32>, vector<16x16x3xf32> -> vector<16x16x27xf32>
    %46 = vector.shape_cast %45 : vector<16x16x27xf32> to vector<256x27xf32>
    %47 = arith.truncf %46 : vector<256x27xf32> to vector<256x27xbf16>
    %c0_34 = arith.constant 0 : index
    %c0_35 = arith.constant 0 : index
    %48 = vector.load %arg2[%c0_34, %c0_35] : memref<27x32xbf16, #tpu.memory_space<vmem>>, vector<27x32xbf16>
    %cst_36 = arith.constant dense<0.000000e+00> : vector<256x32xf32>
    %49 = tpu.matmul %47, %48, %cst_36 {dimension_numbers = #tpu.dot_dimension_numbers<[1], [0], [0], [1], [0, 0, 1, 1], [], []>} : vector<256x27xbf16>, vector<27x32xbf16>, vector<256x32xf32> -> vector<256x32xf32>
    %c0_37 = arith.constant 0 : index
    %c0_38 = arith.constant 0 : index
    %50 = vector.load %arg3[%c0_37, %c0_38] : memref<1x32xf32, #tpu.memory_space<vmem>>, vector<1x32xf32>
    %51 = vector.shape_cast %50 : vector<1x32xf32> to vector<32xf32>
    %52 = vector.shape_cast %51 : vector<32xf32> to vector<1x32xf32>
    %53 = vector.broadcast %52 : vector<1x32xf32> to vector<256x32xf32>
    %54 = arith.addf %49, %53 : vector<256x32xf32>
    %cst_39 = arith.constant 0.000000e+00 : f32
    %55 = vector.broadcast %cst_39 : f32 to vector<256x32xf32>
    %56 = arith.maximumf %54, %55 : vector<256x32xf32>
    %57 = arith.truncf %56 : vector<256x32xf32> to vector<256x32xbf16>
    %c0_40 = arith.constant 0 : index
    %c0_41 = arith.constant 0 : index
    %c0_42 = arith.constant 0 : index
    %58 = vector.load %arg14[%c0_40, %c0_41, %c0_42] : memref<1x256x32xbf16, #tpu.memory_space<vmem>>, vector<1x256x32xbf16>
    %59 = vector.shape_cast %58 : vector<1x256x32xbf16> to vector<256x32xbf16>
    %60 = vector.shape_cast %57 : vector<256x32xbf16> to vector<1x256x32xbf16>
    tpu.vector_store %arg14[%c0_40, %c0_41, %c0_42], %60 {strides = array<i32>} : memref<1x256x32xbf16, #tpu.memory_space<vmem>>, vector<1x256x32xbf16>,
    %cst_43 = arith.constant dense<0.000000e+00> : vector<32xf32>
    %61 = vector.multi_reduction <add>, %56, %cst_43 [0] : vector<256x32xf32> to vector<32xf32>
    %62 = vector.shape_cast %61 : vector<32xf32> to vector<1x32xf32>
    %cst_44 = arith.constant 2.560000e+02 : f32
    %63 = vector.broadcast %cst_44 : f32 to vector<1x32xf32>
    %64 = arith.divf %62, %63 : vector<1x32xf32>
    %cst_45 = arith.constant 0.000000e+00 : f32
    %65 = vector.broadcast %cst_45 : f32 to vector<16x32xf32>
    %c0_46 = arith.constant 0 : index
    %c0_47 = arith.constant 0 : index
    %c0_48 = arith.constant 0 : index
    %66 = vector.load %arg18[%c0_46, %c0_47, %c0_48] : memref<18x16x32xf32, #tpu.memory_space<vmem>>, vector<1x16x32xf32>
    %67 = vector.shape_cast %66 : vector<1x16x32xf32> to vector<16x32xf32>
    %68 = vector.shape_cast %65 : vector<16x32xf32> to vector<1x16x32xf32>
    tpu.vector_store %arg18[%c0_46, %c0_47, %c0_48], %68 {strides = array<i32>} : memref<18x16x32xf32, #tpu.memory_space<vmem>>, vector<1x16x32xf32>,
    %cst_49 = arith.constant 0.000000e+00 : f32
    %69 = vector.broadcast %cst_49 : f32 to vector<16x32xf32>
    %c17_50 = arith.constant 17 : index
    %c0_51 = arith.constant 0 : index
    %c0_52 = arith.constant 0 : index
    %70 = vector.load %arg18[%c17_50, %c0_51, %c0_52] : memref<18x16x32xf32, #tpu.memory_space<vmem>>, vector<1x16x32xf32>
    %71 = vector.shape_cast %70 : vector<1x16x32xf32> to vector<16x32xf32>
    %72 = vector.shape_cast %69 : vector<16x32xf32> to vector<1x16x32xf32>
    tpu.vector_store %arg18[%c17_50, %c0_51, %c0_52], %72 {strides = array<i32>} : memref<18x16x32xf32, #tpu.memory_space<vmem>>, vector<1x16x32xf32>,
    %73 = vector.shape_cast %56 : vector<256x32xf32> to vector<16x16x32xf32>
    %c1_53 = arith.constant 1 : index
    %c0_54 = arith.constant 0 : index
    %c0_55 = arith.constant 0 : index
    %74 = vector.load %arg18[%c1_53, %c0_54, %c0_55] : memref<18x16x32xf32, #tpu.memory_space<vmem>>, vector<16x16x32xf32>
    tpu.vector_store %arg18[%c1_53, %c0_54, %c0_55], %73 {strides = array<i32>} : memref<18x16x32xf32, #tpu.memory_space<vmem>>, vector<16x16x32xf32>,
    %75 = tpu.iota {dimensions = array<i32: 1>} : vector<16x16x32xi32>
    %c0_56 = arith.constant 0 : index
    %c0_57 = arith.constant 0 : index
    %c0_58 = arith.constant 0 : index
    %76 = vector.load %arg18[%c0_56, %c0_57, %c0_58] : memref<18x16x32xf32, #tpu.memory_space<vmem>>, vector<16x16x32xf32>
    %c1_i32_59 = arith.constant 1 : i32
    %77 = tpu.dynamic_rotate %76 by %c1_i32_59 dim 1 : vector<16x16x32xf32>, i32 -> vector<16x16x32xf32>
    %c0_i32_60 = arith.constant 0 : i32
    %78 = vector.broadcast %c0_i32_60 : i32 to vector<16x16x32xi32>
    %79 = arith.cmpi eq, %75, %78 : vector<16x16x32xi32>
    %cst_61 = arith.constant 0.000000e+00 : f32
    %80 = vector.broadcast %cst_61 : f32 to vector<16x16x32xf32>
    %81 = arith.select %79, %80, %77 : vector<16x16x32xi1>, vector<16x16x32xf32>
    %c15_i32_62 = arith.constant 15 : i32
    %82 = tpu.dynamic_rotate %76 by %c15_i32_62 dim 1 : vector<16x16x32xf32>, i32 -> vector<16x16x32xf32>
    %c15_i32_63 = arith.constant 15 : i32
    %83 = vector.broadcast %c15_i32_63 : i32 to vector<16x16x32xi32>
    %84 = arith.cmpi eq, %75, %83 : vector<16x16x32xi32>
    %cst_64 = arith.constant 0.000000e+00 : f32
    %85 = vector.broadcast %cst_64 : f32 to vector<16x16x32xf32>
    %86 = arith.select %84, %85, %82 : vector<16x16x32xi1>, vector<16x16x32xf32>
    %c1_65 = arith.constant 1 : index
    %c0_66 = arith.constant 0 : index
    %c0_67 = arith.constant 0 : index
    %87 = vector.load %arg18[%c1_65, %c0_66, %c0_67] : memref<18x16x32xf32, #tpu.memory_space<vmem>>, vector<16x16x32xf32>
    %c1_i32_68 = arith.constant 1 : i32
    %88 = tpu.dynamic_rotate %87 by %c1_i32_68 dim 1 : vector<16x16x32xf32>, i32 -> vector<16x16x32xf32>
    %c0_i32_69 = arith.constant 0 : i32
    %89 = vector.broadcast %c0_i32_69 : i32 to vector<16x16x32xi32>
    %90 = arith.cmpi eq, %75, %89 : vector<16x16x32xi32>
    %cst_70 = arith.constant 0.000000e+00 : f32
    %91 = vector.broadcast %cst_70 : f32 to vector<16x16x32xf32>
    %92 = arith.select %90, %91, %88 : vector<16x16x32xi1>, vector<16x16x32xf32>
    %c15_i32_71 = arith.constant 15 : i32
    %93 = tpu.dynamic_rotate %87 by %c15_i32_71 dim 1 : vector<16x16x32xf32>, i32 -> vector<16x16x32xf32>
    %c15_i32_72 = arith.constant 15 : i32
    %94 = vector.broadcast %c15_i32_72 : i32 to vector<16x16x32xi32>
    %95 = arith.cmpi eq, %75, %94 : vector<16x16x32xi32>
    %cst_73 = arith.constant 0.000000e+00 : f32
    %96 = vector.broadcast %cst_73 : f32 to vector<16x16x32xf32>
    %97 = arith.select %95, %96, %93 : vector<16x16x32xi1>, vector<16x16x32xf32>
    %c2_74 = arith.constant 2 : index
    %c0_75 = arith.constant 0 : index
    %c0_76 = arith.constant 0 : index
    %98 = vector.load %arg18[%c2_74, %c0_75, %c0_76] : memref<18x16x32xf32, #tpu.memory_space<vmem>>, vector<16x16x32xf32>
    %c1_i32_77 = arith.constant 1 : i32
    %99 = tpu.dynamic_rotate %98 by %c1_i32_77 dim 1 : vector<16x16x32xf32>, i32 -> vector<16x16x32xf32>
    %c0_i32_78 = arith.constant 0 : i32
    %100 = vector.broadcast %c0_i32_78 : i32 to vector<16x16x32xi32>
    %101 = arith.cmpi eq, %75, %100 : vector<16x16x32xi32>
    %cst_79 = arith.constant 0.000000e+00 : f32
    %102 = vector.broadcast %cst_79 : f32 to vector<16x16x32xf32>
    %103 = arith.select %101, %102, %99 : vector<16x16x32xi1>, vector<16x16x32xf32>
    %c15_i32_80 = arith.constant 15 : i32
    %104 = tpu.dynamic_rotate %98 by %c15_i32_80 dim 1 : vector<16x16x32xf32>, i32 -> vector<16x16x32xf32>
    %c15_i32_81 = arith.constant 15 : i32
    %105 = vector.broadcast %c15_i32_81 : i32 to vector<16x16x32xi32>
    %106 = arith.cmpi eq, %75, %105 : vector<16x16x32xi32>
    %cst_82 = arith.constant 0.000000e+00 : f32
    %107 = vector.broadcast %cst_82 : f32 to vector<16x16x32xf32>
    %108 = arith.select %106, %107, %104 : vector<16x16x32xi1>, vector<16x16x32xf32>
    %109 = tpu.concatenate %81, %76, %86, %92, %87, %97, %103, %98, %108 in 2 : vector<16x16x32xf32>, vector<16x16x32xf32>, vector<16x16x32xf32>, vector<16x16x32xf32>, vector<16x16x32xf32>, vector<16x16x32xf32>, vector<16x16x32xf32>, vector<16x16x32xf32>, vector<16x16x32xf32> -> vector<16x16x288xf32>
    %110 = vector.shape_cast %109 : vector<16x16x288xf32> to vector<256x288xf32>
    %111 = arith.truncf %110 : vector<256x288xf32> to vector<256x288xbf16>
    %c0_83 = arith.constant 0 : index
    %c0_84 = arith.constant 0 : index
    %112 = vector.load %arg4[%c0_83, %c0_84] : memref<288x32xbf16, #tpu.memory_space<vmem>>, vector<288x32xbf16>
    %cst_85 = arith.constant dense<0.000000e+00> : vector<256x32xf32>
    %113 = tpu.matmul %111, %112, %cst_85 {dimension_numbers = #tpu.dot_dimension_numbers<[1], [0], [0], [1], [0, 0, 1, 1], [], []>} : vector<256x288xbf16>, vector<288x32xbf16>, vector<256x32xf32> -> vector<256x32xf32>
    %c0_86 = arith.constant 0 : index
    %c0_87 = arith.constant 0 : index
    %114 = vector.load %arg5[%c0_86, %c0_87] : memref<1x32xf32, #tpu.memory_space<vmem>>, vector<1x32xf32>
    %115 = vector.shape_cast %114 : vector<1x32xf32> to vector<32xf32>
    %116 = vector.shape_cast %115 : vector<32xf32> to vector<1x32xf32>
    %117 = vector.broadcast %116 : vector<1x32xf32> to vector<256x32xf32>
    %118 = arith.addf %113, %117 : vector<256x32xf32>
    %cst_88 = arith.constant 0.000000e+00 : f32
    %119 = vector.broadcast %cst_88 : f32 to vector<256x32xf32>
    %120 = arith.maximumf %118, %119 : vector<256x32xf32>
    %121 = arith.truncf %120 : vector<256x32xf32> to vector<256x32xbf16>
    %c0_89 = arith.constant 0 : index
    %c0_90 = arith.constant 0 : index
    %122 = vector.load %arg6[%c0_89, %c0_90] : memref<32x128xbf16, #tpu.memory_space<vmem>>, vector<32x128xbf16>
    %cst_91 = arith.constant dense<0.000000e+00> : vector<256x128xf32>
    %123 = tpu.matmul %121, %122, %cst_91 {dimension_numbers = #tpu.dot_dimension_numbers<[1], [0], [0], [1], [0, 0, 1, 1], [], []>} : vector<256x32xbf16>, vector<32x128xbf16>, vector<256x128xf32> -> vector<256x128xf32>
    %c0_92 = arith.constant 0 : index
    %c0_93 = arith.constant 0 : index
    %124 = vector.load %arg7[%c0_92, %c0_93] : memref<1x128xf32, #tpu.memory_space<vmem>>, vector<1x128xf32>
    %125 = vector.shape_cast %124 : vector<1x128xf32> to vector<128xf32>
    %126 = vector.shape_cast %125 : vector<128xf32> to vector<1x128xf32>
    %127 = vector.broadcast %126 : vector<1x128xf32> to vector<256x128xf32>
    %128 = arith.addf %123, %127 : vector<256x128xf32>
    %129 = tpu.iota {dimensions = array<i32: 1>} : vector<256x128xi32>
    %cst_94 = arith.constant 0.000000e+00 : f32
    %130 = vector.broadcast %cst_94 : f32 to vector<256x128xf32>
    %131 = arith.subf %130, %128 : vector<256x128xf32>
    %132 = math.exp %131 : vector<256x128xf32>
    %cst_95 = arith.constant 1.000000e+00 : f32
    %133 = vector.broadcast %cst_95 : f32 to vector<256x128xf32>
    %134 = arith.addf %133, %132 : vector<256x128xf32>
    %135 = tpu.reciprocal %134 {approx = true} : vector<256x128xf32> -> vector<256x128xf32>
    %c3_i32 = arith.constant 3 : i32
    %136 = vector.broadcast %c3_i32 : i32 to vector<256x128xi32>
    %137 = arith.cmpi slt, %129, %136 : vector<256x128xi32>
    %138 = arith.select %137, %135, %128 : vector<256x128xi1>, vector<256x128xf32>
    %139 = arith.truncf %138 : vector<256x128xf32> to vector<256x128xbf16>
    %c0_96 = arith.constant 0 : index
    %c0_97 = arith.constant 0 : index
    %c0_98 = arith.constant 0 : index
    %140 = vector.load %arg15[%c0_96, %c0_97, %c0_98] : memref<1x256x128xbf16, #tpu.memory_space<vmem>>, vector<1x256x128xbf16>
    %141 = vector.shape_cast %140 : vector<1x256x128xbf16> to vector<256x128xbf16>
    %142 = vector.shape_cast %139 : vector<256x128xbf16> to vector<1x256x128xbf16>
    tpu.vector_store %arg15[%c0_96, %c0_97, %c0_98], %142 {strides = array<i32>} : memref<1x256x128xbf16, #tpu.memory_space<vmem>>, vector<1x256x128xbf16>,
    %143 = arith.truncf %64 : vector<1x32xf32> to vector<1x32xbf16>
    %c0_99 = arith.constant 0 : index
    %c0_100 = arith.constant 0 : index
    %144 = vector.load %arg8[%c0_99, %c0_100] : memref<32x64xbf16, #tpu.memory_space<vmem>>, vector<32x64xbf16>
    %cst_101 = arith.constant dense<0.000000e+00> : vector<1x64xf32>
    %145 = tpu.matmul %143, %144, %cst_101 {dimension_numbers = #tpu.dot_dimension_numbers<[1], [0], [0], [1], [0, 0, 1, 1], [], []>} : vector<1x32xbf16>, vector<32x64xbf16>, vector<1x64xf32> -> vector<1x64xf32>
    %c0_102 = arith.constant 0 : index
    %c0_103 = arith.constant 0 : index
    %146 = vector.load %arg9[%c0_102, %c0_103] : memref<1x64xf32, #tpu.memory_space<vmem>>, vector<1x64xf32>
    %147 = vector.shape_cast %146 : vector<1x64xf32> to vector<64xf32>
    %148 = vector.shape_cast %147 : vector<64xf32> to vector<1x64xf32>
    %149 = arith.addf %145, %148 : vector<1x64xf32>
    %cst_104 = arith.constant 0.000000e+00 : f32
    %150 = vector.broadcast %cst_104 : f32 to vector<1x64xf32>
    %151 = arith.maximumf %149, %150 : vector<1x64xf32>
    %152 = arith.truncf %151 : vector<1x64xf32> to vector<1x64xbf16>
    %c0_105 = arith.constant 0 : index
    %c0_106 = arith.constant 0 : index
    %153 = vector.load %arg10[%c0_105, %c0_106] : memref<64x64xbf16, #tpu.memory_space<vmem>>, vector<64x64xbf16>
    %cst_107 = arith.constant dense<0.000000e+00> : vector<1x64xf32>
    %154 = tpu.matmul %152, %153, %cst_107 {dimension_numbers = #tpu.dot_dimension_numbers<[1], [0], [0], [1], [0, 0, 1, 1], [], []>} : vector<1x64xbf16>, vector<64x64xbf16>, vector<1x64xf32> -> vector<1x64xf32>
    %c0_108 = arith.constant 0 : index
    %c0_109 = arith.constant 0 : index
    %155 = vector.load %arg11[%c0_108, %c0_109] : memref<1x64xf32, #tpu.memory_space<vmem>>, vector<1x64xf32>
    %156 = vector.shape_cast %155 : vector<1x64xf32> to vector<64xf32>
    %157 = vector.shape_cast %156 : vector<64xf32> to vector<1x64xf32>
    %158 = arith.addf %154, %157 : vector<1x64xf32>
    %cst_110 = arith.constant 0.000000e+00 : f32
    %159 = vector.broadcast %cst_110 : f32 to vector<1x64xf32>
    %160 = arith.maximumf %158, %159 : vector<1x64xf32>
    %161 = arith.truncf %160 : vector<1x64xf32> to vector<1x64xbf16>
    %c0_111 = arith.constant 0 : index
    %c0_112 = arith.constant 0 : index
    %162 = vector.load %arg12[%c0_111, %c0_112] : memref<64x128xbf16, #tpu.memory_space<vmem>>, vector<64x128xbf16>
    %cst_113 = arith.constant dense<0.000000e+00> : vector<1x128xf32>
    %163 = tpu.matmul %161, %162, %cst_113 {dimension_numbers = #tpu.dot_dimension_numbers<[1], [0], [0], [1], [0, 0, 1, 1], [], []>} : vector<1x64xbf16>, vector<64x128xbf16>, vector<1x128xf32> -> vector<1x128xf32>
    %c0_114 = arith.constant 0 : index
    %c0_115 = arith.constant 0 : index
    %164 = vector.load %arg13[%c0_114, %c0_115] : memref<1x128xf32, #tpu.memory_space<vmem>>, vector<1x128xf32>
    %165 = vector.shape_cast %164 : vector<1x128xf32> to vector<128xf32>
    %166 = vector.shape_cast %165 : vector<128xf32> to vector<1x128xf32>
    %167 = arith.addf %163, %166 : vector<1x128xf32>
    %168 = tpu.iota {dimensions = array<i32: 1>} : vector<1x128xi32>
    %c5_i32 = arith.constant 5 : i32
    %169 = vector.broadcast %c5_i32 : i32 to vector<1x128xi32>
    %170 = arith.cmpi slt, %168, %169 : vector<1x128xi32>
    %cst_116 = arith.constant -1.000000e+30 : f32
    %171 = vector.broadcast %cst_116 : f32 to vector<1x128xf32>
    %172 = arith.select %170, %167, %171 : vector<1x128xi1>, vector<1x128xf32>
    %cst_117 = arith.constant dense<0xFF800000> : vector<1xf32>
    %173 = vector.multi_reduction <maximumf>, %172, %cst_117 [1] : vector<1x128xf32> to vector<1xf32>
    %174 = vector.shape_cast %173 : vector<1xf32> to vector<1x1xf32>
    %175 = vector.broadcast %174 : vector<1x1xf32> to vector<1x128xf32>
    %176 = arith.subf %172, %175 : vector<1x128xf32>
    %177 = math.exp %176 : vector<1x128xf32>
    %cst_118 = arith.constant dense<0.000000e+00> : vector<1xf32>
    %178 = vector.multi_reduction <add>, %177, %cst_118 [1] : vector<1x128xf32> to vector<1xf32>
    %179 = vector.shape_cast %178 : vector<1xf32> to vector<1x1xf32>
    %180 = tpu.reciprocal %179 {approx = true} : vector<1x1xf32> -> vector<1x1xf32>
    %181 = vector.broadcast %180 : vector<1x1xf32> to vector<1x128xf32>
    %182 = arith.mulf %177, %181 : vector<1x128xf32>
    %c5_i32_119 = arith.constant 5 : i32
    %183 = vector.broadcast %c5_i32_119 : i32 to vector<1x128xi32>
    %184 = arith.cmpi slt, %168, %183 : vector<1x128xi32>
    %185 = arith.select %184, %182, %167 : vector<1x128xi1>, vector<1x128xf32>
    %c0_120 = arith.constant 0 : index
    %c0_121 = arith.constant 0 : index
    %c0_122 = arith.constant 0 : index
    %186 = vector.load %arg16[%c0_120, %c0_121, %c0_122] : memref<1x1x128xf32, #tpu.memory_space<vmem>>, vector<1x1x128xf32>
    %187 = vector.shape_cast %186 : vector<1x1x128xf32> to vector<1x128xf32>
    %188 = vector.shape_cast %185 : vector<1x128xf32> to vector<1x1x128xf32>
    tpu.vector_store %arg16[%c0_120, %c0_121, %c0_122], %188 {strides = array<i32>} : memref<1x1x128xf32, #tpu.memory_space<vmem>>, vector<1x1x128xf32>,
    return
  }
  func.func @transform_0(%arg0: i32) -> (i32, i32, i32, i32) {
    %c0_i32 = arith.constant 0 : i32
    %c0_i32_0 = arith.constant 0 : i32
    %c0_i32_1 = arith.constant 0 : i32
    %c0_i32_2 = arith.constant 0 : i32
    return %arg0, %c0_i32, %c0_i32_0, %c0_i32_1 : i32, i32, i32, i32
  }
  func.func @transform_1(%arg0: i32) -> (i32, i32) {
    %c0_i32 = arith.constant 0 : i32
    %c0_i32_0 = arith.constant 0 : i32
    %c0_i32_1 = arith.constant 0 : i32
    return %c0_i32, %c0_i32_0 : i32, i32
  }
  func.func @transform_2(%arg0: i32) -> (i32, i32) {
    %c0_i32 = arith.constant 0 : i32
    %c0_i32_0 = arith.constant 0 : i32
    %c0_i32_1 = arith.constant 0 : i32
    return %c0_i32, %c0_i32_0 : i32, i32
  }
  func.func @transform_3(%arg0: i32) -> (i32, i32) {
    %c0_i32 = arith.constant 0 : i32
    %c0_i32_0 = arith.constant 0 : i32
    %c0_i32_1 = arith.constant 0 : i32
    return %c0_i32, %c0_i32_0 : i32, i32
  }
  func.func @transform_4(%arg0: i32) -> (i32, i32) {
    %c0_i32 = arith.constant 0 : i32
    %c0_i32_0 = arith.constant 0 : i32
    %c0_i32_1 = arith.constant 0 : i32
    return %c0_i32, %c0_i32_0 : i32, i32
  }
  func.func @transform_5(%arg0: i32) -> (i32, i32) {
    %c0_i32 = arith.constant 0 : i32
    %c0_i32_0 = arith.constant 0 : i32
    %c0_i32_1 = arith.constant 0 : i32
    return %c0_i32, %c0_i32_0 : i32, i32
  }
  func.func @transform_6(%arg0: i32) -> (i32, i32) {
    %c0_i32 = arith.constant 0 : i32
    %c0_i32_0 = arith.constant 0 : i32
    %c0_i32_1 = arith.constant 0 : i32
    return %c0_i32, %c0_i32_0 : i32, i32
  }
  func.func @transform_7(%arg0: i32) -> (i32, i32) {
    %c0_i32 = arith.constant 0 : i32
    %c0_i32_0 = arith.constant 0 : i32
    %c0_i32_1 = arith.constant 0 : i32
    return %c0_i32, %c0_i32_0 : i32, i32
  }
  func.func @transform_8(%arg0: i32) -> (i32, i32) {
    %c0_i32 = arith.constant 0 : i32
    %c0_i32_0 = arith.constant 0 : i32
    %c0_i32_1 = arith.constant 0 : i32
    return %c0_i32, %c0_i32_0 : i32, i32
  }
  func.func @transform_9(%arg0: i32) -> (i32, i32) {
    %c0_i32 = arith.constant 0 : i32
    %c0_i32_0 = arith.constant 0 : i32
    %c0_i32_1 = arith.constant 0 : i32
    return %c0_i32, %c0_i32_0 : i32, i32
  }
  func.func @transform_10(%arg0: i32) -> (i32, i32) {
    %c0_i32 = arith.constant 0 : i32
    %c0_i32_0 = arith.constant 0 : i32
    %c0_i32_1 = arith.constant 0 : i32
    return %c0_i32, %c0_i32_0 : i32, i32
  }
  func.func @transform_11(%arg0: i32) -> (i32, i32) {
    %c0_i32 = arith.constant 0 : i32
    %c0_i32_0 = arith.constant 0 : i32
    %c0_i32_1 = arith.constant 0 : i32
    return %c0_i32, %c0_i32_0 : i32, i32
  }
  func.func @transform_12(%arg0: i32) -> (i32, i32) {
    %c0_i32 = arith.constant 0 : i32
    %c0_i32_0 = arith.constant 0 : i32
    %c0_i32_1 = arith.constant 0 : i32
    return %c0_i32, %c0_i32_0 : i32, i32
  }
  func.func @transform_13(%arg0: i32) -> (i32, i32, i32) {
    %c0_i32 = arith.constant 0 : i32
    %c0_i32_0 = arith.constant 0 : i32
    %c0_i32_1 = arith.constant 0 : i32
    return %arg0, %c0_i32, %c0_i32_0 : i32, i32, i32
  }
  func.func @transform_14(%arg0: i32) -> (i32, i32, i32) {
    %c0_i32 = arith.constant 0 : i32
    %c0_i32_0 = arith.constant 0 : i32
    %c0_i32_1 = arith.constant 0 : i32
    return %arg0, %c0_i32, %c0_i32_0 : i32, i32, i32
  }
  func.func @transform_15(%arg0: i32) -> (i32, i32, i32) {
    %c0_i32 = arith.constant 0 : i32
    %c0_i32_0 = arith.constant 0 : i32
    %c0_i32_1 = arith.constant 0 : i32
    return %arg0, %c0_i32, %c0_i32_0 : i32, i32, i32
  }
}

</mosaic_0001>

<llo_original>
// kernel: tpu_custom_call.1
$region0: #{tpu_custom_call.1}
  #allocation0 [shape = 'u32[]', space=smem, size = 0x4, offset = 0x4, fixed_abs, tag = 'smem constant byte address 0x4 - core index']
  #allocation1 [shape = 'u32[144,128]{1,0:T(1,128)}', space=vmem, size = 0x12000, scoped, tag = 'internal scratch']
  #allocation2 [shape = 'f32[18,16,3]{2,1,0:T(8,128)}', space=vmem, size = 0x24000, scoped, tag = 'scratch operand']
  #allocation3 [shape = 'f32[18,16,32]{2,1,0:T(8,128)}', space=vmem, size = 0x24000, scoped, tag = 'scratch operand']
  %s0 = inlined_call_operand.vmem [shape: f32[2,16,16,3], index: 0, kind: input, shape index: {}]
  %s1 = inlined_call_operand.vmem [shape: bf16[27,32], index: 1, kind: input, shape index: {}]
  %s2 = inlined_call_operand.vmem [shape: f32[1,32], index: 2, kind: input, shape index: {}]
  %s3 = inlined_call_operand.vmem [shape: bf16[288,32], index: 3, kind: input, shape index: {}]
  %s4 = inlined_call_operand.vmem [shape: f32[1,32], index: 4, kind: input, shape index: {}]
  %s5 = inlined_call_operand.vmem [shape: bf16[32,128], index: 5, kind: input, shape index: {}]
  %s6 = inlined_call_operand.vmem [shape: f32[1,128], index: 6, kind: input, shape index: {}]
  %s7 = inlined_call_operand.vmem [shape: bf16[32,64], index: 7, kind: input, shape index: {}]
  %s8 = inlined_call_operand.vmem [shape: f32[1,64], index: 8, kind: input, shape index: {}]
  %s9 = inlined_call_operand.vmem [shape: bf16[64,64], index: 9, kind: input, shape index: {}]
  %s10 = inlined_call_operand.vmem [shape: f32[1,64], index: 10, kind: input, shape index: {}]
  %s11 = inlined_call_operand.vmem [shape: bf16[64,128], index: 11, kind: input, shape index: {}]
  %s12 = inlined_call_operand.vmem [shape: f32[1,128], index: 12, kind: input, shape index: {}]
  %s13 = inlined_call_operand.vmem [shape: bf16[2,256,32], index: 13, kind: output, shape index: {0}]
  %s14 = inlined_call_operand.hbm [shape: bf16[2,256,128], index: 14, kind: output, shape index: {1}]
  %s15 = inlined_call_operand.hbm [shape: f32[2,1,128], index: 15, kind: output, shape index: {2}]
  %16 = xla_tuple %s13, %s14, %s15
  %s17 = sld [smem:[#allocation0]]
  $region101: #{tpu_custom_call.1} parent=0
    _
  %s19 = ssub.s32 1, %s17
  %s20 = scalar_select 0, %s19, %s17
  $region1: #{tpu_custom_call.1} parent=0
    #allocation4 [shape = 'u8[131072]{0}', space=vmem, size = 0x20000, scoped, tag = 'output window, operand 1']
    #allocation5 [shape = 's32[2]{0}', space=sflag, size = 0x8, scoped, tag = 'scoped memory for tpu_custom_call.1']
    #allocation6 [shape = 'u8[1024]{0}', space=vmem, size = 0x400, scoped, tag = 'output window, operand 2']
    #allocation7 [shape = 's32[2]{0}', space=sflag, size = 0x8, scoped, tag = 'scoped memory for tpu_custom_call.1']
    %21 = vsyncpa [#allocation5], 0
    %s22 = scalar_lea.sflag [#allocation5], 1
    %23 = vsyncpa %s22, 0
    %24 = vsyncpa [#allocation7], 0
    %s25 = scalar_lea.sflag [#allocation7], 1
    %26 = vsyncpa %s25, 0
    loop: start=0, step=1, limit=4
    $region2: #{tpu_custom_call.1} parent=1 // loop_pre_header
      _
    $region3: #{tpu_custom_call.1} parent=1 // loop_header
      %s28 = sphi 0, %s32
      %p29 = scmp.ge.s32.totalorder %s28, 4
      %s38 = sphi 0, %s40
      %s41 = sphi 0, %s38
      %s42 = sphi 0, %s41
      %s58 = sphi 0, %s42
      %s62 = sphi 0, %s62
      %s64 = sphi 0, %s62
      %s65 = sphi 0, %s64
      %s79 = sphi 0, %s65
      %s83 = sphi 0, %s83
      %s85 = sphi 0, %s83
      %s86 = sphi 0, %s85
      %s100 = sphi 0, %s86
      %s104 = sphi 0, %s104
      %s106 = sphi 0, %s104
      %s107 = sphi 0, %s106
      %s121 = sphi 0, %s107
      %s125 = sphi 0, %s125
      %s127 = sphi 0, %s125
      %s128 = sphi 0, %s127
      %s142 = sphi 0, %s128
      %s146 = sphi 0, %s146
      %s148 = sphi 0, %s146
      %s149 = sphi 0, %s148
      %s163 = sphi 0, %s149
      %s167 = sphi 0, %s167
      %s169 = sphi 0, %s167
      %s170 = sphi 0, %s169
      %s184 = sphi 0, %s170
      %s188 = sphi 0, %s188
      %s190 = sphi 0, %s188
      %s191 = sphi 0, %s190
      %s205 = sphi 0, %s191
      %s209 = sphi 0, %s209
      %s211 = sphi 0, %s209
      %s212 = sphi 0, %s211
      %s226 = sphi 0, %s212
      %s230 = sphi 0, %s230
      %s232 = sphi 0, %s230
      %s233 = sphi 0, %s232
      %s247 = sphi 0, %s233
      %s251 = sphi 0, %s251
      %s253 = sphi 0, %s251
      %s254 = sphi 0, %s253
      %s268 = sphi 0, %s254
      %s272 = sphi 0, %s272
      %s274 = sphi 0, %s272
      %s275 = sphi 0, %s274
      %s289 = sphi 0, %s275
      %s293 = sphi 0, %s293
      %s295 = sphi 0, %s293
      %s296 = sphi 0, %s295
      %s310 = sphi 0, %s296
      %s316 = sphi 0, %s318
      %s319 = sphi 0, %s316
      %s320 = sphi 0, %s319
      %s336 = sphi 0, %s320
      %s342 = sphi 0, %s344
      %s345 = sphi 0, %s342
      %s346 = sphi 0, %s345
      %s362 = sphi 0, %s346
      %s368 = sphi 0, %s370
      %s371 = sphi 0, %s368
      %s372 = sphi 0, %s371
      %s388 = sphi 0, %s372
    $region4: #{tpu_custom_call.1} parent=1 // loop_header_branch
      %31 = sbr.rel (%p29) target = $region8
    $region5: #{tpu_custom_call.1} parent=1 // loop_body
      %s33 = ssub.s32 %s28, 1
      %s34 = ssub.s32 %s28, 2
      %s35 = sadd.s32 %s28, 1
      %s36 = ssub.s32 %s28, %s35
      %p37 = scmp.eq.s32.totalorder %s36, 0
      %s39 = sadd.s32 %s38, 1
      %s40 = scalar_select %p37, %s38, %s39
      %p43 = pneg %p37
      %p44 = scmp.eq.s32.totalorder %s28, 1
      %p45 = por %p43, %p44
      %p46 = scmp.ne.s32.totalorder %s38, %s41
      %p47 = scmp.eq.s32.totalorder %s28, 0
      %p48 = por %p46, %p47
      %p49 = scmp.ne.s32.totalorder %s38, %s41
      %p50 = scmp.eq.s32.totalorder %s33, 1
      %p51 = por %p49, %p50
      %p52 = scmp.ne.s32.totalorder %s41, %s42
      %p53 = scmp.eq.s32.totalorder %s33, 0
      %p54 = por %p52, %p53
      %p55 = scmp.ne.s32.totalorder %s41, %s42
      %p56 = scmp.eq.s32.totalorder %s34, 1
      %p57 = por %p55, %p56
      %p59 = scmp.ne.s32.totalorder %s42, %s58
      %p60 = scmp.eq.s32.totalorder %s34, 0
      %p61 = por %p59, %p60
      %s63 = sadd.s32 %s62, 1
      %p66 = scmp.eq.s32.totalorder %s28, 1
      %p67 = scmp.ne.s32.totalorder %s62, %s64
      %p68 = scmp.eq.s32.totalorder %s28, 0
      %p69 = por %p67, %p68
      %p70 = scmp.ne.s32.totalorder %s62, %s64
      %p71 = scmp.eq.s32.totalorder %s33, 1
      %p72 = por %p70, %p71
      %p73 = scmp.ne.s32.totalorder %s64, %s65
      %p74 = scmp.eq.s32.totalorder %s33, 0
      %p75 = por %p73, %p74
      %p76 = scmp.ne.s32.totalorder %s64, %s65
      %p77 = scmp.eq.s32.totalorder %s34, 1
      %p78 = por %p76, %p77
      %p80 = scmp.ne.s32.totalorder %s65, %s79
      %p81 = scmp.eq.s32.totalorder %s34, 0
      %p82 = por %p80, %p81
      %s84 = sadd.s32 %s83, 1
      %p87 = scmp.eq.s32.totalorder %s28, 1
      %p88 = scmp.ne.s32.totalorder %s83, %s85
      %p89 = scmp.eq.s32.totalorder %s28, 0
      %p90 = por %p88, %p89
      %p91 = scmp.ne.s32.totalorder %s83, %s85
      %p92 = scmp.eq.s32.totalorder %s33, 1
      %p93 = por %p91, %p92
      %p94 = scmp.ne.s32.totalorder %s85, %s86
      %p95 = scmp.eq.s32.totalorder %s33, 0
      %p96 = por %p94, %p95
      %p97 = scmp.ne.s32.totalorder %s85, %s86
      %p98 = scmp.eq.s32.totalorder %s34, 1
      %p99 = por %p97, %p98
      %p101 = scmp.ne.s32.totalorder %s86, %s100
      %p102 = scmp.eq.s32.totalorder %s34, 0
      %p103 = por %p101, %p102
      %s105 = sadd.s32 %s104, 1
      %p108 = scmp.eq.s32.totalorder %s28, 1
      %p109 = scmp.ne.s32.totalorder %s104, %s106
      %p110 = scmp.eq.s32.totalorder %s28, 0
      %p111 = por %p109, %p110
      %p112 = scmp.ne.s32.totalorder %s104, %s106
      %p113 = scmp.eq.s32.totalorder %s33, 1
      %p114 = por %p112, %p113
      %p115 = scmp.ne.s32.totalorder %s106, %s107
      %p116 = scmp.eq.s32.totalorder %s33, 0
      %p117 = por %p115, %p116
      %p118 = scmp.ne.s32.totalorder %s106, %s107
      %p119 = scmp.eq.s32.totalorder %s34, 1
      %p120 = por %p118, %p119
      %p122 = scmp.ne.s32.totalorder %s107, %s121
      %p123 = scmp.eq.s32.totalorder %s34, 0
      %p124 = por %p122, %p123
      %s126 = sadd.s32 %s125, 1
      %p129 = scmp.eq.s32.totalorder %s28, 1
      %p130 = scmp.ne.s32.totalorder %s125, %s127
      %p131 = scmp.eq.s32.totalorder %s28, 0
      %p132 = por %p130, %p131
      %p133 = scmp.ne.s32.totalorder %s125, %s127
      %p134 = scmp.eq.s32.totalorder %s33, 1
      %p135 = por %p133, %p134
      %p136 = scmp.ne.s32.totalorder %s127, %s128
      %p137 = scmp.eq.s32.totalorder %s33, 0
      %p138 = por %p136, %p137
      %p139 = scmp.ne.s32.totalorder %s127, %s128
      %p140 = scmp.eq.s32.totalorder %s34, 1
      %p141 = por %p139, %p140
      %p143 = scmp.ne.s32.totalorder %s128, %s142
      %p144 = scmp.eq.s32.totalorder %s34, 0
      %p145 = por %p143, %p144
      %s147 = sadd.s32 %s146, 1
      %p150 = scmp.eq.s32.totalorder %s28, 1
      %p151 = scmp.ne.s32.totalorder %s146, %s148
      %p152 = scmp.eq.s32.totalorder %s28, 0
      %p153 = por %p151, %p152
      %p154 = scmp.ne.s32.totalorder %s146, %s148
      %p155 = scmp.eq.s32.totalorder %s33, 1
      %p156 = por %p154, %p155
      %p157 = scmp.ne.s32.totalorder %s148, %s149
      %p158 = scmp.eq.s32.totalorder %s33, 0
      %p159 = por %p157, %p158
      %p160 = scmp.ne.s32.totalorder %s148, %s149
      %p161 = scmp.eq.s32.totalorder %s34, 1
      %p162 = por %p160, %p161
      %p164 = scmp.ne.s32.totalorder %s149, %s163
      %p165 = scmp.eq.s32.totalorder %s34, 0
      %p166 = por %p164, %p165
      %s168 = sadd.s32 %s167, 1
      %p171 = scmp.eq.s32.totalorder %s28, 1
      %p172 = scmp.ne.s32.totalorder %s167, %s169
      %p173 = scmp.eq.s32.totalorder %s28, 0
      %p174 = por %p172, %p173
      %p175 = scmp.ne.s32.totalorder %s167, %s169
      %p176 = scmp.eq.s32.totalorder %s33, 1
      %p177 = por %p175, %p176
      %p178 = scmp.ne.s32.totalorder %s169, %s170
      %p179 = scmp.eq.s32.totalorder %s33, 0
      %p180 = por %p178, %p179
      %p181 = scmp.ne.s32.totalorder %s169, %s170
      %p182 = scmp.eq.s32.totalorder %s34, 1
      %p183 = por %p181, %p182
      %p185 = scmp.ne.s32.totalorder %s170, %s184
      %p186 = scmp.eq.s32.totalorder %s34, 0
      %p187 = por %p185, %p186
      %s189 = sadd.s32 %s188, 1
      %p192 = scmp.eq.s32.totalorder %s28, 1
      %p193 = scmp.ne.s32.totalorder %s188, %s190
      %p194 = scmp.eq.s32.totalorder %s28, 0
      %p195 = por %p193, %p194
      %p196 = scmp.ne.s32.totalorder %s188, %s190
      %p197 = scmp.eq.s32.totalorder %s33, 1
      %p198 = por %p196, %p197
      %p199 = scmp.ne.s32.totalorder %s190, %s191
      %p200 = scmp.eq.s32.totalorder %s33, 0
      %p201 = por %p199, %p200
      %p202 = scmp.ne.s32.totalorder %s190, %s191
      %p203 = scmp.eq.s32.totalorder %s34, 1
      %p204 = por %p202, %p203
      %p206 = scmp.ne.s32.totalorder %s191, %s205
      %p207 = scmp.eq.s32.totalorder %s34, 0
      %p208 = por %p206, %p207
      %s210 = sadd.s32 %s209, 1
      %p213 = scmp.eq.s32.totalorder %s28, 1
      %p214 = scmp.ne.s32.totalorder %s209, %s211
      %p215 = scmp.eq.s32.totalorder %s28, 0
      %p216 = por %p214, %p215
      %p217 = scmp.ne.s32.totalorder %s209, %s211
      %p218 = scmp.eq.s32.totalorder %s33, 1
      %p219 = por %p217, %p218
      %p220 = scmp.ne.s32.totalorder %s211, %s212
      %p221 = scmp.eq.s32.totalorder %s33, 0
      %p222 = por %p220, %p221
      %p223 = scmp.ne.s32.totalorder %s211, %s212
      %p224 = scmp.eq.s32.totalorder %s34, 1
      %p225 = por %p223, %p224
      %p227 = scmp.ne.s32.totalorder %s212, %s226
      %p228 = scmp.eq.s32.totalorder %s34, 0
      %p229 = por %p227, %p228
      %s231 = sadd.s32 %s230, 1
      %p234 = scmp.eq.s32.totalorder %s28, 1
      %p235 = scmp.ne.s32.totalorder %s230, %s232
      %p236 = scmp.eq.s32.totalorder %s28, 0
      %p237 = por %p235, %p236
      %p238 = scmp.ne.s32.totalorder %s230, %s232
      %p239 = scmp.eq.s32.totalorder %s33, 1
      %p240 = por %p238, %p239
      %p241 = scmp.ne.s32.totalorder %s232, %s233
      %p242 = scmp.eq.s32.totalorder %s33, 0
      %p243 = por %p241, %p242
      %p244 = scmp.ne.s32.totalorder %s232, %s233
      %p245 = scmp.eq.s32.totalorder %s34, 1
      %p246 = por %p244, %p245
      %p248 = scmp.ne.s32.totalorder %s233, %s247
      %p249 = scmp.eq.s32.totalorder %s34, 0
      %p250 = por %p248, %p249
      %s252 = sadd.s32 %s251, 1
      %p255 = scmp.eq.s32.totalorder %s28, 1
      %p256 = scmp.ne.s32.totalorder %s251, %s253
      %p257 = scmp.eq.s32.totalorder %s28, 0
      %p258 = por %p256, %p257
      %p259 = scmp.ne.s32.totalorder %s251, %s253
      %p260 = scmp.eq.s32.totalorder %s33, 1
      %p261 = por %p259, %p260
      %p262 = scmp.ne.s32.totalorder %s253, %s254
      %p263 = scmp.eq.s32.totalorder %s33, 0
      %p264 = por %p262, %p263
      %p265 = scmp.ne.s32.totalorder %s253, %s254
      %p266 = scmp.eq.s32.totalorder %s34, 1
      %p267 = por %p265, %p266
      %p269 = scmp.ne.s32.totalorder %s254, %s268
      %p270 = scmp.eq.s32.totalorder %s34, 0
      %p271 = por %p269, %p270
      %s273 = sadd.s32 %s272, 1
      %p276 = scmp.eq.s32.totalorder %s28, 1
      %p277 = scmp.ne.s32.totalorder %s272, %s274
      %p278 = scmp.eq.s32.totalorder %s28, 0
      %p279 = por %p277, %p278
      %p280 = scmp.ne.s32.totalorder %s272, %s274
      %p281 = scmp.eq.s32.totalorder %s33, 1
      %p282 = por %p280, %p281
      %p283 = scmp.ne.s32.totalorder %s274, %s275
      %p284 = scmp.eq.s32.totalorder %s33, 0
      %p285 = por %p283, %p284
      %p286 = scmp.ne.s32.totalorder %s274, %s275
      %p287 = scmp.eq.s32.totalorder %s34, 1
      %p288 = por %p286, %p287
      %p290 = scmp.ne.s32.totalorder %s275, %s289
      %p291 = scmp.eq.s32.totalorder %s34, 0
      %p292 = por %p290, %p291
      %s294 = sadd.s32 %s293, 1
      %p297 = scmp.eq.s32.totalorder %s28, 1
      %p298 = scmp.ne.s32.totalorder %s293, %s295
      %p299 = scmp.eq.s32.totalorder %s28, 0
      %p300 = por %p298, %p299
      %p301 = scmp.ne.s32.totalorder %s293, %s295
      %p302 = scmp.eq.s32.totalorder %s33, 1
      %p303 = por %p301, %p302
      %p304 = scmp.ne.s32.totalorder %s295, %s296
      %p305 = scmp.eq.s32.totalorder %s33, 0
      %p306 = por %p304, %p305
      %p307 = scmp.ne.s32.totalorder %s295, %s296
      %p308 = scmp.eq.s32.totalorder %s34, 1
      %p309 = por %p307, %p308
      %p311 = scmp.ne.s32.totalorder %s296, %s310
      %p312 = scmp.eq.s32.totalorder %s34, 0
      %p313 = por %p311, %p312
      %s314 = ssub.s32 %s28, %s35
      %p315 = scmp.eq.s32.totalorder %s314, 0
      %s317 = sadd.s32 %s316, 1
      %s318 = scalar_select %p315, %s316, %s317
      %p321 = pneg %p315
      %p322 = scmp.eq.s32.totalorder %s28, 1
      %p323 = por %p321, %p322
      %p324 = scmp.ne.s32.totalorder %s316, %s319
      %p325 = scmp.eq.s32.totalorder %s28, 0
      %p326 = por %p324, %p325
      %p327 = scmp.ne.s32.totalorder %s316, %s319
      %p328 = scmp.eq.s32.totalorder %s33, 1
      %p329 = por %p327, %p328
      %p330 = scmp.ne.s32.totalorder %s319, %s320
      %p331 = scmp.eq.s32.totalorder %s33, 0
      %p332 = por %p330, %p331
      %p333 = scmp.ne.s32.totalorder %s319, %s320
      %p334 = scmp.eq.s32.totalorder %s34, 1
      %p335 = por %p333, %p334
      %p337 = scmp.ne.s32.totalorder %s320, %s336
      %p338 = scmp.eq.s32.totalorder %s34, 0
      %p339 = por %p337, %p338
      %s340 = ssub.s32 %s28, %s35
      %p341 = scmp.eq.s32.totalorder %s340, 0
      %s343 = sadd.s32 %s342, 1
      %s344 = scalar_select %p341, %s342, %s343
      %p347 = pneg %p341
      %p348 = scmp.eq.s32.totalorder %s28, 1
      %p349 = por %p347, %p348
      %p350 = scmp.ne.s32.totalorder %s342, %s345
      %p351 = scmp.eq.s32.totalorder %s28, 0
      %p352 = por %p350, %p351
      %p353 = scmp.ne.s32.totalorder %s342, %s345
      %p354 = scmp.eq.s32.totalorder %s33, 1
      %p355 = por %p353, %p354
      %p356 = scmp.ne.s32.totalorder %s345, %s346
      %p357 = scmp.eq.s32.totalorder %s33, 0
      %p358 = por %p356, %p357
      %p359 = scmp.ne.s32.totalorder %s345, %s346
      %p360 = scmp.eq.s32.totalorder %s34, 1
      %p361 = por %p359, %p360
      %p363 = scmp.ne.s32.totalorder %s346, %s362
      %p364 = scmp.eq.s32.totalorder %s34, 0
      %p365 = por %p363, %p364
      %s366 = ssub.s32 %s28, %s35
      %p367 = scmp.eq.s32.totalorder %s366, 0
      %s369 = sadd.s32 %s368, 1
      %s370 = scalar_select %p367, %s368, %s369
      %p373 = pneg %p367
      %p374 = scmp.eq.s32.totalorder %s28, 1
      %p375 = por %p373, %p374
      %p376 = scmp.ne.s32.totalorder %s368, %s371
      %p377 = scmp.eq.s32.totalorder %s28, 0
      %p378 = por %p376, %p377
      %p379 = scmp.ne.s32.totalorder %s368, %s371
      %p380 = scmp.eq.s32.totalorder %s33, 1
      %p381 = por %p379, %p380
      %p382 = scmp.ne.s32.totalorder %s371, %s372
      %p383 = scmp.eq.s32.totalorder %s33, 0
      %p384 = por %p382, %p383
      %p385 = scmp.ne.s32.totalorder %s371, %s372
      %p386 = scmp.eq.s32.totalorder %s34, 1
      %p387 = por %p385, %p386
      %p389 = scmp.ne.s32.totalorder %s372, %s388
      %p390 = scmp.eq.s32.totalorder %s34, 0
      %p391 = por %p389, %p390
      %p392 = scmp.le.s32.totalorder 1, %s28
      %p393 = scmp.lt.s32.totalorder %s28, 3
      %p394 = pnand %p392, %p393
      %p395 = pneg %p394
      // Predicated region
      $region9: #{tpu_custom_call.1} parent=5 // pred_check
        _
      $region10: #{tpu_custom_call.1} parent=5 // pred_check_branch
        %397 = sbr.rel (%p394) target = $region12
      $region11: #{tpu_custom_call.1} parent=5 // pred_region
        %s398 = ssub.s32 %s28, 1
        // Predicated region
        $region13: #{tpu_custom_call.1} parent=11 // pred_check
          %p399 = pneg %p75
        $region14: #{tpu_custom_call.1} parent=11 // pred_check_branch
          %401 = sbr.rel (%p399) target = $region16
        $region15: #{tpu_custom_call.1} parent=11 // pred_region
          _
        $region16: #{tpu_custom_call.1} parent=11 // pred_fallthru
          _
        // Predicated region
        $region17: #{tpu_custom_call.1} parent=11 // pred_check
          %p402 = pneg %p96
        $region18: #{tpu_custom_call.1} parent=11 // pred_check_branch
          %404 = sbr.rel (%p402) target = $region20
        $region19: #{tpu_custom_call.1} parent=11 // pred_region
          _
        $region20: #{tpu_custom_call.1} parent=11 // pred_fallthru
          _
        // Predicated region
        $region21: #{tpu_custom_call.1} parent=11 // pred_check
          %p405 = pneg %p117
        $region22: #{tpu_custom_call.1} parent=11 // pred_check_branch
          %407 = sbr.rel (%p405) target = $region24
        $region23: #{tpu_custom_call.1} parent=11 // pred_region
          _
        $region24: #{tpu_custom_call.1} parent=11 // pred_fallthru
          _
        // Predicated region
        $region25: #{tpu_custom_call.1} parent=11 // pred_check
          %p408 = pneg %p138
        $region26: #{tpu_custom_call.1} parent=11 // pred_check_branch
          %410 = sbr.rel (%p408) target = $region28
        $region27: #{tpu_custom_call.1} parent=11 // pred_region
          _
        $region28: #{tpu_custom_call.1} parent=11 // pred_fallthru
          _
        // Predicated region
        $region29: #{tpu_custom_call.1} parent=11 // pred_check
          %p411 = pneg %p159
        $region30: #{tpu_custom_call.1} parent=11 // pred_check_branch
          %413 = sbr.rel (%p411) target = $region32
        $region31: #{tpu_custom_call.1} parent=11 // pred_region
          _
        $region32: #{tpu_custom_call.1} parent=11 // pred_fallthru
          _
        // Predicated region
        $region33: #{tpu_custom_call.1} parent=11 // pred_check
          %p414 = pneg %p180
        $region34: #{tpu_custom_call.1} parent=11 // pred_check_branch
          %416 = sbr.rel (%p414) target = $region36
        $region35: #{tpu_custom_call.1} parent=11 // pred_region
          _
        $region36: #{tpu_custom_call.1} parent=11 // pred_fallthru
          _
        // Predicated region
        $region37: #{tpu_custom_call.1} parent=11 // pred_check
          %p417 = pneg %p201
        $region38: #{tpu_custom_call.1} parent=11 // pred_check_branch
          %419 = sbr.rel (%p417) target = $region40
        $region39: #{tpu_custom_call.1} parent=11 // pred_region
          _
        $region40: #{tpu_custom_call.1} parent=11 // pred_fallthru
          _
        // Predicated region
        $region41: #{tpu_custom_call.1} parent=11 // pred_check
          %p420 = pneg %p222
        $region42: #{tpu_custom_call.1} parent=11 // pred_check_branch
          %422 = sbr.rel (%p420) target = $region44
        $region43: #{tpu_custom_call.1} parent=11 // pred_region
          _
        $region44: #{tpu_custom_call.1} parent=11 // pred_fallthru
          _
        // Predicated region
        $region45: #{tpu_custom_call.1} parent=11 // pred_check
          %p423 = pneg %p243
        $region46: #{tpu_custom_call.1} parent=11 // pred_check_branch
          %425 = sbr.rel (%p423) target = $region48
        $region47: #{tpu_custom_call.1} parent=11 // pred_region
          _
        $region48: #{tpu_custom_call.1} parent=11 // pred_fallthru
          _
        // Predicated region
        $region49: #{tpu_custom_call.1} parent=11 // pred_check
          %p426 = pneg %p264
        $region50: #{tpu_custom_call.1} parent=11 // pred_check_branch
          %428 = sbr.rel (%p426) target = $region52
        $region51: #{tpu_custom_call.1} parent=11 // pred_region
          _
        $region52: #{tpu_custom_call.1} parent=11 // pred_fallthru
          _
        // Predicated region
        $region53: #{tpu_custom_call.1} parent=11 // pred_check
          %p429 = pneg %p285
        $region54: #{tpu_custom_call.1} parent=11 // pred_check_branch
          %431 = sbr.rel (%p429) target = $region56
        $region55: #{tpu_custom_call.1} parent=11 // pred_region
          _
        $region56: #{tpu_custom_call.1} parent=11 // pred_fallthru
          _
        // Predicated region
        $region57: #{tpu_custom_call.1} parent=11 // pred_check
          %p432 = pneg %p306
        $region58: #{tpu_custom_call.1} parent=11 // pred_check_branch
          %434 = sbr.rel (%p432) target = $region60
        $region59: #{tpu_custom_call.1} parent=11 // pred_region
          _
        $region60: #{tpu_custom_call.1} parent=11 // pred_fallthru
          _
      $region12: #{tpu_custom_call.1} parent=5 // pred_fallthru
        _
      %p435 = scmp.lt.s32.totalorder %s28, 2
      // Predicated region
      $region61: #{tpu_custom_call.1} parent=5 // pred_check
        %p436 = pneg %p435
      $region62: #{tpu_custom_call.1} parent=5 // pred_check_branch
        %438 = sbr.rel (%p436) target = $region64
      $region63: #{tpu_custom_call.1} parent=5 // pred_region
        // Predicated region
        $region65: #{tpu_custom_call.1} parent=63 // pred_check
          %p439 = pneg %p48
        $region66: #{tpu_custom_call.1} parent=63 // pred_check_branch
          %441 = sbr.rel (%p439) target = $region68
        $region67: #{tpu_custom_call.1} parent=63 // pred_region
          %p442 = scmp.lt.s32.totalorder %s28, 1
          %s443 = scalar_select %p442, %s28, 1
          %s444 = smul.addr %s443, 32
          %s445 = smul.addr %s444, 8
          %s446 = scalar_lea.vmem %s0, %s445
        $region68: #{tpu_custom_call.1} parent=63 // pred_fallthru
          _
      $region64: #{tpu_custom_call.1} parent=5 // pred_fallthru
        _
      %p447 = scmp.le.s32.totalorder 1, %s28
      %p448 = scmp.lt.s32.totalorder %s28, 3
      %p449 = pnand %p447, %p448
      %p450 = pneg %p449
      // Predicated region
      $region69: #{tpu_custom_call.1} parent=5 // pred_check
        _
      $region70: #{tpu_custom_call.1} parent=5 // pred_check_branch
        %452 = sbr.rel (%p449) target = $region72
      $region71: #{tpu_custom_call.1} parent=5 // pred_region
        %s453 = ssub.s32 %s28, 1
        %p454 = scmp.lt.s32.totalorder %s33, 1
        %s455 = scalar_select %p454, %s33, 1
        %s456 = smul.addr %s455, 32
        %s457 = smul.addr %s456, 8
        %s458 = scalar_lea.vmem %s0, %s457
        %p459 = pneg %p54
        %p460 = pneg %p51
        %p461 = pneg %p75
        %p462 = pneg %p72
        %p463 = pneg %p96
        %p464 = pneg %p93
        %p465 = pneg %p117
        %p466 = pneg %p114
        %p467 = pneg %p138
        %p468 = pneg %p135
        %p469 = pneg %p159
        %p470 = pneg %p156
        %p471 = pneg %p180
        %p472 = pneg %p177
        %p473 = pneg %p201
        %p474 = pneg %p198
        %p475 = pneg %p222
        %p476 = pneg %p219
        %p477 = pneg %p243
        %p478 = pneg %p240
        %p479 = pneg %p264
        %p480 = pneg %p261
        %p481 = pneg %p285
        %p482 = pneg %p282
        %p483 = pneg %p306
        %p484 = pneg %p303
        %p485 = pneg %p332
        %p486 = pneg %p329
        %p487 = scmp.lt.s32.totalorder %s33, 1
        %s488 = scalar_select %p487, %s33, 1
        %s489 = smul.addr %s488, 32
        %s490 = smul.addr %s489, 4
        %s491 = scalar_lea.vmem %s13, %s490
        %p492 = pneg %p358
        %p493 = pneg %p355
        %s494 = sand.u32 %s345, 1
        %s495 = scalar_lea.sflag [#allocation5], %s494
        %s496 = sand.u32 %s345, 1
        %s497 = smul.addr %s496, 128
        %s498 = scalar_lea.vmem [#allocation4], %s497
        %p499 = pneg %p384
        %p500 = pneg %p381
        %s501 = sand.u32 %s371, 1
        %s502 = scalar_lea.sflag [#allocation7], %s501
        %s503 = sand.u32 %s371, 1
        %s504 = scalar_lea.vmem [#allocation6], %s503
        %p505 = scmp.lt.s32.totalorder %s33, 1
        %s506 = scalar_select %p505, %s33, 1
        %s507 = smul.addr %s506, 32
        %s508 = smul.addr %s507, 8
        %s509 = scalar_lea.vmem %s0, %s508
        %p510 = scmp.lt.s32.totalorder %s33, 1
        %s511 = scalar_select %p510, %s33, 1
        %s512 = smul.addr %s511, 32
        %s513 = smul.addr %s512, 4
        %s514 = scalar_lea.vmem %s13, %s513
        %vm516 = vcmask 23552
        %517 = vst.msk [vmem:[#allocation2] sm:$0xff] %vm516, 0.0
        %518 = vst.msk [vmem:[#allocation2 + $0x8] sm:$0xff] %vm516, 0.0
        %s519 = scalar_lea.vmem [#allocation2], 272
        %520 = vst.msk [vmem:[%s519] sm:$0xff] %vm516, 0.0
        %521 = vst.msk [vmem:[%s519 + $0x8] sm:$0xff] %vm516, 0.0
        %v522 = vld [vmem:[%s509] sm:$0xff]
        %v523 = vld [vmem:[%s509 + $0x8] sm:$0xff]
        %v524 = vld [vmem:[%s509 + $0x10] sm:$0xff]
        %v525 = vld [vmem:[%s509 + $0x18] sm:$0xff]
        %v526 = vld [vmem:[%s509 + $0x20] sm:$0xff]
        %v527 = vld [vmem:[%s509 + $0x28] sm:$0xff]
        %v528 = vld [vmem:[%s509 + $0x30] sm:$0xff]
        %v529 = vld [vmem:[%s509 + $0x38] sm:$0xff]
        %v530 = vld [vmem:[%s509 + $0x40] sm:$0xff]
        %v531 = vld [vmem:[%s509 + $0x48] sm:$0xff]
        %v532 = vld [vmem:[%s509 + $0x50] sm:$0xff]
        %v533 = vld [vmem:[%s509 + $0x58] sm:$0xff]
        %v534 = vld [vmem:[%s509 + $0x60] sm:$0xff]
        %v535 = vld [vmem:[%s509 + $0x68] sm:$0xff]
        %v536 = vld [vmem:[%s509 + $0x70] sm:$0xff]
        %v537 = vld [vmem:[%s509 + $0x78] sm:$0xff]
        %v538 = vld [vmem:[%s509 + $0x80] sm:$0xff]
        %v539 = vld [vmem:[%s509 + $0x88] sm:$0xff]
        %v540 = vld [vmem:[%s509 + $0x90] sm:$0xff]
        %v541 = vld [vmem:[%s509 + $0x98] sm:$0xff]
        %v542 = vld [vmem:[%s509 + $0xa0] sm:$0xff]
        %v543 = vld [vmem:[%s509 + $0xa8] sm:$0xff]
        %v544 = vld [vmem:[%s509 + $0xb0] sm:$0xff]
        %v545 = vld [vmem:[%s509 + $0xb8] sm:$0xff]
        %v546 = vld [vmem:[%s509 + $0xc0] sm:$0xff]
        %v547 = vld [vmem:[%s509 + $0xc8] sm:$0xff]
        %v548 = vld [vmem:[%s509 + $0xd0] sm:$0xff]
        %v549 = vld [vmem:[%s509 + $0xd8] sm:$0xff]
        %v550 = vld [vmem:[%s509 + $0xe0] sm:$0xff]
        %v551 = vld [vmem:[%s509 + $0xe8] sm:$0xff]
        %v552 = vld [vmem:[%s509 + $0xf0] sm:$0xff]
        %v553 = vld [vmem:[%s509 + $0xf8] sm:$0xff]
        %s554 = scalar_lea.vmem [#allocation2], 16
        %555 = vst.msk [vmem:[%s554] sm:$0xff] %vm516, %v522
        %556 = vst.msk [vmem:[%s554 + $0x8] sm:$0xff] %vm516, %v523
        %557 = vst.msk [vmem:[%s554 + $0x10] sm:$0xff] %vm516, %v524
        %558 = vst.msk [vmem:[%s554 + $0x18] sm:$0xff] %vm516, %v525
        %559 = vst.msk [vmem:[%s554 + $0x20] sm:$0xff] %vm516, %v526
        %560 = vst.msk [vmem:[%s554 + $0x28] sm:$0xff] %vm516, %v527
        %561 = vst.msk [vmem:[%s554 + $0x30] sm:$0xff] %vm516, %v528
        %562 = vst.msk [vmem:[%s554 + $0x38] sm:$0xff] %vm516, %v529
        %563 = vst.msk [vmem:[%s554 + $0x40] sm:$0xff] %vm516, %v530
        %564 = vst.msk [vmem:[%s554 + $0x48] sm:$0xff] %vm516, %v531
        %565 = vst.msk [vmem:[%s554 + $0x50] sm:$0xff] %vm516, %v532
        %566 = vst.msk [vmem:[%s554 + $0x58] sm:$0xff] %vm516, %v533
        %567 = vst.msk [vmem:[%s554 + $0x60] sm:$0xff] %vm516, %v534
        %568 = vst.msk [vmem:[%s554 + $0x68] sm:$0xff] %vm516, %v535
        %569 = vst.msk [vmem:[%s554 + $0x70] sm:$0xff] %vm516, %v536
        %570 = vst.msk [vmem:[%s554 + $0x78] sm:$0xff] %vm516, %v537
        %571 = vst.msk [vmem:[%s554 + $0x80] sm:$0xff] %vm516, %v538
        %572 = vst.msk [vmem:[%s554 + $0x88] sm:$0xff] %vm516, %v539
        %573 = vst.msk [vmem:[%s554 + $0x90] sm:$0xff] %vm516, %v540
        %574 = vst.msk [vmem:[%s554 + $0x98] sm:$0xff] %vm516, %v541
        %575 = vst.msk [vmem:[%s554 + $0xa0] sm:$0xff] %vm516, %v542
        %576 = vst.msk [vmem:[%s554 + $0xa8] sm:$0xff] %vm516, %v543
        %577 = vst.msk [vmem:[%s554 + $0xb0] sm:$0xff] %vm516, %v544
        %578 = vst.msk [vmem:[%s554 + $0xb8] sm:$0xff] %vm516, %v545
        %579 = vst.msk [vmem:[%s554 + $0xc0] sm:$0xff] %vm516, %v546
        %580 = vst.msk [vmem:[%s554 + $0xc8] sm:$0xff] %vm516, %v547
        %581 = vst.msk [vmem:[%s554 + $0xd0] sm:$0xff] %vm516, %v548
        %582 = vst.msk [vmem:[%s554 + $0xd8] sm:$0xff] %vm516, %v549
        %583 = vst.msk [vmem:[%s554 + $0xe0] sm:$0xff] %vm516, %v550
        %584 = vst.msk [vmem:[%s554 + $0xe8] sm:$0xff] %vm516, %v551
        %585 = vst.msk [vmem:[%s554 + $0xf0] sm:$0xff] %vm516, %v552
        %586 = vst.msk [vmem:[%s554 + $0xf8] sm:$0xff] %vm516, %v553
        %v587 = vlaneseq
        %v588 = vshrl.u32 %v587, 7
        %v589 = vadd.s32 %v588, 8
        %v590 = vld [vmem:[#allocation2] sm:$0xff]
        %v591 = vld [vmem:[#allocation2 + $0x8] sm:$0xff]
        %v592 = vld [vmem:[#allocation2 + $0x10] sm:$0xff]
        %v593 = vld [vmem:[#allocation2 + $0x18] sm:$0xff]
        %v594 = vld [vmem:[#allocation2 + $0x20] sm:$0xff]
        %v595 = vld [vmem:[#allocation2 + $0x28] sm:$0xff]
        %v596 = vld [vmem:[#allocation2 + $0x30] sm:$0xff]
        %v597 = vld [vmem:[#allocation2 + $0x38] sm:$0xff]
        %v598 = vld [vmem:[#allocation2 + $0x40] sm:$0xff]
        %v599 = vld [vmem:[#allocation2 + $0x48] sm:$0xff]
        %v600 = vld [vmem:[#allocation2 + $0x50] sm:$0xff]
        %v601 = vld [vmem:[#allocation2 + $0x58] sm:$0xff]
        %v602 = vld [vmem:[#allocation2 + $0x60] sm:$0xff]
        %v603 = vld [vmem:[#allocation2 + $0x68] sm:$0xff]
        %v604 = vld [vmem:[#allocation2 + $0x70] sm:$0xff]
        %v605 = vld [vmem:[#allocation2 + $0x78] sm:$0xff]
        %v606 = vld [vmem:[#allocation2 + $0x80] sm:$0xff]
        %v607 = vld [vmem:[#allocation2 + $0x88] sm:$0xff]
        %v608 = vld [vmem:[#allocation2 + $0x90] sm:$0xff]
        %v609 = vld [vmem:[#allocation2 + $0x98] sm:$0xff]
        %v610 = vld [vmem:[#allocation2 + $0xa0] sm:$0xff]
        %v611 = vld [vmem:[#allocation2 + $0xa8] sm:$0xff]
        %v612 = vld [vmem:[#allocation2 + $0xb0] sm:$0xff]
        %v613 = vld [vmem:[#allocation2 + $0xb8] sm:$0xff]
        %v614 = vld [vmem:[#allocation2 + $0xc0] sm:$0xff]
        %v615 = vld [vmem:[#allocation2 + $0xc8] sm:$0xff]
        %v616 = vld [vmem:[#allocation2 + $0xd0] sm:$0xff]
        %v617 = vld [vmem:[#allocation2 + $0xd8] sm:$0xff]
        %v618 = vld [vmem:[#allocation2 + $0xe0] sm:$0xff]
        %v619 = vld [vmem:[#allocation2 + $0xe8] sm:$0xff]
        %v620 = vld [vmem:[#allocation2 + $0xf0] sm:$0xff]
        %v621 = vld [vmem:[#allocation2 + $0xf8] sm:$0xff]
        %v622 = vrot.slane %v590, 7
        %v623 = vrot.slane %v592, 7
        %v624 = vrot.slane %v594, 7
        %v625 = vrot.slane %v596, 7
        %v626 = vrot.slane %v598, 7
        %v627 = vrot.slane %v600, 7
        %v628 = vrot.slane %v602, 7
        %v629 = vrot.slane %v604, 7
        %v630 = vrot.slane %v606, 7
        %v631 = vrot.slane %v608, 7
        %v632 = vrot.slane %v610, 7
        %v633 = vrot.slane %v612, 7
        %v634 = vrot.slane %v614, 7
        %v635 = vrot.slane %v616, 7
        %v636 = vrot.slane %v618, 7
        %v637 = vrot.slane %v620, 7
        %v638 = vrot.slane %v591, 7
        %v639 = vrot.slane %v593, 7
        %v640 = vrot.slane %v595, 7
        %v641 = vrot.slane %v597, 7
        %v642 = vrot.slane %v599, 7
        %v643 = vrot.slane %v601, 7
        %v644 = vrot.slane %v603, 7
        %v645 = vrot.slane %v605, 7
        %v646 = vrot.slane %v607, 7
        %v647 = vrot.slane %v609, 7
        %v648 = vrot.slane %v611, 7
        %v649 = vrot.slane %v613, 7
        %v650 = vrot.slane %v615, 7
        %v651 = vrot.slane %v617, 7
        %v652 = vrot.slane %v619, 7
        %v653 = vrot.slane %v621, 7
        %vm654 = vcmp.lt.s32.totalorder %v588, 1
        %v655 = vsel %vm654, %v622, %v638
        %v656 = vsel %vm654, %v623, %v639
        %v657 = vsel %vm654, %v624, %v640
        %v658 = vsel %vm654, %v625, %v641
        %v659 = vsel %vm654, %v626, %v642
        %v660 = vsel %vm654, %v627, %v643
        %v661 = vsel %vm654, %v628, %v644
        %v662 = vsel %vm654, %v629, %v645
        %v663 = vsel %vm654, %v630, %v646
        %v664 = vsel %vm654, %v631, %v647
        %v665 = vsel %vm654, %v632, %v648
        %v666 = vsel %vm654, %v633, %v649
        %v667 = vsel %vm654, %v634, %v650
        %v668 = vsel %vm654, %v635, %v651
        %v669 = vsel %vm654, %v636, %v652
        %v670 = vsel %vm654, %v637, %v653
        %v671 = vsel %vm654, %v638, %v622
        %v672 = vsel %vm654, %v639, %v623
        %v673 = vsel %vm654, %v640, %v624
        %v674 = vsel %vm654, %v641, %v625
        %v675 = vsel %vm654, %v642, %v626
        %v676 = vsel %vm654, %v643, %v627
        %v677 = vsel %vm654, %v644, %v628
        %v678 = vsel %vm654, %v645, %v629
        %v679 = vsel %vm654, %v646, %v630
        %v680 = vsel %vm654, %v647, %v631
        %v681 = vsel %vm654, %v648, %v632
        %v682 = vsel %vm654, %v649, %v633
        %v683 = vsel %vm654, %v650, %v634
        %v684 = vsel %vm654, %v651, %v635
        %v685 = vsel %vm654, %v652, %v636
        %v686 = vsel %vm654, %v653, %v637
        %vm687 = vcmp.eq.s32.totalorder %v588, 0
        %vm688 = vcmp.eq.s32.totalorder %v589, 0
        %v689 = vsel %vm687, 0.0, %v671
        %v690 = vsel %vm688, 0.0, %v655
        %v691 = vsel %vm687, 0.0, %v672
        %v692 = vsel %vm688, 0.0, %v656
        %v693 = vsel %vm687, 0.0, %v673
        %v694 = vsel %vm688, 0.0, %v657
        %v695 = vsel %vm687, 0.0, %v674
        %v696 = vsel %vm688, 0.0, %v658
        %v697 = vsel %vm687, 0.0, %v675
        %v698 = vsel %vm688, 0.0, %v659
        %v699 = vsel %vm687, 0.0, %v676
        %v700 = vsel %vm688, 0.0, %v660
        %v701 = vsel %vm687, 0.0, %v677
        %v702 = vsel %vm688, 0.0, %v661
        %v703 = vsel %vm687, 0.0, %v678
        %v704 = vsel %vm688, 0.0, %v662
        %v705 = vsel %vm687, 0.0, %v679
        %v706 = vsel %vm688, 0.0, %v663
        %v707 = vsel %vm687, 0.0, %v680
        %v708 = vsel %vm688, 0.0, %v664
        %v709 = vsel %vm687, 0.0, %v681
        %v710 = vsel %vm688, 0.0, %v665
        %v711 = vsel %vm687, 0.0, %v682
        %v712 = vsel %vm688, 0.0, %v666
        %v713 = vsel %vm687, 0.0, %v683
        %v714 = vsel %vm688, 0.0, %v667
        %v715 = vsel %vm687, 0.0, %v684
        %v716 = vsel %vm688, 0.0, %v668
        %v717 = vsel %vm687, 0.0, %v685
        %v718 = vsel %vm688, 0.0, %v669
        %v719 = vsel %vm687, 0.0, %v686
        %v720 = vsel %vm688, 0.0, %v670
        %v721 = vrot.slane %v590, 1
        %v722 = vrot.slane %v592, 1
        %v723 = vrot.slane %v594, 1
        %v724 = vrot.slane %v596, 1
        %v725 = vrot.slane %v598, 1
        %v726 = vrot.slane %v600, 1
        %v727 = vrot.slane %v602, 1
        %v728 = vrot.slane %v604, 1
        %v729 = vrot.slane %v606, 1
        %v730 = vrot.slane %v608, 1
        %v731 = vrot.slane %v610, 1
        %v732 = vrot.slane %v612, 1
        %v733 = vrot.slane %v614, 1
        %v734 = vrot.slane %v616, 1
        %v735 = vrot.slane %v618, 1
        %v736 = vrot.slane %v620, 1
        %v737 = vrot.slane %v591, 1
        %v738 = vrot.slane %v593, 1
        %v739 = vrot.slane %v595, 1
        %v740 = vrot.slane %v597, 1
        %v741 = vrot.slane %v599, 1
        %v742 = vrot.slane %v601, 1
        %v743 = vrot.slane %v603, 1
        %v744 = vrot.slane %v605, 1
        %v745 = vrot.slane %v607, 1
        %v746 = vrot.slane %v609, 1
        %v747 = vrot.slane %v611, 1
        %v748 = vrot.slane %v613, 1
        %v749 = vrot.slane %v615, 1
        %v750 = vrot.slane %v617, 1
        %v751 = vrot.slane %v619, 1
        %v752 = vrot.slane %v621, 1
        %vm753 = vcmp.lt.s32.totalorder %v588, 7
        %v754 = vsel %vm753, %v721, %v737
        %v755 = vsel %vm753, %v722, %v738
        %v756 = vsel %vm753, %v723, %v739
        %v757 = vsel %vm753, %v724, %v740
        %v758 = vsel %vm753, %v725, %v741
        %v759 = vsel %vm753, %v726, %v742
        %v760 = vsel %vm753, %v727, %v743
        %v761 = vsel %vm753, %v728, %v744
        %v762 = vsel %vm753, %v729, %v745
        %v763 = vsel %vm753, %v730, %v746
        %v764 = vsel %vm753, %v731, %v747
        %v765 = vsel %vm753, %v732, %v748
        %v766 = vsel %vm753, %v733, %v749
        %v767 = vsel %vm753, %v734, %v750
        %v768 = vsel %vm753, %v735, %v751
        %v769 = vsel %vm753, %v736, %v752
        %v770 = vsel %vm753, %v737, %v721
        %v771 = vsel %vm753, %v738, %v722
        %v772 = vsel %vm753, %v739, %v723
        %v773 = vsel %vm753, %v740, %v724
        %v774 = vsel %vm753, %v741, %v725
        %v775 = vsel %vm753, %v742, %v726
        %v776 = vsel %vm753, %v743, %v727
        %v777 = vsel %vm753, %v744, %v728
        %v778 = vsel %vm753, %v745, %v729
        %v779 = vsel %vm753, %v746, %v730
        %v780 = vsel %vm753, %v747, %v731
        %v781 = vsel %vm753, %v748, %v732
        %v782 = vsel %vm753, %v749, %v733
        %v783 = vsel %vm753, %v750, %v734
        %v784 = vsel %vm753, %v751, %v735
        %v785 = vsel %vm753, %v752, %v736
        %vm786 = vcmp.eq.s32.totalorder %v588, 15
        %vm787 = vcmp.eq.s32.totalorder %v589, 15
        %v788 = vsel %vm786, 0.0, %v754
        %v789 = vsel %vm787, 0.0, %v770
        %v790 = vsel %vm786, 0.0, %v755
        %v791 = vsel %vm787, 0.0, %v771
        %v792 = vsel %vm786, 0.0, %v756
        %v793 = vsel %vm787, 0.0, %v772
        %v794 = vsel %vm786, 0.0, %v757
        %v795 = vsel %vm787, 0.0, %v773
        %v796 = vsel %vm786, 0.0, %v758
        %v797 = vsel %vm787, 0.0, %v774
        %v798 = vsel %vm786, 0.0, %v759
        %v799 = vsel %vm787, 0.0, %v775
        %v800 = vsel %vm786, 0.0, %v760
        %v801 = vsel %vm787, 0.0, %v776
        %v802 = vsel %vm786, 0.0, %v761
        %v803 = vsel %vm787, 0.0, %v777
        %v804 = vsel %vm786, 0.0, %v762
        %v805 = vsel %vm787, 0.0, %v778
        %v806 = vsel %vm786, 0.0, %v763
        %v807 = vsel %vm787, 0.0, %v779
        %v808 = vsel %vm786, 0.0, %v764
        %v809 = vsel %vm787, 0.0, %v780
        %v810 = vsel %vm786, 0.0, %v765
        %v811 = vsel %vm787, 0.0, %v781
        %v812 = vsel %vm786, 0.0, %v766
        %v813 = vsel %vm787, 0.0, %v782
        %v814 = vsel %vm786, 0.0, %v767
        %v815 = vsel %vm787, 0.0, %v783
        %v816 = vsel %vm786, 0.0, %v768
        %v817 = vsel %vm787, 0.0, %v784
        %v818 = vsel %vm786, 0.0, %v769
        %v819 = vsel %vm787, 0.0, %v785
        %v820 = vld [vmem:[%s554] sm:$0xff]
        %v821 = vld [vmem:[%s554 + $0x8] sm:$0xff]
        %v822 = vld [vmem:[%s554 + $0x10] sm:$0xff]
        %v823 = vld [vmem:[%s554 + $0x18] sm:$0xff]
        %v824 = vld [vmem:[%s554 + $0x20] sm:$0xff]
        %v825 = vld [vmem:[%s554 + $0x28] sm:$0xff]
        %v826 = vld [vmem:[%s554 + $0x30] sm:$0xff]
        %v827 = vld [vmem:[%s554 + $0x38] sm:$0xff]
        %v828 = vld [vmem:[%s554 + $0x40] sm:$0xff]
        %v829 = vld [vmem:[%s554 + $0x48] sm:$0xff]
        %v830 = vld [vmem:[%s554 + $0x50] sm:$0xff]
        %v831 = vld [vmem:[%s554 + $0x58] sm:$0xff]
        %v832 = vld [vmem:[%s554 + $0x60] sm:$0xff]
        %v833 = vld [vmem:[%s554 + $0x68] sm:$0xff]
        %v834 = vld [vmem:[%s554 + $0x70] sm:$0xff]
        %v835 = vld [vmem:[%s554 + $0x78] sm:$0xff]
        %v836 = vld [vmem:[%s554 + $0x80] sm:$0xff]
        %v837 = vld [vmem:[%s554 + $0x88] sm:$0xff]
        %v838 = vld [vmem:[%s554 + $0x90] sm:$0xff]
        %v839 = vld [vmem:[%s554 + $0x98] sm:$0xff]
        %v840 = vld [vmem:[%s554 + $0xa0] sm:$0xff]
        %v841 = vld [vmem:[%s554 + $0xa8] sm:$0xff]
        %v842 = vld [vmem:[%s554 + $0xb0] sm:$0xff]
        %v843 = vld [vmem:[%s554 + $0xb8] sm:$0xff]
        %v844 = vld [vmem:[%s554 + $0xc0] sm:$0xff]
        %v845 = vld [vmem:[%s554 + $0xc8] sm:$0xff]
        %v846 = vld [vmem:[%s554 + $0xd0] sm:$0xff]
        %v847 = vld [vmem:[%s554 + $0xd8] sm:$0xff]
        %v848 = vld [vmem:[%s554 + $0xe0] sm:$0xff]
        %v849 = vld [vmem:[%s554 + $0xe8] sm:$0xff]
        %v850 = vld [vmem:[%s554 + $0xf0] sm:$0xff]
        %v851 = vld [vmem:[%s554 + $0xf8] sm:$0xff]
        %v852 = vrot.slane %v820, 7
        %v853 = vrot.slane %v822, 7
        %v854 = vrot.slane %v824, 7
        %v855 = vrot.slane %v826, 7
        %v856 = vrot.slane %v828, 7
        %v857 = vrot.slane %v830, 7
        %v858 = vrot.slane %v832, 7
        %v859 = vrot.slane %v834, 7
        %v860 = vrot.slane %v836, 7
        %v861 = vrot.slane %v838, 7
        %v862 = vrot.slane %v840, 7
        %v863 = vrot.slane %v842, 7
        %v864 = vrot.slane %v844, 7
        %v865 = vrot.slane %v846, 7
        %v866 = vrot.slane %v848, 7
        %v867 = vrot.slane %v850, 7
        %v868 = vrot.slane %v821, 7
        %v869 = vrot.slane %v823, 7
        %v870 = vrot.slane %v825, 7
        %v871 = vrot.slane %v827, 7
        %v872 = vrot.slane %v829, 7
        %v873 = vrot.slane %v831, 7
        %v874 = vrot.slane %v833, 7
        %v875 = vrot.slane %v835, 7
        %v876 = vrot.slane %v837, 7
        %v877 = vrot.slane %v839, 7
        %v878 = vrot.slane %v841, 7
        %v879 = vrot.slane %v843, 7
        %v880 = vrot.slane %v845, 7
        %v881 = vrot.slane %v847, 7
        %v882 = vrot.slane %v849, 7
        %v883 = vrot.slane %v851, 7
        %v884 = vsel %vm654, %v852, %v868
        %v885 = vsel %vm654, %v853, %v869
        %v886 = vsel %vm654, %v854, %v870
        %v887 = vsel %vm654, %v855, %v871
        %v888 = vsel %vm654, %v856, %v872
        %v889 = vsel %vm654, %v857, %v873
        %v890 = vsel %vm654, %v858, %v874
        %v891 = vsel %vm654, %v859, %v875
        %v892 = vsel %vm654, %v860, %v876
        %v893 = vsel %vm654, %v861, %v877
        %v894 = vsel %vm654, %v862, %v878
        %v895 = vsel %vm654, %v863, %v879
        %v896 = vsel %vm654, %v864, %v880
        %v897 = vsel %vm654, %v865, %v881
        %v898 = vsel %vm654, %v866, %v882
        %v899 = vsel %vm654, %v867, %v883
        %v900 = vsel %vm654, %v868, %v852
        %v901 = vsel %vm654, %v869, %v853
        %v902 = vsel %vm654, %v870, %v854
        %v903 = vsel %vm654, %v871, %v855
        %v904 = vsel %vm654, %v872, %v856
        %v905 = vsel %vm654, %v873, %v857
        %v906 = vsel %vm654, %v874, %v858
        %v907 = vsel %vm654, %v875, %v859
        %v908 = vsel %vm654, %v876, %v860
        %v909 = vsel %vm654, %v877, %v861
        %v910 = vsel %vm654, %v878, %v862
        %v911 = vsel %vm654, %v879, %v863
        %v912 = vsel %vm654, %v880, %v864
        %v913 = vsel %vm654, %v881, %v865
        %v914 = vsel %vm654, %v882, %v866
        %v915 = vsel %vm654, %v883, %v867
        %v916 = vsel %vm687, 0.0, %v900
        %v917 = vsel %vm688, 0.0, %v884
        %v918 = vsel %vm687, 0.0, %v901
        %v919 = vsel %vm688, 0.0, %v885
        %v920 = vsel %vm687, 0.0, %v902
        %v921 = vsel %vm688, 0.0, %v886
        %v922 = vsel %vm687, 0.0, %v903
        %v923 = vsel %vm688, 0.0, %v887
        %v924 = vsel %vm687, 0.0, %v904
        %v925 = vsel %vm688, 0.0, %v888
        %v926 = vsel %vm687, 0.0, %v905
        %v927 = vsel %vm688, 0.0, %v889
        %v928 = vsel %vm687, 0.0, %v906
        %v929 = vsel %vm688, 0.0, %v890
        %v930 = vsel %vm687, 0.0, %v907
        %v931 = vsel %vm688, 0.0, %v891
        %v932 = vsel %vm687, 0.0, %v908
        %v933 = vsel %vm688, 0.0, %v892
        %v934 = vsel %vm687, 0.0, %v909
        %v935 = vsel %vm688, 0.0, %v893
        %v936 = vsel %vm687, 0.0, %v910
        %v937 = vsel %vm688, 0.0, %v894
        %v938 = vsel %vm687, 0.0, %v911
        %v939 = vsel %vm688, 0.0, %v895
        %v940 = vsel %vm687, 0.0, %v912
        %v941 = vsel %vm688, 0.0, %v896
        %v942 = vsel %vm687, 0.0, %v913
        %v943 = vsel %vm688, 0.0, %v897
        %v944 = vsel %vm687, 0.0, %v914
        %v945 = vsel %vm688, 0.0, %v898
        %v946 = vsel %vm687, 0.0, %v915
        %v947 = vsel %vm688, 0.0, %v899
        %v948 = vrot.slane %v820, 1
        %v949 = vrot.slane %v822, 1
        %v950 = vrot.slane %v824, 1
        %v951 = vrot.slane %v826, 1
        %v952 = vrot.slane %v828, 1
        %v953 = vrot.slane %v830, 1
        %v954 = vrot.slane %v832, 1
        %v955 = vrot.slane %v834, 1
        %v956 = vrot.slane %v836, 1
        %v957 = vrot.slane %v838, 1
        %v958 = vrot.slane %v840, 1
        %v959 = vrot.slane %v842, 1
        %v960 = vrot.slane %v844, 1
        %v961 = vrot.slane %v846, 1
        %v962 = vrot.slane %v848, 1
        %v963 = vrot.slane %v850, 1
        %v964 = vrot.slane %v821, 1
        %v965 = vrot.slane %v823, 1
        %v966 = vrot.slane %v825, 1
        %v967 = vrot.slane %v827, 1
        %v968 = vrot.slane %v829, 1
        %v969 = vrot.slane %v831, 1
        %v970 = vrot.slane %v833, 1
        %v971 = vrot.slane %v835, 1
        %v972 = vrot.slane %v837, 1
        %v973 = vrot.slane %v839, 1
        %v974 = vrot.slane %v841, 1
        %v975 = vrot.slane %v843, 1
        %v976 = vrot.slane %v845, 1
        %v977 = vrot.slane %v847, 1
        %v978 = vrot.slane %v849, 1
        %v979 = vrot.slane %v851, 1
        %v980 = vsel %vm753, %v948, %v964
        %v981 = vsel %vm753, %v949, %v965
        %v982 = vsel %vm753, %v950, %v966
        %v983 = vsel %vm753, %v951, %v967
        %v984 = vsel %vm753, %v952, %v968
        %v985 = vsel %vm753, %v953, %v969
        %v986 = vsel %vm753, %v954, %v970
        %v987 = vsel %vm753, %v955, %v971
        %v988 = vsel %vm753, %v956, %v972
        %v989 = vsel %vm753, %v957, %v973
        %v990 = vsel %vm753, %v958, %v974
        %v991 = vsel %vm753, %v959, %v975
        %v992 = vsel %vm753, %v960, %v976
        %v993 = vsel %vm753, %v961, %v977
        %v994 = vsel %vm753, %v962, %v978
        %v995 = vsel %vm753, %v963, %v979
        %v996 = vsel %vm753, %v964, %v948
        %v997 = vsel %vm753, %v965, %v949
        %v998 = vsel %vm753, %v966, %v950
        %v999 = vsel %vm753, %v967, %v951
        %v1000 = vsel %vm753, %v968, %v952
        %v1001 = vsel %vm753, %v969, %v953
        %v1002 = vsel %vm753, %v970, %v954
        %v1003 = vsel %vm753, %v971, %v955
        %v1004 = vsel %vm753, %v972, %v956
        %v1005 = vsel %vm753, %v973, %v957
        %v1006 = vsel %vm753, %v974, %v958
        %v1007 = vsel %vm753, %v975, %v959
        %v1008 = vsel %vm753, %v976, %v960
        %v1009 = vsel %vm753, %v977, %v961
        %v1010 = vsel %vm753, %v978, %v962
        %v1011 = vsel %vm753, %v979, %v963
        %v1012 = vsel %vm786, 0.0, %v980
        %v1013 = vsel %vm787, 0.0, %v996
        %v1014 = vsel %vm786, 0.0, %v981
        %v1015 = vsel %vm787, 0.0, %v997
        %v1016 = vsel %vm786, 0.0, %v982
        %v1017 = vsel %vm787, 0.0, %v998
        %v1018 = vsel %vm786, 0.0, %v983
        %v1019 = vsel %vm787, 0.0, %v999
        %v1020 = vsel %vm786, 0.0, %v984
        %v1021 = vsel %vm787, 0.0, %v1000
        %v1022 = vsel %vm786, 0.0, %v985
        %v1023 = vsel %vm787, 0.0, %v1001
        %v1024 = vsel %vm786, 0.0, %v986
        %v1025 = vsel %vm787, 0.0, %v1002
        %v1026 = vsel %vm786, 0.0, %v987
        %v1027 = vsel %vm787, 0.0, %v1003
        %v1028 = vsel %vm786, 0.0, %v988
        %v1029 = vsel %vm787, 0.0, %v1004
        %v1030 = vsel %vm786, 0.0, %v989
        %v1031 = vsel %vm787, 0.0, %v1005
        %v1032 = vsel %vm786, 0.0, %v990
        %v1033 = vsel %vm787, 0.0, %v1006
        %v1034 = vsel %vm786, 0.0, %v991
        %v1035 = vsel %vm787, 0.0, %v1007
        %v1036 = vsel %vm786, 0.0, %v992
        %v1037 = vsel %vm787, 0.0, %v1008
        %v1038 = vsel %vm786, 0.0, %v993
        %v1039 = vsel %vm787, 0.0, %v1009
        %v1040 = vsel %vm786, 0.0, %v994
        %v1041 = vsel %vm787, 0.0, %v1010
        %v1042 = vsel %vm786, 0.0, %v995
        %v1043 = vsel %vm787, 0.0, %v1011
        %s1044 = scalar_lea.vmem [#allocation2], 32
        %v1045 = vld [vmem:[%s1044] sm:$0xff]
        %v1046 = vld [vmem:[%s1044 + $0x8] sm:$0xff]
        %v1047 = vld [vmem:[%s1044 + $0x10] sm:$0xff]
        %v1048 = vld [vmem:[%s1044 + $0x18] sm:$0xff]
        %v1049 = vld [vmem:[%s1044 + $0x20] sm:$0xff]
        %v1050 = vld [vmem:[%s1044 + $0x28] sm:$0xff]
        %v1051 = vld [vmem:[%s1044 + $0x30] sm:$0xff]
        %v1052 = vld [vmem:[%s1044 + $0x38] sm:$0xff]
        %v1053 = vld [vmem:[%s1044 + $0x40] sm:$0xff]
        %v1054 = vld [vmem:[%s1044 + $0x48] sm:$0xff]
        %v1055 = vld [vmem:[%s1044 + $0x50] sm:$0xff]
        %v1056 = vld [vmem:[%s1044 + $0x58] sm:$0xff]
        %v1057 = vld [vmem:[%s1044 + $0x60] sm:$0xff]
        %v1058 = vld [vmem:[%s1044 + $0x68] sm:$0xff]
        %v1059 = vld [vmem:[%s1044 + $0x70] sm:$0xff]
        %v1060 = vld [vmem:[%s1044 + $0x78] sm:$0xff]
        %v1061 = vld [vmem:[%s1044 + $0x80] sm:$0xff]
        %v1062 = vld [vmem:[%s1044 + $0x88] sm:$0xff]
        %v1063 = vld [vmem:[%s1044 + $0x90] sm:$0xff]
        %v1064 = vld [vmem:[%s1044 + $0x98] sm:$0xff]
        %v1065 = vld [vmem:[%s1044 + $0xa0] sm:$0xff]
        %v1066 = vld [vmem:[%s1044 + $0xa8] sm:$0xff]
        %v1067 = vld [vmem:[%s1044 + $0xb0] sm:$0xff]
        %v1068 = vld [vmem:[%s1044 + $0xb8] sm:$0xff]
        %v1069 = vld [vmem:[%s1044 + $0xc0] sm:$0xff]
        %v1070 = vld [vmem:[%s1044 + $0xc8] sm:$0xff]
        %v1071 = vld [vmem:[%s1044 + $0xd0] sm:$0xff]
        %v1072 = vld [vmem:[%s1044 + $0xd8] sm:$0xff]
        %v1073 = vld [vmem:[%s1044 + $0xe0] sm:$0xff]
        %v1074 = vld [vmem:[%s1044 + $0xe8] sm:$0xff]
        %v1075 = vld [vmem:[%s1044 + $0xf0] sm:$0xff]
        %v1076 = vld [vmem:[%s1044 + $0xf8] sm:$0xff]
        %v1077 = vrot.slane %v1045, 7
        %v1078 = vrot.slane %v1047, 7
        %v1079 = vrot.slane %v1049, 7
        %v1080 = vrot.slane %v1051, 7
        %v1081 = vrot.slane %v1053, 7
        %v1082 = vrot.slane %v1055, 7
        %v1083 = vrot.slane %v1057, 7
        %v1084 = vrot.slane %v1059, 7
        %v1085 = vrot.slane %v1061, 7
        %v1086 = vrot.slane %v1063, 7
        %v1087 = vrot.slane %v1065, 7
        %v1088 = vrot.slane %v1067, 7
        %v1089 = vrot.slane %v1069, 7
        %v1090 = vrot.slane %v1071, 7
        %v1091 = vrot.slane %v1073, 7
        %v1092 = vrot.slane %v1075, 7
        %v1093 = vrot.slane %v1046, 7
        %v1094 = vrot.slane %v1048, 7
        %v1095 = vrot.slane %v1050, 7
        %v1096 = vrot.slane %v1052, 7
        %v1097 = vrot.slane %v1054, 7
        %v1098 = vrot.slane %v1056, 7
        %v1099 = vrot.slane %v1058, 7
        %v1100 = vrot.slane %v1060, 7
        %v1101 = vrot.slane %v1062, 7
        %v1102 = vrot.slane %v1064, 7
        %v1103 = vrot.slane %v1066, 7
        %v1104 = vrot.slane %v1068, 7
        %v1105 = vrot.slane %v1070, 7
        %v1106 = vrot.slane %v1072, 7
        %v1107 = vrot.slane %v1074, 7
        %v1108 = vrot.slane %v1076, 7
        %v1109 = vsel %vm654, %v1077, %v1093
        %v1110 = vsel %vm654, %v1078, %v1094
        %v1111 = vsel %vm654, %v1079, %v1095
        %v1112 = vsel %vm654, %v1080, %v1096
        %v1113 = vsel %vm654, %v1081, %v1097
        %v1114 = vsel %vm654, %v1082, %v1098
        %v1115 = vsel %vm654, %v1083, %v1099
        %v1116 = vsel %vm654, %v1084, %v1100
        %v1117 = vsel %vm654, %v1085, %v1101
        %v1118 = vsel %vm654, %v1086, %v1102
        %v1119 = vsel %vm654, %v1087, %v1103
        %v1120 = vsel %vm654, %v1088, %v1104
        %v1121 = vsel %vm654, %v1089, %v1105
        %v1122 = vsel %vm654, %v1090, %v1106
        %v1123 = vsel %vm654, %v1091, %v1107
        %v1124 = vsel %vm654, %v1092, %v1108
        %v1125 = vsel %vm654, %v1093, %v1077
        %v1126 = vsel %vm654, %v1094, %v1078
        %v1127 = vsel %vm654, %v1095, %v1079
        %v1128 = vsel %vm654, %v1096, %v1080
        %v1129 = vsel %vm654, %v1097, %v1081
        %v1130 = vsel %vm654, %v1098, %v1082
        %v1131 = vsel %vm654, %v1099, %v1083
        %v1132 = vsel %vm654, %v1100, %v1084
        %v1133 = vsel %vm654, %v1101, %v1085
        %v1134 = vsel %vm654, %v1102, %v1086
        %v1135 = vsel %vm654, %v1103, %v1087
        %v1136 = vsel %vm654, %v1104, %v1088
        %v1137 = vsel %vm654, %v1105, %v1089
        %v1138 = vsel %vm654, %v1106, %v1090
        %v1139 = vsel %vm654, %v1107, %v1091
        %v1140 = vsel %vm654, %v1108, %v1092
        %v1141 = vsel %vm687, 0.0, %v1125
        %v1142 = vsel %vm688, 0.0, %v1109
        %v1143 = vsel %vm687, 0.0, %v1126
        %v1144 = vsel %vm688, 0.0, %v1110
        %v1145 = vsel %vm687, 0.0, %v1127
        %v1146 = vsel %vm688, 0.0, %v1111
        %v1147 = vsel %vm687, 0.0, %v1128
        %v1148 = vsel %vm688, 0.0, %v1112
        %v1149 = vsel %vm687, 0.0, %v1129
        %v1150 = vsel %vm688, 0.0, %v1113
        %v1151 = vsel %vm687, 0.0, %v1130
        %v1152 = vsel %vm688, 0.0, %v1114
        %v1153 = vsel %vm687, 0.0, %v1131
        %v1154 = vsel %vm688, 0.0, %v1115
        %v1155 = vsel %vm687, 0.0, %v1132
        %v1156 = vsel %vm688, 0.0, %v1116
        %v1157 = vsel %vm687, 0.0, %v1133
        %v1158 = vsel %vm688, 0.0, %v1117
        %v1159 = vsel %vm687, 0.0, %v1134
        %v1160 = vsel %vm688, 0.0, %v1118
        %v1161 = vsel %vm687, 0.0, %v1135
        %v1162 = vsel %vm688, 0.0, %v1119
        %v1163 = vsel %vm687, 0.0, %v1136
        %v1164 = vsel %vm688, 0.0, %v1120
        %v1165 = vsel %vm687, 0.0, %v1137
        %v1166 = vsel %vm688, 0.0, %v1121
        %v1167 = vsel %vm687, 0.0, %v1138
        %v1168 = vsel %vm688, 0.0, %v1122
        %v1169 = vsel %vm687, 0.0, %v1139
        %v1170 = vsel %vm688, 0.0, %v1123
        %v1171 = vsel %vm687, 0.0, %v1140
        %v1172 = vsel %vm688, 0.0, %v1124
        %v1173 = vrot.slane %v1045, 1
        %v1174 = vrot.slane %v1047, 1
        %v1175 = vrot.slane %v1049, 1
        %v1176 = vrot.slane %v1051, 1
        %v1177 = vrot.slane %v1053, 1
        %v1178 = vrot.slane %v1055, 1
        %v1179 = vrot.slane %v1057, 1
        %v1180 = vrot.slane %v1059, 1
        %v1181 = vrot.slane %v1061, 1
        %v1182 = vrot.slane %v1063, 1
        %v1183 = vrot.slane %v1065, 1
        %v1184 = vrot.slane %v1067, 1
        %v1185 = vrot.slane %v1069, 1
        %v1186 = vrot.slane %v1071, 1
        %v1187 = vrot.slane %v1073, 1
        %v1188 = vrot.slane %v1075, 1
        %v1189 = vrot.slane %v1046, 1
        %v1190 = vrot.slane %v1048, 1
        %v1191 = vrot.slane %v1050, 1
        %v1192 = vrot.slane %v1052, 1
        %v1193 = vrot.slane %v1054, 1
        %v1194 = vrot.slane %v1056, 1
        %v1195 = vrot.slane %v1058, 1
        %v1196 = vrot.slane %v1060, 1
        %v1197 = vrot.slane %v1062, 1
        %v1198 = vrot.slane %v1064, 1
        %v1199 = vrot.slane %v1066, 1
        %v1200 = vrot.slane %v1068, 1
        %v1201 = vrot.slane %v1070, 1
        %v1202 = vrot.slane %v1072, 1
        %v1203 = vrot.slane %v1074, 1
        %v1204 = vrot.slane %v1076, 1
        %v1205 = vsel %vm753, %v1173, %v1189
        %v1206 = vsel %vm753, %v1174, %v1190
        %v1207 = vsel %vm753, %v1175, %v1191
        %v1208 = vsel %vm753, %v1176, %v1192
        %v1209 = vsel %vm753, %v1177, %v1193
        %v1210 = vsel %vm753, %v1178, %v1194
        %v1211 = vsel %vm753, %v1179, %v1195
        %v1212 = vsel %vm753, %v1180, %v1196
        %v1213 = vsel %vm753, %v1181, %v1197
        %v1214 = vsel %vm753, %v1182, %v1198
        %v1215 = vsel %vm753, %v1183, %v1199
        %v1216 = vsel %vm753, %v1184, %v1200
        %v1217 = vsel %vm753, %v1185, %v1201
        %v1218 = vsel %vm753, %v1186, %v1202
        %v1219 = vsel %vm753, %v1187, %v1203
        %v1220 = vsel %vm753, %v1188, %v1204
        %v1221 = vsel %vm753, %v1189, %v1173
        %v1222 = vsel %vm753, %v1190, %v1174
        %v1223 = vsel %vm753, %v1191, %v1175
        %v1224 = vsel %vm753, %v1192, %v1176
        %v1225 = vsel %vm753, %v1193, %v1177
        %v1226 = vsel %vm753, %v1194, %v1178
        %v1227 = vsel %vm753, %v1195, %v1179
        %v1228 = vsel %vm753, %v1196, %v1180
        %v1229 = vsel %vm753, %v1197, %v1181
        %v1230 = vsel %vm753, %v1198, %v1182
        %v1231 = vsel %vm753, %v1199, %v1183
        %v1232 = vsel %vm753, %v1200, %v1184
        %v1233 = vsel %vm753, %v1201, %v1185
        %v1234 = vsel %vm753, %v1202, %v1186
        %v1235 = vsel %vm753, %v1203, %v1187
        %v1236 = vsel %vm753, %v1204, %v1188
        %v1237 = vsel %vm786, 0.0, %v1205
        %v1238 = vsel %vm787, 0.0, %v1221
        %v1239 = vsel %vm786, 0.0, %v1206
        %v1240 = vsel %vm787, 0.0, %v1222
        %v1241 = vsel %vm786, 0.0, %v1207
        %v1242 = vsel %vm787, 0.0, %v1223
        %v1243 = vsel %vm786, 0.0, %v1208
        %v1244 = vsel %vm787, 0.0, %v1224
        %v1245 = vsel %vm786, 0.0, %v1209
        %v1246 = vsel %vm787, 0.0, %v1225
        %v1247 = vsel %vm786, 0.0, %v1210
        %v1248 = vsel %vm787, 0.0, %v1226
        %v1249 = vsel %vm786, 0.0, %v1211
        %v1250 = vsel %vm787, 0.0, %v1227
        %v1251 = vsel %vm786, 0.0, %v1212
        %v1252 = vsel %vm787, 0.0, %v1228
        %v1253 = vsel %vm786, 0.0, %v1213
        %v1254 = vsel %vm787, 0.0, %v1229
        %v1255 = vsel %vm786, 0.0, %v1214
        %v1256 = vsel %vm787, 0.0, %v1230
        %v1257 = vsel %vm786, 0.0, %v1215
        %v1258 = vsel %vm787, 0.0, %v1231
        %v1259 = vsel %vm786, 0.0, %v1216
        %v1260 = vsel %vm787, 0.0, %v1232
        %v1261 = vsel %vm786, 0.0, %v1217
        %v1262 = vsel %vm787, 0.0, %v1233
        %v1263 = vsel %vm786, 0.0, %v1218
        %v1264 = vsel %vm787, 0.0, %v1234
        %v1265 = vsel %vm786, 0.0, %v1219
        %v1266 = vsel %vm787, 0.0, %v1235
        %v1267 = vsel %vm786, 0.0, %v1220
        %v1268 = vsel %vm787, 0.0, %v1236
        %1301 = vrot.lane.b32.xlu0 %v590, 3
        %v1302 = vpop.permute.xlu0 %1301
        %1303 = vrot.lane.b32.xlu0 %v591, 3
        %v1304 = vpop.permute.xlu0 %1303
        %1305 = vrot.lane.b32.xlu0 %v592, 3
        %v1306 = vpop.permute.xlu0 %1305
        %1307 = vrot.lane.b32.xlu0 %v593, 3
        %v1308 = vpop.permute.xlu0 %1307
        %1309 = vrot.lane.b32.xlu0 %v594, 3
        %v1310 = vpop.permute.xlu0 %1309
        %1311 = vrot.lane.b32.xlu0 %v595, 3
        %v1312 = vpop.permute.xlu0 %1311
        %1313 = vrot.lane.b32.xlu0 %v596, 3
        %v1314 = vpop.permute.xlu0 %1313
        %1315 = vrot.lane.b32.xlu0 %v597, 3
        %v1316 = vpop.permute.xlu0 %1315
        %1317 = vrot.lane.b32.xlu0 %v598, 3
        %v1318 = vpop.permute.xlu0 %1317
        %1319 = vrot.lane.b32.xlu0 %v599, 3
        %v1320 = vpop.permute.xlu0 %1319
        %1321 = vrot.lane.b32.xlu0 %v600, 3
        %v1322 = vpop.permute.xlu0 %1321
        %1323 = vrot.lane.b32.xlu0 %v601, 3
        %v1324 = vpop.permute.xlu0 %1323
        %1325 = vrot.lane.b32.xlu0 %v602, 3
        %v1326 = vpop.permute.xlu0 %1325
        %1327 = vrot.lane.b32.xlu0 %v603, 3
        %v1328 = vpop.permute.xlu0 %1327
        %1329 = vrot.lane.b32.xlu0 %v604, 3
        %v1330 = vpop.permute.xlu0 %1329
        %1331 = vrot.lane.b32.xlu0 %v605, 3
        %v1332 = vpop.permute.xlu0 %1331
        %1333 = vrot.lane.b32.xlu0 %v606, 3
        %v1334 = vpop.permute.xlu0 %1333
        %1335 = vrot.lane.b32.xlu0 %v607, 3
        %v1336 = vpop.permute.xlu0 %1335
        %1337 = vrot.lane.b32.xlu0 %v608, 3
        %v1338 = vpop.permute.xlu0 %1337
        %1339 = vrot.lane.b32.xlu0 %v609, 3
        %v1340 = vpop.permute.xlu0 %1339
        %1341 = vrot.lane.b32.xlu0 %v610, 3
        %v1342 = vpop.permute.xlu0 %1341
        %1343 = vrot.lane.b32.xlu0 %v611, 3
        %v1344 = vpop.permute.xlu0 %1343
        %1345 = vrot.lane.b32.xlu0 %v612, 3
        %v1346 = vpop.permute.xlu0 %1345
        %1347 = vrot.lane.b32.xlu0 %v613, 3
        %v1348 = vpop.permute.xlu0 %1347
        %1349 = vrot.lane.b32.xlu0 %v614, 3
        %v1350 = vpop.permute.xlu0 %1349
        %1351 = vrot.lane.b32.xlu0 %v615, 3
        %v1352 = vpop.permute.xlu0 %1351
        %1353 = vrot.lane.b32.xlu0 %v616, 3
        %v1354 = vpop.permute.xlu0 %1353
        %1355 = vrot.lane.b32.xlu0 %v617, 3
        %v1356 = vpop.permute.xlu0 %1355
        %1357 = vrot.lane.b32.xlu0 %v618, 3
        %v1358 = vpop.permute.xlu0 %1357
        %1359 = vrot.lane.b32.xlu0 %v619, 3
        %v1360 = vpop.permute.xlu0 %1359
        %1361 = vrot.lane.b32.xlu0 %v620, 3
        %v1362 = vpop.permute.xlu0 %1361
        %1363 = vrot.lane.b32.xlu0 %v621, 3
        %v1364 = vpop.permute.xlu0 %1363
        %1429 = vrot.lane.b32.xlu0 %v788, 6
        %v1430 = vpop.permute.xlu0 %1429
        %1431 = vrot.lane.b32.xlu0 %v789, 6
        %v1432 = vpop.permute.xlu0 %1431
        %1433 = vrot.lane.b32.xlu0 %v790, 6
        %v1434 = vpop.permute.xlu0 %1433
        %1435 = vrot.lane.b32.xlu0 %v791, 6
        %v1436 = vpop.permute.xlu0 %1435
        %1437 = vrot.lane.b32.xlu0 %v792, 6
        %v1438 = vpop.permute.xlu0 %1437
        %1439 = vrot.lane.b32.xlu0 %v793, 6
        %v1440 = vpop.permute.xlu0 %1439
        %1441 = vrot.lane.b32.xlu0 %v794, 6
        %v1442 = vpop.permute.xlu0 %1441
        %1443 = vrot.lane.b32.xlu0 %v795, 6
        %v1444 = vpop.permute.xlu0 %1443
        %1445 = vrot.lane.b32.xlu0 %v796, 6
        %v1446 = vpop.permute.xlu0 %1445
        %1447 = vrot.lane.b32.xlu0 %v797, 6
        %v1448 = vpop.permute.xlu0 %1447
        %1449 = vrot.lane.b32.xlu0 %v798, 6
        %v1450 = vpop.permute.xlu0 %1449
        %1451 = vrot.lane.b32.xlu0 %v799, 6
        %v1452 = vpop.permute.xlu0 %1451
        %1453 = vrot.lane.b32.xlu0 %v800, 6
        %v1454 = vpop.permute.xlu0 %1453
        %1455 = vrot.lane.b32.xlu0 %v801, 6
        %v1456 = vpop.permute.xlu0 %1455
        %1457 = vrot.lane.b32.xlu0 %v802, 6
        %v1458 = vpop.permute.xlu0 %1457
        %1459 = vrot.lane.b32.xlu0 %v803, 6
        %v1460 = vpop.permute.xlu0 %1459
        %1461 = vrot.lane.b32.xlu0 %v804, 6
        %v1462 = vpop.permute.xlu0 %1461
        %1463 = vrot.lane.b32.xlu0 %v805, 6
        %v1464 = vpop.permute.xlu0 %1463
        %1465 = vrot.lane.b32.xlu0 %v806, 6
        %v1466 = vpop.permute.xlu0 %1465
        %1467 = vrot.lane.b32.xlu0 %v807, 6
        %v1468 = vpop.permute.xlu0 %1467
        %1469 = vrot.lane.b32.xlu0 %v808, 6
        %v1470 = vpop.permute.xlu0 %1469
        %1471 = vrot.lane.b32.xlu0 %v809, 6
        %v1472 = vpop.permute.xlu0 %1471
        %1473 = vrot.lane.b32.xlu0 %v810, 6
        %v1474 = vpop.permute.xlu0 %1473
        %1475 = vrot.lane.b32.xlu0 %v811, 6
        %v1476 = vpop.permute.xlu0 %1475
        %1477 = vrot.lane.b32.xlu0 %v812, 6
        %v1478 = vpop.permute.xlu0 %1477
        %1479 = vrot.lane.b32.xlu0 %v813, 6
        %v1480 = vpop.permute.xlu0 %1479
        %1481 = vrot.lane.b32.xlu0 %v814, 6
        %v1482 = vpop.permute.xlu0 %1481
        %1483 = vrot.lane.b32.xlu0 %v815, 6
        %v1484 = vpop.permute.xlu0 %1483
        %1485 = vrot.lane.b32.xlu0 %v816, 6
        %v1486 = vpop.permute.xlu0 %1485
        %1487 = vrot.lane.b32.xlu0 %v817, 6
        %v1488 = vpop.permute.xlu0 %1487
        %1489 = vrot.lane.b32.xlu0 %v818, 6
        %v1490 = vpop.permute.xlu0 %1489
        %1491 = vrot.lane.b32.xlu0 %v819, 6
        %v1492 = vpop.permute.xlu0 %1491
        %1557 = vrot.lane.b32.xlu0 %v916, 9
        %v1558 = vpop.permute.xlu0 %1557
        %1559 = vrot.lane.b32.xlu0 %v917, 9
        %v1560 = vpop.permute.xlu0 %1559
        %1561 = vrot.lane.b32.xlu0 %v918, 9
        %v1562 = vpop.permute.xlu0 %1561
        %1563 = vrot.lane.b32.xlu0 %v919, 9
        %v1564 = vpop.permute.xlu0 %1563
        %1565 = vrot.lane.b32.xlu0 %v920, 9
        %v1566 = vpop.permute.xlu0 %1565
        %1567 = vrot.lane.b32.xlu0 %v921, 9
        %v1568 = vpop.permute.xlu0 %1567
        %1569 = vrot.lane.b32.xlu0 %v922, 9
        %v1570 = vpop.permute.xlu0 %1569
        %1571 = vrot.lane.b32.xlu0 %v923, 9
        %v1572 = vpop.permute.xlu0 %1571
        %1573 = vrot.lane.b32.xlu0 %v924, 9
        %v1574 = vpop.permute.xlu0 %1573
        %1575 = vrot.lane.b32.xlu0 %v925, 9
        %v1576 = vpop.permute.xlu0 %1575
        %1577 = vrot.lane.b32.xlu0 %v926, 9
        %v1578 = vpop.permute.xlu0 %1577
        %1579 = vrot.lane.b32.xlu0 %v927, 9
        %v1580 = vpop.permute.xlu0 %1579
        %1581 = vrot.lane.b32.xlu0 %v928, 9
        %v1582 = vpop.permute.xlu0 %1581
        %1583 = vrot.lane.b32.xlu0 %v929, 9
        %v1584 = vpop.permute.xlu0 %1583
        %1585 = vrot.lane.b32.xlu0 %v930, 9
        %v1586 = vpop.permute.xlu0 %1585
        %1587 = vrot.lane.b32.xlu0 %v931, 9
        %v1588 = vpop.permute.xlu0 %1587
        %1589 = vrot.lane.b32.xlu0 %v932, 9
        %v1590 = vpop.permute.xlu0 %1589
        %1591 = vrot.lane.b32.xlu0 %v933, 9
        %v1592 = vpop.permute.xlu0 %1591
        %1593 = vrot.lane.b32.xlu0 %v934, 9
        %v1594 = vpop.permute.xlu0 %1593
        %1595 = vrot.lane.b32.xlu0 %v935, 9
        %v1596 = vpop.permute.xlu0 %1595
        %1597 = vrot.lane.b32.xlu0 %v936, 9
        %v1598 = vpop.permute.xlu0 %1597
        %1599 = vrot.lane.b32.xlu0 %v937, 9
        %v1600 = vpop.permute.xlu0 %1599
        %1601 = vrot.lane.b32.xlu0 %v938, 9
        %v1602 = vpop.permute.xlu0 %1601
        %1603 = vrot.lane.b32.xlu0 %v939, 9
        %v1604 = vpop.permute.xlu0 %1603
        %1605 = vrot.lane.b32.xlu0 %v940, 9
        %v1606 = vpop.permute.xlu0 %1605
        %1607 = vrot.lane.b32.xlu0 %v941, 9
        %v1608 = vpop.permute.xlu0 %1607
        %1609 = vrot.lane.b32.xlu0 %v942, 9
        %v1610 = vpop.permute.xlu0 %1609
        %1611 = vrot.lane.b32.xlu0 %v943, 9
        %v1612 = vpop.permute.xlu0 %1611
        %1613 = vrot.lane.b32.xlu0 %v944, 9
        %v1614 = vpop.permute.xlu0 %1613
        %1615 = vrot.lane.b32.xlu0 %v945, 9
        %v1616 = vpop.permute.xlu0 %1615
        %1617 = vrot.lane.b32.xlu0 %v946, 9
        %v1618 = vpop.permute.xlu0 %1617
        %1619 = vrot.lane.b32.xlu0 %v947, 9
        %v1620 = vpop.permute.xlu0 %1619
        %1685 = vrot.lane.b32.xlu0 %v820, 12
        %v1686 = vpop.permute.xlu0 %1685
        %1687 = vrot.lane.b32.xlu0 %v821, 12
        %v1688 = vpop.permute.xlu0 %1687
        %1689 = vrot.lane.b32.xlu0 %v822, 12
        %v1690 = vpop.permute.xlu0 %1689
        %1691 = vrot.lane.b32.xlu0 %v823, 12
        %v1692 = vpop.permute.xlu0 %1691
        %1693 = vrot.lane.b32.xlu0 %v824, 12
        %v1694 = vpop.permute.xlu0 %1693
        %1695 = vrot.lane.b32.xlu0 %v825, 12
        %v1696 = vpop.permute.xlu0 %1695
        %1697 = vrot.lane.b32.xlu0 %v826, 12
        %v1698 = vpop.permute.xlu0 %1697
        %1699 = vrot.lane.b32.xlu0 %v827, 12
        %v1700 = vpop.permute.xlu0 %1699
        %1701 = vrot.lane.b32.xlu0 %v828, 12
        %v1702 = vpop.permute.xlu0 %1701
        %1703 = vrot.lane.b32.xlu0 %v829, 12
        %v1704 = vpop.permute.xlu0 %1703
        %1705 = vrot.lane.b32.xlu0 %v830, 12
        %v1706 = vpop.permute.xlu0 %1705
        %1707 = vrot.lane.b32.xlu0 %v831, 12
        %v1708 = vpop.permute.xlu0 %1707
        %1709 = vrot.lane.b32.xlu0 %v832, 12
        %v1710 = vpop.permute.xlu0 %1709
        %1711 = vrot.lane.b32.xlu0 %v833, 12
        %v1712 = vpop.permute.xlu0 %1711
        %1713 = vrot.lane.b32.xlu0 %v834, 12
        %v1714 = vpop.permute.xlu0 %1713
        %1715 = vrot.lane.b32.xlu0 %v835, 12
        %v1716 = vpop.permute.xlu0 %1715
        %1717 = vrot.lane.b32.xlu0 %v836, 12
        %v1718 = vpop.permute.xlu0 %1717
        %1719 = vrot.lane.b32.xlu0 %v837, 12
        %v1720 = vpop.permute.xlu0 %1719
        %1721 = vrot.lane.b32.xlu0 %v838, 12
        %v1722 = vpop.permute.xlu0 %1721
        %1723 = vrot.lane.b32.xlu0 %v839, 12
        %v1724 = vpop.permute.xlu0 %1723
        %1725 = vrot.lane.b32.xlu0 %v840, 12
        %v1726 = vpop.permute.xlu0 %1725
        %1727 = vrot.lane.b32.xlu0 %v841, 12
        %v1728 = vpop.permute.xlu0 %1727
        %1729 = vrot.lane.b32.xlu0 %v842, 12
        %v1730 = vpop.permute.xlu0 %1729
        %1731 = vrot.lane.b32.xlu0 %v843, 12
        %v1732 = vpop.permute.xlu0 %1731
        %1733 = vrot.lane.b32.xlu0 %v844, 12
        %v1734 = vpop.permute.xlu0 %1733
        %1735 = vrot.lane.b32.xlu0 %v845, 12
        %v1736 = vpop.permute.xlu0 %1735
        %1737 = vrot.lane.b32.xlu0 %v846, 12
        %v1738 = vpop.permute.xlu0 %1737
        %1739 = vrot.lane.b32.xlu0 %v847, 12
        %v1740 = vpop.permute.xlu0 %1739
        %1741 = vrot.lane.b32.xlu0 %v848, 12
        %v1742 = vpop.permute.xlu0 %1741
        %1743 = vrot.lane.b32.xlu0 %v849, 12
        %v1744 = vpop.permute.xlu0 %1743
        %1745 = vrot.lane.b32.xlu0 %v850, 12
        %v1746 = vpop.permute.xlu0 %1745
        %1747 = vrot.lane.b32.xlu0 %v851, 12
        %v1748 = vpop.permute.xlu0 %1747
        %1813 = vrot.lane.b32.xlu0 %v1012, 15
        %v1814 = vpop.permute.xlu0 %1813
        %1815 = vrot.lane.b32.xlu0 %v1013, 15
        %v1816 = vpop.permute.xlu0 %1815
        %1817 = vrot.lane.b32.xlu0 %v1014, 15
        %v1818 = vpop.permute.xlu0 %1817
        %1819 = vrot.lane.b32.xlu0 %v1015, 15
        %v1820 = vpop.permute.xlu0 %1819
        %1821 = vrot.lane.b32.xlu0 %v1016, 15
        %v1822 = vpop.permute.xlu0 %1821
        %1823 = vrot.lane.b32.xlu0 %v1017, 15
        %v1824 = vpop.permute.xlu0 %1823
        %1825 = vrot.lane.b32.xlu0 %v1018, 15
        %v1826 = vpop.permute.xlu0 %1825
        %1827 = vrot.lane.b32.xlu0 %v1019, 15
        %v1828 = vpop.permute.xlu0 %1827
        %1829 = vrot.lane.b32.xlu0 %v1020, 15
        %v1830 = vpop.permute.xlu0 %1829
        %1831 = vrot.lane.b32.xlu0 %v1021, 15
        %v1832 = vpop.permute.xlu0 %1831
        %1833 = vrot.lane.b32.xlu0 %v1022, 15
        %v1834 = vpop.permute.xlu0 %1833
        %1835 = vrot.lane.b32.xlu0 %v1023, 15
        %v1836 = vpop.permute.xlu0 %1835
        %1837 = vrot.lane.b32.xlu0 %v1024, 15
        %v1838 = vpop.permute.xlu0 %1837
        %1839 = vrot.lane.b32.xlu0 %v1025, 15
        %v1840 = vpop.permute.xlu0 %1839
        %1841 = vrot.lane.b32.xlu0 %v1026, 15
        %v1842 = vpop.permute.xlu0 %1841
        %1843 = vrot.lane.b32.xlu0 %v1027, 15
        %v1844 = vpop.permute.xlu0 %1843
        %1845 = vrot.lane.b32.xlu0 %v1028, 15
        %v1846 = vpop.permute.xlu0 %1845
        %1847 = vrot.lane.b32.xlu0 %v1029, 15
        %v1848 = vpop.permute.xlu0 %1847
        %1849 = vrot.lane.b32.xlu0 %v1030, 15
        %v1850 = vpop.permute.xlu0 %1849
        %1851 = vrot.lane.b32.xlu0 %v1031, 15
        %v1852 = vpop.permute.xlu0 %1851
        %1853 = vrot.lane.b32.xlu0 %v1032, 15
        %v1854 = vpop.permute.xlu0 %1853
        %1855 = vrot.lane.b32.xlu0 %v1033, 15
        %v1856 = vpop.permute.xlu0 %1855
        %1857 = vrot.lane.b32.xlu0 %v1034, 15
        %v1858 = vpop.permute.xlu0 %1857
        %1859 = vrot.lane.b32.xlu0 %v1035, 15
        %v1860 = vpop.permute.xlu0 %1859
        %1861 = vrot.lane.b32.xlu0 %v1036, 15
        %v1862 = vpop.permute.xlu0 %1861
        %1863 = vrot.lane.b32.xlu0 %v1037, 15
        %v1864 = vpop.permute.xlu0 %1863
        %1865 = vrot.lane.b32.xlu0 %v1038, 15
        %v1866 = vpop.permute.xlu0 %1865
        %1867 = vrot.lane.b32.xlu0 %v1039, 15
        %v1868 = vpop.permute.xlu0 %1867
        %1869 = vrot.lane.b32.xlu0 %v1040, 15
        %v1870 = vpop.permute.xlu0 %1869
        %1871 = vrot.lane.b32.xlu0 %v1041, 15
        %v1872 = vpop.permute.xlu0 %1871
        %1873 = vrot.lane.b32.xlu0 %v1042, 15
        %v1874 = vpop.permute.xlu0 %1873
        %1875 = vrot.lane.b32.xlu0 %v1043, 15
        %v1876 = vpop.permute.xlu0 %1875
        %1941 = vrot.lane.b32.xlu0 %v1141, 18
        %v1942 = vpop.permute.xlu0 %1941
        %1943 = vrot.lane.b32.xlu0 %v1142, 18
        %v1944 = vpop.permute.xlu0 %1943
        %1945 = vrot.lane.b32.xlu0 %v1143, 18
        %v1946 = vpop.permute.xlu0 %1945
        %1947 = vrot.lane.b32.xlu0 %v1144, 18
        %v1948 = vpop.permute.xlu0 %1947
        %1949 = vrot.lane.b32.xlu0 %v1145, 18
        %v1950 = vpop.permute.xlu0 %1949
        %1951 = vrot.lane.b32.xlu0 %v1146, 18
        %v1952 = vpop.permute.xlu0 %1951
        %1953 = vrot.lane.b32.xlu0 %v1147, 18
        %v1954 = vpop.permute.xlu0 %1953
        %1955 = vrot.lane.b32.xlu0 %v1148, 18
        %v1956 = vpop.permute.xlu0 %1955
        %1957 = vrot.lane.b32.xlu0 %v1149, 18
        %v1958 = vpop.permute.xlu0 %1957
        %1959 = vrot.lane.b32.xlu0 %v1150, 18
        %v1960 = vpop.permute.xlu0 %1959
        %1961 = vrot.lane.b32.xlu0 %v1151, 18
        %v1962 = vpop.permute.xlu0 %1961
        %1963 = vrot.lane.b32.xlu0 %v1152, 18
        %v1964 = vpop.permute.xlu0 %1963
        %1965 = vrot.lane.b32.xlu0 %v1153, 18
        %v1966 = vpop.permute.xlu0 %1965
        %1967 = vrot.lane.b32.xlu0 %v1154, 18
        %v1968 = vpop.permute.xlu0 %1967
        %1969 = vrot.lane.b32.xlu0 %v1155, 18
        %v1970 = vpop.permute.xlu0 %1969
        %1971 = vrot.lane.b32.xlu0 %v1156, 18
        %v1972 = vpop.permute.xlu0 %1971
        %1973 = vrot.lane.b32.xlu0 %v1157, 18
        %v1974 = vpop.permute.xlu0 %1973
        %1975 = vrot.lane.b32.xlu0 %v1158, 18
        %v1976 = vpop.permute.xlu0 %1975
        %1977 = vrot.lane.b32.xlu0 %v1159, 18
        %v1978 = vpop.permute.xlu0 %1977
        %1979 = vrot.lane.b32.xlu0 %v1160, 18
        %v1980 = vpop.permute.xlu0 %1979
        %1981 = vrot.lane.b32.xlu0 %v1161, 18
        %v1982 = vpop.permute.xlu0 %1981
        %1983 = vrot.lane.b32.xlu0 %v1162, 18
        %v1984 = vpop.permute.xlu0 %1983
        %1985 = vrot.lane.b32.xlu0 %v1163, 18
        %v1986 = vpop.permute.xlu0 %1985
        %1987 = vrot.lane.b32.xlu0 %v1164, 18
        %v1988 = vpop.permute.xlu0 %1987
        %1989 = vrot.lane.b32.xlu0 %v1165, 18
        %v1990 = vpop.permute.xlu0 %1989
        %1991 = vrot.lane.b32.xlu0 %v1166, 18
        %v1992 = vpop.permute.xlu0 %1991
        %1993 = vrot.lane.b32.xlu0 %v1167, 18
        %v1994 = vpop.permute.xlu0 %1993
        %1995 = vrot.lane.b32.xlu0 %v1168, 18
        %v1996 = vpop.permute.xlu0 %1995
        %1997 = vrot.lane.b32.xlu0 %v1169, 18
        %v1998 = vpop.permute.xlu0 %1997
        %1999 = vrot.lane.b32.xlu0 %v1170, 18
        %v2000 = vpop.permute.xlu0 %1999
        %2001 = vrot.lane.b32.xlu0 %v1171, 18
        %v2002 = vpop.permute.xlu0 %2001
        %2003 = vrot.lane.b32.xlu0 %v1172, 18
        %v2004 = vpop.permute.xlu0 %2003
        %2069 = vrot.lane.b32.xlu0 %v1045, 21
        %v2070 = vpop.permute.xlu0 %2069
        %2071 = vrot.lane.b32.xlu0 %v1046, 21
        %v2072 = vpop.permute.xlu0 %2071
        %2073 = vrot.lane.b32.xlu0 %v1047, 21
        %v2074 = vpop.permute.xlu0 %2073
        %2075 = vrot.lane.b32.xlu0 %v1048, 21
        %v2076 = vpop.permute.xlu0 %2075
        %2077 = vrot.lane.b32.xlu0 %v1049, 21
        %v2078 = vpop.permute.xlu0 %2077
        %2079 = vrot.lane.b32.xlu0 %v1050, 21
        %v2080 = vpop.permute.xlu0 %2079
        %2081 = vrot.lane.b32.xlu0 %v1051, 21
        %v2082 = vpop.permute.xlu0 %2081
        %2083 = vrot.lane.b32.xlu0 %v1052, 21
        %v2084 = vpop.permute.xlu0 %2083
        %2085 = vrot.lane.b32.xlu0 %v1053, 21
        %v2086 = vpop.permute.xlu0 %2085
        %2087 = vrot.lane.b32.xlu0 %v1054, 21
        %v2088 = vpop.permute.xlu0 %2087
        %2089 = vrot.lane.b32.xlu0 %v1055, 21
        %v2090 = vpop.permute.xlu0 %2089
        %2091 = vrot.lane.b32.xlu0 %v1056, 21
        %v2092 = vpop.permute.xlu0 %2091
        %2093 = vrot.lane.b32.xlu0 %v1057, 21
        %v2094 = vpop.permute.xlu0 %2093
        %2095 = vrot.lane.b32.xlu0 %v1058, 21
        %v2096 = vpop.permute.xlu0 %2095
        %2097 = vrot.lane.b32.xlu0 %v1059, 21
        %v2098 = vpop.permute.xlu0 %2097
        %2099 = vrot.lane.b32.xlu0 %v1060, 21
        %v2100 = vpop.permute.xlu0 %2099
        %2101 = vrot.lane.b32.xlu0 %v1061, 21
        %v2102 = vpop.permute.xlu0 %2101
        %2103 = vrot.lane.b32.xlu0 %v1062, 21
        %v2104 = vpop.permute.xlu0 %2103
        %2105 = vrot.lane.b32.xlu0 %v1063, 21
        %v2106 = vpop.permute.xlu0 %2105
        %2107 = vrot.lane.b32.xlu0 %v1064, 21
        %v2108 = vpop.permute.xlu0 %2107
        %2109 = vrot.lane.b32.xlu0 %v1065, 21
        %v2110 = vpop.permute.xlu0 %2109
        %2111 = vrot.lane.b32.xlu0 %v1066, 21
        %v2112 = vpop.permute.xlu0 %2111
        %2113 = vrot.lane.b32.xlu0 %v1067, 21
        %v2114 = vpop.permute.xlu0 %2113
        %2115 = vrot.lane.b32.xlu0 %v1068, 21
        %v2116 = vpop.permute.xlu0 %2115
        %2117 = vrot.lane.b32.xlu0 %v1069, 21
        %v2118 = vpop.permute.xlu0 %2117
        %2119 = vrot.lane.b32.xlu0 %v1070, 21
        %v2120 = vpop.permute.xlu0 %2119
        %2121 = vrot.lane.b32.xlu0 %v1071, 21
        %v2122 = vpop.permute.xlu0 %2121
        %2123 = vrot.lane.b32.xlu0 %v1072, 21
        %v2124 = vpop.permute.xlu0 %2123
        %2125 = vrot.lane.b32.xlu0 %v1073, 21
        %v2126 = vpop.permute.xlu0 %2125
        %2127 = vrot.lane.b32.xlu0 %v1074, 21
        %v2128 = vpop.permute.xlu0 %2127
        %2129 = vrot.lane.b32.xlu0 %v1075, 21
        %v2130 = vpop.permute.xlu0 %2129
        %2131 = vrot.lane.b32.xlu0 %v1076, 21
        %v2132 = vpop.permute.xlu0 %2131
        %2197 = vrot.lane.b32.xlu0 %v1237, 24
        %v2198 = vpop.permute.xlu0 %2197
        %2199 = vrot.lane.b32.xlu0 %v1238, 24
        %v2200 = vpop.permute.xlu0 %2199
        %2201 = vrot.lane.b32.xlu0 %v1239, 24
        %v2202 = vpop.permute.xlu0 %2201
        %2203 = vrot.lane.b32.xlu0 %v1240, 24
        %v2204 = vpop.permute.xlu0 %2203
        %2205 = vrot.lane.b32.xlu0 %v1241, 24
        %v2206 = vpop.permute.xlu0 %2205
        %2207 = vrot.lane.b32.xlu0 %v1242, 24
        %v2208 = vpop.permute.xlu0 %2207
        %2209 = vrot.lane.b32.xlu0 %v1243, 24
        %v2210 = vpop.permute.xlu0 %2209
        %2211 = vrot.lane.b32.xlu0 %v1244, 24
        %v2212 = vpop.permute.xlu0 %2211
        %2213 = vrot.lane.b32.xlu0 %v1245, 24
        %v2214 = vpop.permute.xlu0 %2213
        %2215 = vrot.lane.b32.xlu0 %v1246, 24
        %v2216 = vpop.permute.xlu0 %2215
        %2217 = vrot.lane.b32.xlu0 %v1247, 24
        %v2218 = vpop.permute.xlu0 %2217
        %2219 = vrot.lane.b32.xlu0 %v1248, 24
        %v2220 = vpop.permute.xlu0 %2219
        %2221 = vrot.lane.b32.xlu0 %v1249, 24
        %v2222 = vpop.permute.xlu0 %2221
        %2223 = vrot.lane.b32.xlu0 %v1250, 24
        %v2224 = vpop.permute.xlu0 %2223
        %2225 = vrot.lane.b32.xlu0 %v1251, 24
        %v2226 = vpop.permute.xlu0 %2225
        %2227 = vrot.lane.b32.xlu0 %v1252, 24
        %v2228 = vpop.permute.xlu0 %2227
        %2229 = vrot.lane.b32.xlu0 %v1253, 24
        %v2230 = vpop.permute.xlu0 %2229
        %2231 = vrot.lane.b32.xlu0 %v1254, 24
        %v2232 = vpop.permute.xlu0 %2231
        %2233 = vrot.lane.b32.xlu0 %v1255, 24
        %v2234 = vpop.permute.xlu0 %2233
        %2235 = vrot.lane.b32.xlu0 %v1256, 24
        %v2236 = vpop.permute.xlu0 %2235
        %2237 = vrot.lane.b32.xlu0 %v1257, 24
        %v2238 = vpop.permute.xlu0 %2237
        %2239 = vrot.lane.b32.xlu0 %v1258, 24
        %v2240 = vpop.permute.xlu0 %2239
        %2241 = vrot.lane.b32.xlu0 %v1259, 24
        %v2242 = vpop.permute.xlu0 %2241
        %2243 = vrot.lane.b32.xlu0 %v1260, 24
        %v2244 = vpop.permute.xlu0 %2243
        %2245 = vrot.lane.b32.xlu0 %v1261, 24
        %v2246 = vpop.permute.xlu0 %2245
        %2247 = vrot.lane.b32.xlu0 %v1262, 24
        %v2248 = vpop.permute.xlu0 %2247
        %2249 = vrot.lane.b32.xlu0 %v1263, 24
        %v2250 = vpop.permute.xlu0 %2249
        %2251 = vrot.lane.b32.xlu0 %v1264, 24
        %v2252 = vpop.permute.xlu0 %2251
        %2253 = vrot.lane.b32.xlu0 %v1265, 24
        %v2254 = vpop.permute.xlu0 %2253
        %2255 = vrot.lane.b32.xlu0 %v1266, 24
        %v2256 = vpop.permute.xlu0 %2255
        %2257 = vrot.lane.b32.xlu0 %v1267, 24
        %v2258 = vpop.permute.xlu0 %2257
        %2259 = vrot.lane.b32.xlu0 %v1268, 24
        %v2260 = vpop.permute.xlu0 %2259
        %v2293 = vsel %vm516, %v689, %v1302
        %v2294 = vsel %vm516, %v690, %v1304
        %v2295 = vsel %vm516, %v691, %v1306
        %v2296 = vsel %vm516, %v692, %v1308
        %v2297 = vsel %vm516, %v693, %v1310
        %v2298 = vsel %vm516, %v694, %v1312
        %v2299 = vsel %vm516, %v695, %v1314
        %v2300 = vsel %vm516, %v696, %v1316
        %v2301 = vsel %vm516, %v697, %v1318
        %v2302 = vsel %vm516, %v698, %v1320
        %v2303 = vsel %vm516, %v699, %v1322
        %v2304 = vsel %vm516, %v700, %v1324
        %v2305 = vsel %vm516, %v701, %v1326
        %v2306 = vsel %vm516, %v702, %v1328
        %v2307 = vsel %vm516, %v703, %v1330
        %v2308 = vsel %vm516, %v704, %v1332
        %v2309 = vsel %vm516, %v705, %v1334
        %v2310 = vsel %vm516, %v706, %v1336
        %v2311 = vsel %vm516, %v707, %v1338
        %v2312 = vsel %vm516, %v708, %v1340
        %v2313 = vsel %vm516, %v709, %v1342
        %v2314 = vsel %vm516, %v710, %v1344
        %v2315 = vsel %vm516, %v711, %v1346
        %v2316 = vsel %vm516, %v712, %v1348
        %v2317 = vsel %vm516, %v713, %v1350
        %v2318 = vsel %vm516, %v714, %v1352
        %v2319 = vsel %vm516, %v715, %v1354
        %v2320 = vsel %vm516, %v716, %v1356
        %v2321 = vsel %vm516, %v717, %v1358
        %v2322 = vsel %vm516, %v718, %v1360
        %v2323 = vsel %vm516, %v719, %v1362
        %v2324 = vsel %vm516, %v720, %v1364
        %vm2325 = vcmask 48128
        %v2326 = vsel %vm2325, %v2293, %v1430
        %v2327 = vsel %vm2325, %v2294, %v1432
        %v2328 = vsel %vm2325, %v2295, %v1434
        %v2329 = vsel %vm2325, %v2296, %v1436
        %v2330 = vsel %vm2325, %v2297, %v1438
        %v2331 = vsel %vm2325, %v2298, %v1440
        %v2332 = vsel %vm2325, %v2299, %v1442
        %v2333 = vsel %vm2325, %v2300, %v1444
        %v2334 = vsel %vm2325, %v2301, %v1446
        %v2335 = vsel %vm2325, %v2302, %v1448
        %v2336 = vsel %vm2325, %v2303, %v1450
        %v2337 = vsel %vm2325, %v2304, %v1452
        %v2338 = vsel %vm2325, %v2305, %v1454
        %v2339 = vsel %vm2325, %v2306, %v1456
        %v2340 = vsel %vm2325, %v2307, %v1458
        %v2341 = vsel %vm2325, %v2308, %v1460
        %v2342 = vsel %vm2325, %v2309, %v1462
        %v2343 = vsel %vm2325, %v2310, %v1464
        %v2344 = vsel %vm2325, %v2311, %v1466
        %v2345 = vsel %vm2325, %v2312, %v1468
        %v2346 = vsel %vm2325, %v2313, %v1470
        %v2347 = vsel %vm2325, %v2314, %v1472
        %v2348 = vsel %vm2325, %v2315, %v1474
        %v2349 = vsel %vm2325, %v2316, %v1476
        %v2350 = vsel %vm2325, %v2317, %v1478
        %v2351 = vsel %vm2325, %v2318, %v1480
        %v2352 = vsel %vm2325, %v2319, %v1482
        %v2353 = vsel %vm2325, %v2320, %v1484
        %v2354 = vsel %vm2325, %v2321, %v1486
        %v2355 = vsel %vm2325, %v2322, %v1488
        %v2356 = vsel %vm2325, %v2323, %v1490
        %v2357 = vsel %vm2325, %v2324, %v1492
        %vm2358 = vcmask 72704
        %v2359 = vsel %vm2358, %v2326, %v1558
        %v2360 = vsel %vm2358, %v2327, %v1560
        %v2361 = vsel %vm2358, %v2328, %v1562
        %v2362 = vsel %vm2358, %v2329, %v1564
        %v2363 = vsel %vm2358, %v2330, %v1566
        %v2364 = vsel %vm2358, %v2331, %v1568
        %v2365 = vsel %vm2358, %v2332, %v1570
        %v2366 = vsel %vm2358, %v2333, %v1572
        %v2367 = vsel %vm2358, %v2334, %v1574
        %v2368 = vsel %vm2358, %v2335, %v1576
        %v2369 = vsel %vm2358, %v2336, %v1578
        %v2370 = vsel %vm2358, %v2337, %v1580
        %v2371 = vsel %vm2358, %v2338, %v1582
        %v2372 = vsel %vm2358, %v2339, %v1584
        %v2373 = vsel %vm2358, %v2340, %v1586
        %v2374 = vsel %vm2358, %v2341, %v1588
        %v2375 = vsel %vm2358, %v2342, %v1590
        %v2376 = vsel %vm2358, %v2343, %v1592
        %v2377 = vsel %vm2358, %v2344, %v1594
        %v2378 = vsel %vm2358, %v2345, %v1596
        %v2379 = vsel %vm2358, %v2346, %v1598
        %v2380 = vsel %vm2358, %v2347, %v1600
        %v2381 = vsel %vm2358, %v2348, %v1602
        %v2382 = vsel %vm2358, %v2349, %v1604
        %v2383 = vsel %vm2358, %v2350, %v1606
        %v2384 = vsel %vm2358, %v2351, %v1608
        %v2385 = vsel %vm2358, %v2352, %v1610
        %v2386 = vsel %vm2358, %v2353, %v1612
        %v2387 = vsel %vm2358, %v2354, %v1614
        %v2388 = vsel %vm2358, %v2355, %v1616
        %v2389 = vsel %vm2358, %v2356, %v1618
        %v2390 = vsel %vm2358, %v2357, %v1620
        %vm2391 = vcmask 97280
        %v2392 = vsel %vm2391, %v2359, %v1686
        %v2393 = vsel %vm2391, %v2360, %v1688
        %v2394 = vsel %vm2391, %v2361, %v1690
        %v2395 = vsel %vm2391, %v2362, %v1692
        %v2396 = vsel %vm2391, %v2363, %v1694
        %v2397 = vsel %vm2391, %v2364, %v1696
        %v2398 = vsel %vm2391, %v2365, %v1698
        %v2399 = vsel %vm2391, %v2366, %v1700
        %v2400 = vsel %vm2391, %v2367, %v1702
        %v2401 = vsel %vm2391, %v2368, %v1704
        %v2402 = vsel %vm2391, %v2369, %v1706
        %v2403 = vsel %vm2391, %v2370, %v1708
        %v2404 = vsel %vm2391, %v2371, %v1710
        %v2405 = vsel %vm2391, %v2372, %v1712
        %v2406 = vsel %vm2391, %v2373, %v1714
        %v2407 = vsel %vm2391, %v2374, %v1716
        %v2408 = vsel %vm2391, %v2375, %v1718
        %v2409 = vsel %vm2391, %v2376, %v1720
        %v2410 = vsel %vm2391, %v2377, %v1722
        %v2411 = vsel %vm2391, %v2378, %v1724
        %v2412 = vsel %vm2391, %v2379, %v1726
        %v2413 = vsel %vm2391, %v2380, %v1728
        %v2414 = vsel %vm2391, %v2381, %v1730
        %v2415 = vsel %vm2391, %v2382, %v1732
        %v2416 = vsel %vm2391, %v2383, %v1734
        %v2417 = vsel %vm2391, %v2384, %v1736
        %v2418 = vsel %vm2391, %v2385, %v1738
        %v2419 = vsel %vm2391, %v2386, %v1740
        %v2420 = vsel %vm2391, %v2387, %v1742
        %v2421 = vsel %vm2391, %v2388, %v1744
        %v2422 = vsel %vm2391, %v2389, %v1746
        %v2423 = vsel %vm2391, %v2390, %v1748
        %vm2424 = vcmask 121856
        %v2425 = vsel %vm2424, %v2392, %v1814
        %v2426 = vsel %vm2424, %v2393, %v1816
        %v2427 = vsel %vm2424, %v2394, %v1818
        %v2428 = vsel %vm2424, %v2395, %v1820
        %v2429 = vsel %vm2424, %v2396, %v1822
        %v2430 = vsel %vm2424, %v2397, %v1824
        %v2431 = vsel %vm2424, %v2398, %v1826
        %v2432 = vsel %vm2424, %v2399, %v1828
        %v2433 = vsel %vm2424, %v2400, %v1830
        %v2434 = vsel %vm2424, %v2401, %v1832
        %v2435 = vsel %vm2424, %v2402, %v1834
        %v2436 = vsel %vm2424, %v2403, %v1836
        %v2437 = vsel %vm2424, %v2404, %v1838
        %v2438 = vsel %vm2424, %v2405, %v1840
        %v2439 = vsel %vm2424, %v2406, %v1842
        %v2440 = vsel %vm2424, %v2407, %v1844
        %v2441 = vsel %vm2424, %v2408, %v1846
        %v2442 = vsel %vm2424, %v2409, %v1848
        %v2443 = vsel %vm2424, %v2410, %v1850
        %v2444 = vsel %vm2424, %v2411, %v1852
        %v2445 = vsel %vm2424, %v2412, %v1854
        %v2446 = vsel %vm2424, %v2413, %v1856
        %v2447 = vsel %vm2424, %v2414, %v1858
        %v2448 = vsel %vm2424, %v2415, %v1860
        %v2449 = vsel %vm2424, %v2416, %v1862
        %v2450 = vsel %vm2424, %v2417, %v1864
        %v2451 = vsel %vm2424, %v2418, %v1866
        %v2452 = vsel %vm2424, %v2419, %v1868
        %v2453 = vsel %vm2424, %v2420, %v1870
        %v2454 = vsel %vm2424, %v2421, %v1872
        %v2455 = vsel %vm2424, %v2422, %v1874
        %v2456 = vsel %vm2424, %v2423, %v1876
        %vm2457 = vcmask 146432
        %v2458 = vsel %vm2457, %v2425, %v1942
        %v2459 = vsel %vm2457, %v2426, %v1944
        %v2460 = vsel %vm2457, %v2427, %v1946
        %v2461 = vsel %vm2457, %v2428, %v1948
        %v2462 = vsel %vm2457, %v2429, %v1950
        %v2463 = vsel %vm2457, %v2430, %v1952
        %v2464 = vsel %vm2457, %v2431, %v1954
        %v2465 = vsel %vm2457, %v2432, %v1956
        %v2466 = vsel %vm2457, %v2433, %v1958
        %v2467 = vsel %vm2457, %v2434, %v1960
        %v2468 = vsel %vm2457, %v2435, %v1962
        %v2469 = vsel %vm2457, %v2436, %v1964
        %v2470 = vsel %vm2457, %v2437, %v1966
        %v2471 = vsel %vm2457, %v2438, %v1968
        %v2472 = vsel %vm2457, %v2439, %v1970
        %v2473 = vsel %vm2457, %v2440, %v1972
        %v2474 = vsel %vm2457, %v2441, %v1974
        %v2475 = vsel %vm2457, %v2442, %v1976
        %v2476 = vsel %vm2457, %v2443, %v1978
        %v2477 = vsel %vm2457, %v2444, %v1980
        %v2478 = vsel %vm2457, %v2445, %v1982
        %v2479 = vsel %vm2457, %v2446, %v1984
        %v2480 = vsel %vm2457, %v2447, %v1986
        %v2481 = vsel %vm2457, %v2448, %v1988
        %v2482 = vsel %vm2457, %v2449, %v1990
        %v2483 = vsel %vm2457, %v2450, %v1992
        %v2484 = vsel %vm2457, %v2451, %v1994
        %v2485 = vsel %vm2457, %v2452, %v1996
        %v2486 = vsel %vm2457, %v2453, %v1998
        %v2487 = vsel %vm2457, %v2454, %v2000
        %v2488 = vsel %vm2457, %v2455, %v2002
        %v2489 = vsel %vm2457, %v2456, %v2004
        %vm2490 = vcmask 171008
        %v2491 = vsel %vm2490, %v2458, %v2070
        %v2492 = vsel %vm2490, %v2459, %v2072
        %v2493 = vsel %vm2490, %v2460, %v2074
        %v2494 = vsel %vm2490, %v2461, %v2076
        %v2495 = vsel %vm2490, %v2462, %v2078
        %v2496 = vsel %vm2490, %v2463, %v2080
        %v2497 = vsel %vm2490, %v2464, %v2082
        %v2498 = vsel %vm2490, %v2465, %v2084
        %v2499 = vsel %vm2490, %v2466, %v2086
        %v2500 = vsel %vm2490, %v2467, %v2088
        %v2501 = vsel %vm2490, %v2468, %v2090
        %v2502 = vsel %vm2490, %v2469, %v2092
        %v2503 = vsel %vm2490, %v2470, %v2094
        %v2504 = vsel %vm2490, %v2471, %v2096
        %v2505 = vsel %vm2490, %v2472, %v2098
        %v2506 = vsel %vm2490, %v2473, %v2100
        %v2507 = vsel %vm2490, %v2474, %v2102
        %v2508 = vsel %vm2490, %v2475, %v2104
        %v2509 = vsel %vm2490, %v2476, %v2106
        %v2510 = vsel %vm2490, %v2477, %v2108
        %v2511 = vsel %vm2490, %v2478, %v2110
        %v2512 = vsel %vm2490, %v2479, %v2112
        %v2513 = vsel %vm2490, %v2480, %v2114
        %v2514 = vsel %vm2490, %v2481, %v2116
        %v2515 = vsel %vm2490, %v2482, %v2118
        %v2516 = vsel %vm2490, %v2483, %v2120
        %v2517 = vsel %vm2490, %v2484, %v2122
        %v2518 = vsel %vm2490, %v2485, %v2124
        %v2519 = vsel %vm2490, %v2486, %v2126
        %v2520 = vsel %vm2490, %v2487, %v2128
        %v2521 = vsel %vm2490, %v2488, %v2130
        %v2522 = vsel %vm2490, %v2489, %v2132
        %vm2523 = vcmask 195584
        %v2524 = vsel %vm2523, %v2491, %v2198
        %v2525 = vsel %vm2523, %v2492, %v2200
        %v2526 = vsel %vm2523, %v2493, %v2202
        %v2527 = vsel %vm2523, %v2494, %v2204
        %v2528 = vsel %vm2523, %v2495, %v2206
        %v2529 = vsel %vm2523, %v2496, %v2208
        %v2530 = vsel %vm2523, %v2497, %v2210
        %v2531 = vsel %vm2523, %v2498, %v2212
        %v2532 = vsel %vm2523, %v2499, %v2214
        %v2533 = vsel %vm2523, %v2500, %v2216
        %v2534 = vsel %vm2523, %v2501, %v2218
        %v2535 = vsel %vm2523, %v2502, %v2220
        %v2536 = vsel %vm2523, %v2503, %v2222
        %v2537 = vsel %vm2523, %v2504, %v2224
        %v2538 = vsel %vm2523, %v2505, %v2226
        %v2539 = vsel %vm2523, %v2506, %v2228
        %v2540 = vsel %vm2523, %v2507, %v2230
        %v2541 = vsel %vm2523, %v2508, %v2232
        %v2542 = vsel %vm2523, %v2509, %v2234
        %v2543 = vsel %vm2523, %v2510, %v2236
        %v2544 = vsel %vm2523, %v2511, %v2238
        %v2545 = vsel %vm2523, %v2512, %v2240
        %v2546 = vsel %vm2523, %v2513, %v2242
        %v2547 = vsel %vm2523, %v2514, %v2244
        %v2548 = vsel %vm2523, %v2515, %v2246
        %v2549 = vsel %vm2523, %v2516, %v2248
        %v2550 = vsel %vm2523, %v2517, %v2250
        %v2551 = vsel %vm2523, %v2518, %v2252
        %v2552 = vsel %vm2523, %v2519, %v2254
        %v2553 = vsel %vm2523, %v2520, %v2256
        %v2554 = vsel %vm2523, %v2521, %v2258
        %v2555 = vsel %vm2523, %v2522, %v2260
        %v2556 = vpack.c.bf16 %v2525, %v2524
        %v2557 = vpack.c.bf16 %v2527, %v2526
        %v2558 = vpack.c.bf16 %v2529, %v2528
        %v2559 = vpack.c.bf16 %v2531, %v2530
        %v2560 = vpack.c.bf16 %v2533, %v2532
        %v2561 = vpack.c.bf16 %v2535, %v2534
        %v2562 = vpack.c.bf16 %v2537, %v2536
        %v2563 = vpack.c.bf16 %v2539, %v2538
        %v2564 = vpack.c.bf16 %v2541, %v2540
        %v2565 = vpack.c.bf16 %v2543, %v2542
        %v2566 = vpack.c.bf16 %v2545, %v2544
        %v2567 = vpack.c.bf16 %v2547, %v2546
        %v2568 = vpack.c.bf16 %v2549, %v2548
        %v2569 = vpack.c.bf16 %v2551, %v2550
        %v2570 = vpack.c.bf16 %v2553, %v2552
        %v2571 = vpack.c.bf16 %v2555, %v2554
        %v2572 = vld [vmem:[%s1] sm:$0xf]
        %v2573 = vld [vmem:[%s1 + $0x4] sm:$0xf]
        %v2574 = vld [vmem:[%s1 + $0x8] sm:$0xf]
        %v2575 = vld [vmem:[%s1 + $0xc] sm:$0x3]
        %v2576 = vld [vmem:[%s2] sm:$0x1]
        %v2578 = vlaneseq
        %v2579 = vshrl.u32 %v2578, 7
        %v2580 = vsub.s32 0, %v2579
        %v2581 = vrot.slane %v2576, %v2580
        %v2587 = vunpack.c.l.b16 %v2572
        %v2588 = vunpack.c.l.b16 %v2573
        %v2589 = vunpack.c.l.b16 %v2574
        %v2590 = vunpack.c.l.b16 %v2575
        %v2591 = vpack.c.b16 %v2588, %v2587
        %v2592 = vpack.c.b16 %v2590, %v2589
        %vm2594 = vcmask 220160
        %v2596 = vsel %vm2594, %v2556, 0
        %v2599 = vsel %vm2594, %v2557, 0
        %v2602 = vsel %vm2594, %v2558, 0
        %v2605 = vsel %vm2594, %v2559, 0
        %v2608 = vsel %vm2594, %v2560, 0
        %v2611 = vsel %vm2594, %v2561, 0
        %v2614 = vsel %vm2594, %v2562, 0
        %v2617 = vsel %vm2594, %v2563, 0
        %v2620 = vsel %vm2594, %v2564, 0
        %v2623 = vsel %vm2594, %v2565, 0
        %v2626 = vsel %vm2594, %v2566, 0
        %v2629 = vsel %vm2594, %v2567, 0
        %v2632 = vsel %vm2594, %v2568, 0
        %v2635 = vsel %vm2594, %v2569, 0
        %v2638 = vsel %vm2594, %v2570, 0
        %v2641 = vsel %vm2594, %v2571, 0
        %vm2643 = vcmask 1044480
        %vm2644 = vcmask 1045504
        %v2645 = vsel %vm2643, 4294967295, 65535
        %v2646 = vsel %vm2644, %v2645, 0
        %v2648 = vand.u32 %v2592, %v2646
        %2650 = vmatprep.subr.bf16.mxu0 0
        %2651 = vmatpush1.bf16.msra.mxu0 %v2591
        %2652 = vmatprep.subr.bf16.mxu0 0
        %2653 = vmatpush1.bf16.msra.mxu0 %v2648
        %2654 = vmatprep.subr.bf16.mxu0 0
        %2655 = vmatpush1.bf16.msra.mxu0 0
        %2656 = vmatprep.subr.bf16.mxu0 0
        %2657 = vmatpush1.bf16.msra.mxu0 0
        %2658 = vmatprep.subr.bf16.mxu0 0
        %2659 = vmatpush1.bf16.msra.mxu0 0
        %2660 = vmatprep.subr.bf16.mxu0 0
        %2661 = vmatpush1.bf16.msra.mxu0 0
        %2662 = vmatprep.subr.bf16.mxu0 0
        %2663 = vmatpush1.bf16.msra.mxu0 0
        %2664 = vmatprep.subr.bf16.mxu0 0
        %2665 = vmatpush1.bf16.msra.mxu0 0
        %2666 = vmatprep.subr.bf16.mxu0 0
        %2667 = vmatpush1.bf16.msra.mxu0 0
        %2668 = vmatprep.subr.bf16.mxu0 0
        %2669 = vmatpush1.bf16.msra.mxu0 0
        %2670 = vmatprep.subr.bf16.mxu0 0
        %2671 = vmatpush1.bf16.msra.mxu0 0
        %2672 = vmatprep.subr.bf16.mxu0 0
        %2673 = vmatpush1.bf16.msra.mxu0 0
        %2674 = vmatprep.subr.bf16.mxu0 0
        %2675 = vmatpush1.bf16.msra.mxu0 0
        %2676 = vmatprep.subr.bf16.mxu0 0
        %2677 = vmatpush1.bf16.msra.mxu0 0
        %2678 = vmatprep.subr.bf16.mxu0 0
        %2679 = vmatpush1.bf16.msra.mxu0 0
        %2680 = vmatprep.subr.bf16.mxu0 0
        %2681 = vmatpush1.bf16.msra.mxu0 0
        %2682 = vmatprep.mubr.bf16.mxu0 0
        %2683 = vmatmul.mubr.bf16.gmra.mrb[0].mxu0 %v2596
        %v2684 = vpop.f32.mrb[0].mxu0
        %v2685 = vadd.f32 %v2581, %v2684
        %v2686 = vpop.f32.mrb[0].mxu0
        %v2687 = vpop.f32.mrb[0].mxu0
        %v2688 = vadd.f32 %v2581, %v2687
        %v2689 = vpop.f32.mrb[0].mxu0
        %2690 = vmatprep.mubr.bf16.mxu0 0
        %2691 = vmatmul.mubr.bf16.gmra.mrb[0].mxu0 %v2599
        %v2692 = vpop.f32.mrb[0].mxu0
        %v2693 = vadd.f32 %v2581, %v2692
        %v2694 = vpop.f32.mrb[0].mxu0
        %v2695 = vpop.f32.mrb[0].mxu0
        %v2696 = vadd.f32 %v2581, %v2695
        %v2697 = vpop.f32.mrb[0].mxu0
        %2698 = vmatprep.mubr.bf16.mxu0 0
        %2699 = vmatmul.mubr.bf16.gmra.mrb[0].mxu0 %v2602
        %v2700 = vpop.f32.mrb[0].mxu0
        %v2701 = vadd.f32 %v2581, %v2700
        %v2702 = vpop.f32.mrb[0].mxu0
        %v2703 = vpop.f32.mrb[0].mxu0
        %v2704 = vadd.f32 %v2581, %v2703
        %v2705 = vpop.f32.mrb[0].mxu0
        %2706 = vmatprep.mubr.bf16.mxu0 0
        %2707 = vmatmul.mubr.bf16.gmra.mrb[0].mxu0 %v2605
        %v2708 = vpop.f32.mrb[0].mxu0
        %v2709 = vadd.f32 %v2581, %v2708
        %v2710 = vpop.f32.mrb[0].mxu0
        %v2711 = vpop.f32.mrb[0].mxu0
        %v2712 = vadd.f32 %v2581, %v2711
        %v2713 = vpop.f32.mrb[0].mxu0
        %2714 = vmatprep.mubr.bf16.mxu0 0
        %2715 = vmatmul.mubr.bf16.gmra.mrb[0].mxu0 %v2608
        %v2716 = vpop.f32.mrb[0].mxu0
        %v2717 = vadd.f32 %v2581, %v2716
        %v2718 = vpop.f32.mrb[0].mxu0
        %v2719 = vpop.f32.mrb[0].mxu0
        %v2720 = vadd.f32 %v2581, %v2719
        %v2721 = vpop.f32.mrb[0].mxu0
        %2722 = vmatprep.mubr.bf16.mxu0 0
        %2723 = vmatmul.mubr.bf16.gmra.mrb[0].mxu0 %v2611
        %v2724 = vpop.f32.mrb[0].mxu0
        %v2725 = vadd.f32 %v2581, %v2724
        %v2726 = vpop.f32.mrb[0].mxu0
        %v2727 = vpop.f32.mrb[0].mxu0
        %v2728 = vadd.f32 %v2581, %v2727
        %v2729 = vpop.f32.mrb[0].mxu0
        %2730 = vmatprep.mubr.bf16.mxu0 0
        %2731 = vmatmul.mubr.bf16.gmra.mrb[0].mxu0 %v2614
        %v2732 = vpop.f32.mrb[0].mxu0
        %v2733 = vadd.f32 %v2581, %v2732
        %v2734 = vpop.f32.mrb[0].mxu0
        %v2735 = vpop.f32.mrb[0].mxu0
        %v2736 = vadd.f32 %v2581, %v2735
        %v2737 = vpop.f32.mrb[0].mxu0
        %2738 = vmatprep.mubr.bf16.mxu0 0
        %2739 = vmatmul.mubr.bf16.gmra.mrb[0].mxu0 %v2617
        %v2740 = vpop.f32.mrb[0].mxu0
        %v2741 = vadd.f32 %v2581, %v2740
        %v2742 = vpop.f32.mrb[0].mxu0
        %v2743 = vpop.f32.mrb[0].mxu0
        %v2744 = vadd.f32 %v2581, %v2743
        %v2745 = vpop.f32.mrb[0].mxu0
        %2746 = vmatprep.mubr.bf16.mxu0 0
        %2747 = vmatmul.mubr.bf16.gmra.mrb[0].mxu0 %v2620
        %v2748 = vpop.f32.mrb[0].mxu0
        %v2749 = vadd.f32 %v2581, %v2748
        %v2750 = vpop.f32.mrb[0].mxu0
        %v2751 = vpop.f32.mrb[0].mxu0
        %v2752 = vadd.f32 %v2581, %v2751
        %v2753 = vpop.f32.mrb[0].mxu0
        %2754 = vmatprep.mubr.bf16.mxu0 0
        %2755 = vmatmul.mubr.bf16.gmra.mrb[0].mxu0 %v2623
        %v2756 = vpop.f32.mrb[0].mxu0
        %v2757 = vadd.f32 %v2581, %v2756
        %v2758 = vpop.f32.mrb[0].mxu0
        %v2759 = vpop.f32.mrb[0].mxu0
        %v2760 = vadd.f32 %v2581, %v2759
        %v2761 = vpop.f32.mrb[0].mxu0
        %2762 = vmatprep.mubr.bf16.mxu0 0
        %2763 = vmatmul.mubr.bf16.gmra.mrb[0].mxu0 %v2626
        %v2764 = vpop.f32.mrb[0].mxu0
        %v2765 = vadd.f32 %v2581, %v2764
        %v2766 = vpop.f32.mrb[0].mxu0
        %v2767 = vpop.f32.mrb[0].mxu0
        %v2768 = vadd.f32 %v2581, %v2767
        %v2769 = vpop.f32.mrb[0].mxu0
        %2770 = vmatprep.mubr.bf16.mxu0 0
        %2771 = vmatmul.mubr.bf16.gmra.mrb[0].mxu0 %v2629
        %v2772 = vpop.f32.mrb[0].mxu0
        %v2773 = vadd.f32 %v2581, %v2772
        %v2774 = vpop.f32.mrb[0].mxu0
        %v2775 = vpop.f32.mrb[0].mxu0
        %v2776 = vadd.f32 %v2581, %v2775
        %v2777 = vpop.f32.mrb[0].mxu0
        %2778 = vmatprep.mubr.bf16.mxu0 0
        %2779 = vmatmul.mubr.bf16.gmra.mrb[0].mxu0 %v2632
        %v2780 = vpop.f32.mrb[0].mxu0
        %v2781 = vadd.f32 %v2581, %v2780
        %v2782 = vpop.f32.mrb[0].mxu0
        %v2783 = vpop.f32.mrb[0].mxu0
        %v2784 = vadd.f32 %v2581, %v2783
        %v2785 = vpop.f32.mrb[0].mxu0
        %2786 = vmatprep.mubr.bf16.mxu0 0
        %2787 = vmatmul.mubr.bf16.gmra.mrb[0].mxu0 %v2635
        %v2788 = vpop.f32.mrb[0].mxu0
        %v2789 = vadd.f32 %v2581, %v2788
        %v2790 = vpop.f32.mrb[0].mxu0
        %v2791 = vpop.f32.mrb[0].mxu0
        %v2792 = vadd.f32 %v2581, %v2791
        %v2793 = vpop.f32.mrb[0].mxu0
        %2794 = vmatprep.mubr.bf16.mxu0 0
        %2795 = vmatmul.mubr.bf16.gmra.mrb[0].mxu0 %v2638
        %v2796 = vpop.f32.mrb[0].mxu0
        %v2797 = vadd.f32 %v2581, %v2796
        %v2798 = vpop.f32.mrb[0].mxu0
        %v2799 = vpop.f32.mrb[0].mxu0
        %v2800 = vadd.f32 %v2581, %v2799
        %v2801 = vpop.f32.mrb[0].mxu0
        %2802 = vmatprep.mubr.bf16.mxu0 0
        %2803 = vmatmul.mubr.bf16.gmra.mrb[0].mxu0 %v2641
        %v2804 = vpop.f32.mrb[0].mxu0
        %v2805 = vadd.f32 %v2581, %v2804
        %v2806 = vpop.f32.mrb[0].mxu0
        %v2807 = vpop.f32.mrb[0].mxu0
        %v2808 = vadd.f32 %v2581, %v2807
        %v2809 = vpop.f32.mrb[0].mxu0
        %2810 = vdwg.mxu0
        %v2811 = vmax.f32 %v2685, 0.0
        %v2812 = vmax.f32 %v2688, 0.0
        %v2813 = vmax.f32 %v2693, 0.0
        %v2814 = vmax.f32 %v2696, 0.0
        %v2815 = vmax.f32 %v2701, 0.0
        %v2816 = vmax.f32 %v2704, 0.0
        %v2817 = vmax.f32 %v2709, 0.0
        %v2818 = vmax.f32 %v2712, 0.0
        %v2819 = vmax.f32 %v2717, 0.0
        %v2820 = vmax.f32 %v2720, 0.0
        %v2821 = vmax.f32 %v2725, 0.0
        %v2822 = vmax.f32 %v2728, 0.0
        %v2823 = vmax.f32 %v2733, 0.0
        %v2824 = vmax.f32 %v2736, 0.0
        %v2825 = vmax.f32 %v2741, 0.0
        %v2826 = vmax.f32 %v2744, 0.0
        %v2827 = vmax.f32 %v2749, 0.0
        %v2828 = vmax.f32 %v2752, 0.0
        %v2829 = vmax.f32 %v2757, 0.0
        %v2830 = vmax.f32 %v2760, 0.0
        %v2831 = vmax.f32 %v2765, 0.0
        %v2832 = vmax.f32 %v2768, 0.0
        %v2833 = vmax.f32 %v2773, 0.0
        %v2834 = vmax.f32 %v2776, 0.0
        %v2835 = vmax.f32 %v2781, 0.0
        %v2836 = vmax.f32 %v2784, 0.0
        %v2837 = vmax.f32 %v2789, 0.0
        %v2838 = vmax.f32 %v2792, 0.0
        %v2839 = vmax.f32 %v2797, 0.0
        %v2840 = vmax.f32 %v2800, 0.0
        %v2841 = vmax.f32 %v2805, 0.0
        %v2842 = vmax.f32 %v2808, 0.0
        %v2843 = vpack.c.bf16 %v2812, %v2811
        %v2844 = vpack.c.bf16 %v2814, %v2813
        %v2845 = vpack.c.bf16 %v2816, %v2815
        %v2846 = vpack.c.bf16 %v2818, %v2817
        %v2847 = vpack.c.bf16 %v2820, %v2819
        %v2848 = vpack.c.bf16 %v2822, %v2821
        %v2849 = vpack.c.bf16 %v2824, %v2823
        %v2850 = vpack.c.bf16 %v2826, %v2825
        %v2851 = vpack.c.bf16 %v2828, %v2827
        %v2852 = vpack.c.bf16 %v2830, %v2829
        %v2853 = vpack.c.bf16 %v2832, %v2831
        %v2854 = vpack.c.bf16 %v2834, %v2833
        %v2855 = vpack.c.bf16 %v2836, %v2835
        %v2856 = vpack.c.bf16 %v2838, %v2837
        %v2857 = vpack.c.bf16 %v2840, %v2839
        %v2858 = vpack.c.bf16 %v2842, %v2841
        %v2875 = vunpack.c.l.b16 %v2843
        %v2876 = vunpack.c.h.b16 %v2843
        %v2877 = vunpack.c.l.b16 %v2844
        %v2878 = vunpack.c.h.b16 %v2844
        %v2879 = vunpack.c.l.b16 %v2845
        %v2880 = vunpack.c.h.b16 %v2845
        %v2881 = vunpack.c.l.b16 %v2846
        %v2882 = vunpack.c.h.b16 %v2846
        %v2883 = vunpack.c.l.b16 %v2847
        %v2884 = vunpack.c.h.b16 %v2847
        %v2885 = vunpack.c.l.b16 %v2848
        %v2886 = vunpack.c.h.b16 %v2848
        %v2887 = vunpack.c.l.b16 %v2849
        %v2888 = vunpack.c.h.b16 %v2849
        %v2889 = vunpack.c.l.b16 %v2850
        %v2890 = vunpack.c.h.b16 %v2850
        %v2891 = vunpack.c.l.b16 %v2851
        %v2892 = vunpack.c.h.b16 %v2851
        %v2893 = vunpack.c.l.b16 %v2852
        %v2894 = vunpack.c.h.b16 %v2852
        %v2895 = vunpack.c.l.b16 %v2853
        %v2896 = vunpack.c.h.b16 %v2853
        %v2897 = vunpack.c.l.b16 %v2854
        %v2898 = vunpack.c.h.b16 %v2854
        %v2899 = vunpack.c.l.b16 %v2855
        %v2900 = vunpack.c.h.b16 %v2855
        %v2901 = vunpack.c.l.b16 %v2856
        %v2902 = vunpack.c.h.b16 %v2856
        %v2903 = vunpack.c.l.b16 %v2857
        %v2904 = vunpack.c.h.b16 %v2857
        %v2905 = vunpack.c.l.b16 %v2858
        %v2906 = vunpack.c.h.b16 %v2858
        %v2907 = vpack.c.b16 %v2875, %v2875
        %v2908 = vpack.c.b16 %v2876, %v2876
        %v2909 = vpack.c.b16 %v2877, %v2877
        %v2910 = vpack.c.b16 %v2878, %v2878
        %v2911 = vpack.c.b16 %v2879, %v2879
        %v2912 = vpack.c.b16 %v2880, %v2880
        %v2913 = vpack.c.b16 %v2881, %v2881
        %v2914 = vpack.c.b16 %v2882, %v2882
        %v2915 = vpack.c.b16 %v2883, %v2883
        %v2916 = vpack.c.b16 %v2884, %v2884
        %v2917 = vpack.c.b16 %v2885, %v2885
        %v2918 = vpack.c.b16 %v2886, %v2886
        %v2919 = vpack.c.b16 %v2887, %v2887
        %v2920 = vpack.c.b16 %v2888, %v2888
        %v2921 = vpack.c.b16 %v2889, %v2889
        %v2922 = vpack.c.b16 %v2890, %v2890
        %v2923 = vpack.c.b16 %v2891, %v2891
        %v2924 = vpack.c.b16 %v2892, %v2892
        %v2925 = vpack.c.b16 %v2893, %v2893
        %v2926 = vpack.c.b16 %v2894, %v2894
        %v2927 = vpack.c.b16 %v2895, %v2895
        %v2928 = vpack.c.b16 %v2896, %v2896
        %v2929 = vpack.c.b16 %v2897, %v2897
        %v2930 = vpack.c.b16 %v2898, %v2898
        %v2931 = vpack.c.b16 %v2899, %v2899
        %v2932 = vpack.c.b16 %v2900, %v2900
        %v2933 = vpack.c.b16 %v2901, %v2901
        %v2934 = vpack.c.b16 %v2902, %v2902
        %v2935 = vpack.c.b16 %v2903, %v2903
        %v2936 = vpack.c.b16 %v2904, %v2904
        %v2937 = vpack.c.b16 %v2905, %v2905
        %v2938 = vpack.c.b16 %v2906, %v2906
        %vm2971 = vcmask 257024
        %2972 = vst.msk [vmem:[%s514] sm:$0xf] %vm2971, %v2907
        %2973 = vst.msk [vmem:[%s514 + $0x4] sm:$0xf] %vm2971, %v2908
        %2974 = vst.msk [vmem:[%s514 + $0x8] sm:$0xf] %vm2971, %v2909
        %2975 = vst.msk [vmem:[%s514 + $0xc] sm:$0xf] %vm2971, %v2910
        %2976 = vst.msk [vmem:[%s514 + $0x10] sm:$0xf] %vm2971, %v2911
        %2977 = vst.msk [vmem:[%s514 + $0x14] sm:$0xf] %vm2971, %v2912
        %2978 = vst.msk [vmem:[%s514 + $0x18] sm:$0xf] %vm2971, %v2913
        %2979 = vst.msk [vmem:[%s514 + $0x1c] sm:$0xf] %vm2971, %v2914
        %2980 = vst.msk [vmem:[%s514 + $0x20] sm:$0xf] %vm2971, %v2915
        %2981 = vst.msk [vmem:[%s514 + $0x24] sm:$0xf] %vm2971, %v2916
        %2982 = vst.msk [vmem:[%s514 + $0x28] sm:$0xf] %vm2971, %v2917
        %2983 = vst.msk [vmem:[%s514 + $0x2c] sm:$0xf] %vm2971, %v2918
        %2984 = vst.msk [vmem:[%s514 + $0x30] sm:$0xf] %vm2971, %v2919
        %2985 = vst.msk [vmem:[%s514 + $0x34] sm:$0xf] %vm2971, %v2920
        %2986 = vst.msk [vmem:[%s514 + $0x38] sm:$0xf] %vm2971, %v2921
        %2987 = vst.msk [vmem:[%s514 + $0x3c] sm:$0xf] %vm2971, %v2922
        %2988 = vst.msk [vmem:[%s514 + $0x40] sm:$0xf] %vm2971, %v2923
        %2989 = vst.msk [vmem:[%s514 + $0x44] sm:$0xf] %vm2971, %v2924
        %2990 = vst.msk [vmem:[%s514 + $0x48] sm:$0xf] %vm2971, %v2925
        %2991 = vst.msk [vmem:[%s514 + $0x4c] sm:$0xf] %vm2971, %v2926
        %2992 = vst.msk [vmem:[%s514 + $0x50] sm:$0xf] %vm2971, %v2927
        %2993 = vst.msk [vmem:[%s514 + $0x54] sm:$0xf] %vm2971, %v2928
        %2994 = vst.msk [vmem:[%s514 + $0x58] sm:$0xf] %vm2971, %v2929
        %2995 = vst.msk [vmem:[%s514 + $0x5c] sm:$0xf] %vm2971, %v2930
        %2996 = vst.msk [vmem:[%s514 + $0x60] sm:$0xf] %vm2971, %v2931
        %2997 = vst.msk [vmem:[%s514 + $0x64] sm:$0xf] %vm2971, %v2932
        %2998 = vst.msk [vmem:[%s514 + $0x68] sm:$0xf] %vm2971, %v2933
        %2999 = vst.msk [vmem:[%s514 + $0x6c] sm:$0xf] %vm2971, %v2934
        %3000 = vst.msk [vmem:[%s514 + $0x70] sm:$0xf] %vm2971, %v2935
        %3001 = vst.msk [vmem:[%s514 + $0x74] sm:$0xf] %vm2971, %v2936
        %3002 = vst.msk [vmem:[%s514 + $0x78] sm:$0xf] %vm2971, %v2937
        %3003 = vst.msk [vmem:[%s514 + $0x7c] sm:$0xf] %vm2971, %v2938
        %vm3004 = vcmask 261120
        %v3005 = vsel %vm3004, %v2811, 0.0
        %v3006 = vsel %vm3004, %v2812, 0.0
        %v3007 = vadd.f32 %v3005, %v3006
        %v3008 = vsel %vm3004, %v2813, 0.0
        %v3009 = vadd.f32 %v3007, %v3008
        %v3010 = vsel %vm3004, %v2814, 0.0
        %v3011 = vadd.f32 %v3009, %v3010
        %v3012 = vsel %vm3004, %v2815, 0.0
        %v3013 = vadd.f32 %v3011, %v3012
        %v3014 = vsel %vm3004, %v2816, 0.0
        %v3015 = vadd.f32 %v3013, %v3014
        %v3016 = vsel %vm3004, %v2817, 0.0
        %v3017 = vadd.f32 %v3015, %v3016
        %v3018 = vsel %vm3004, %v2818, 0.0
        %v3019 = vadd.f32 %v3017, %v3018
        %v3020 = vsel %vm3004, %v2819, 0.0
        %v3021 = vadd.f32 %v3019, %v3020
        %v3022 = vsel %vm3004, %v2820, 0.0
        %v3023 = vadd.f32 %v3021, %v3022
        %v3024 = vsel %vm3004, %v2821, 0.0
        %v3025 = vadd.f32 %v3023, %v3024
        %v3026 = vsel %vm3004, %v2822, 0.0
        %v3027 = vadd.f32 %v3025, %v3026
        %v3028 = vsel %vm3004, %v2823, 0.0
        %v3029 = vadd.f32 %v3027, %v3028
        %v3030 = vsel %vm3004, %v2824, 0.0
        %v3031 = vadd.f32 %v3029, %v3030
        %v3032 = vsel %vm3004, %v2825, 0.0
        %v3033 = vadd.f32 %v3031, %v3032
        %v3034 = vsel %vm3004, %v2826, 0.0
        %v3035 = vadd.f32 %v3033, %v3034
        %v3036 = vsel %vm3004, %v2827, 0.0
        %v3037 = vadd.f32 %v3035, %v3036
        %v3038 = vsel %vm3004, %v2828, 0.0
        %v3039 = vadd.f32 %v3037, %v3038
        %v3040 = vsel %vm3004, %v2829, 0.0
        %v3041 = vadd.f32 %v3039, %v3040
        %v3042 = vsel %vm3004, %v2830, 0.0
        %v3043 = vadd.f32 %v3041, %v3042
        %v3044 = vsel %vm3004, %v2831, 0.0
        %v3045 = vadd.f32 %v3043, %v3044
        %v3046 = vsel %vm3004, %v2832, 0.0
        %v3047 = vadd.f32 %v3045, %v3046
        %v3048 = vsel %vm3004, %v2833, 0.0
        %v3049 = vadd.f32 %v3047, %v3048
        %v3050 = vsel %vm3004, %v2834, 0.0
        %v3051 = vadd.f32 %v3049, %v3050
        %v3052 = vsel %vm3004, %v2835, 0.0
        %v3053 = vadd.f32 %v3051, %v3052
        %v3054 = vsel %vm3004, %v2836, 0.0
        %v3055 = vadd.f32 %v3053, %v3054
        %v3056 = vsel %vm3004, %v2837, 0.0
        %v3057 = vadd.f32 %v3055, %v3056
        %v3058 = vsel %vm3004, %v2838, 0.0
        %v3059 = vadd.f32 %v3057, %v3058
        %v3060 = vsel %vm3004, %v2839, 0.0
        %v3061 = vadd.f32 %v3059, %v3060
        %v3062 = vsel %vm3004, %v2840, 0.0
        %v3063 = vadd.f32 %v3061, %v3062
        %v3064 = vsel %vm3004, %v2841, 0.0
        %v3065 = vadd.f32 %v3063, %v3064
        %v3066 = vsel %vm3004, %v2842, 0.0
        %v3067 = vadd.f32 %v3065, %v3066
        %v3068 = vrot.slane %v3067, 4
        %v3069 = vadd.f32 %v3067, %v3068
        %v3070 = vrot.slane %v3069, 2
        %v3071 = vadd.f32 %v3069, %v3070
        %v3072 = vrot.slane %v3071, 1
        %v3073 = vadd.f32 %v3071, %v3072
        %v3074 = vrcp.pop 256.0
        %v3075 = vmul.f32 %v3073, %v3074
        %3076 = vst.msk [vmem:[#allocation3] sm:$0xff] %vm3004, 0.0
        %3077 = vst.msk [vmem:[#allocation3 + $0x8] sm:$0xff] %vm3004, 0.0
        %s3078 = scalar_lea.vmem [#allocation3], 272
        %3079 = vst.msk [vmem:[%s3078] sm:$0xff] %vm3004, 0.0
        %3080 = vst.msk [vmem:[%s3078 + $0x8] sm:$0xff] %vm3004, 0.0
        %s3081 = scalar_lea.vmem [#allocation3], 16
        %3082 = vst.msk [vmem:[%s3081] sm:$0xff] %vm3004, %v2811
        %3083 = vst.msk [vmem:[%s3081 + $0x8] sm:$0xff] %vm3004, %v2812
        %3084 = vst.msk [vmem:[%s3081 + $0x10] sm:$0xff] %vm3004, %v2813
        %3085 = vst.msk [vmem:[%s3081 + $0x18] sm:$0xff] %vm3004, %v2814
        %3086 = vst.msk [vmem:[%s3081 + $0x20] sm:$0xff] %vm3004, %v2815
        %3087 = vst.msk [vmem:[%s3081 + $0x28] sm:$0xff] %vm3004, %v2816
        %3088 = vst.msk [vmem:[%s3081 + $0x30] sm:$0xff] %vm3004, %v2817
        %3089 = vst.msk [vmem:[%s3081 + $0x38] sm:$0xff] %vm3004, %v2818
        %3090 = vst.msk [vmem:[%s3081 + $0x40] sm:$0xff] %vm3004, %v2819
        %3091 = vst.msk [vmem:[%s3081 + $0x48] sm:$0xff] %vm3004, %v2820
        %3092 = vst.msk [vmem:[%s3081 + $0x50] sm:$0xff] %vm3004, %v2821
        %3093 = vst.msk [vmem:[%s3081 + $0x58] sm:$0xff] %vm3004, %v2822
        %3094 = vst.msk [vmem:[%s3081 + $0x60] sm:$0xff] %vm3004, %v2823
        %3095 = vst.msk [vmem:[%s3081 + $0x68] sm:$0xff] %vm3004, %v2824
        %3096 = vst.msk [vmem:[%s3081 + $0x70] sm:$0xff] %vm3004, %v2825
        %3097 = vst.msk [vmem:[%s3081 + $0x78] sm:$0xff] %vm3004, %v2826
        %3098 = vst.msk [vmem:[%s3081 + $0x80] sm:$0xff] %vm3004, %v2827
        %3099 = vst.msk [vmem:[%s3081 + $0x88] sm:$0xff] %vm3004, %v2828
        %3100 = vst.msk [vmem:[%s3081 + $0x90] sm:$0xff] %vm3004, %v2829
        %3101 = vst.msk [vmem:[%s3081 + $0x98] sm:$0xff] %vm3004, %v2830
        %3102 = vst.msk [vmem:[%s3081 + $0xa0] sm:$0xff] %vm3004, %v2831
        %3103 = vst.msk [vmem:[%s3081 + $0xa8] sm:$0xff] %vm3004, %v2832
        %3104 = vst.msk [vmem:[%s3081 + $0xb0] sm:$0xff] %vm3004, %v2833
        %3105 = vst.msk [vmem:[%s3081 + $0xb8] sm:$0xff] %vm3004, %v2834
        %3106 = vst.msk [vmem:[%s3081 + $0xc0] sm:$0xff] %vm3004, %v2835
        %3107 = vst.msk [vmem:[%s3081 + $0xc8] sm:$0xff] %vm3004, %v2836
        %3108 = vst.msk [vmem:[%s3081 + $0xd0] sm:$0xff] %vm3004, %v2837
        %3109 = vst.msk [vmem:[%s3081 + $0xd8] sm:$0xff] %vm3004, %v2838
        %3110 = vst.msk [vmem:[%s3081 + $0xe0] sm:$0xff] %vm3004, %v2839
        %3111 = vst.msk [vmem:[%s3081 + $0xe8] sm:$0xff] %vm3004, %v2840
        %3112 = vst.msk [vmem:[%s3081 + $0xf0] sm:$0xff] %vm3004, %v2841
        %3113 = vst.msk [vmem:[%s3081 + $0xf8] sm:$0xff] %vm3004, %v2842
        %v3114 = vld [vmem:[#allocation3] sm:$0xff]
        %v3115 = vld [vmem:[#allocation3 + $0x8] sm:$0xff]
        %v3116 = vld [vmem:[#allocation3 + $0x10] sm:$0xff]
        %v3117 = vld [vmem:[#allocation3 + $0x18] sm:$0xff]
        %v3118 = vld [vmem:[#allocation3 + $0x20] sm:$0xff]
        %v3119 = vld [vmem:[#allocation3 + $0x28] sm:$0xff]
        %v3120 = vld [vmem:[#allocation3 + $0x30] sm:$0xff]
        %v3121 = vld [vmem:[#allocation3 + $0x38] sm:$0xff]
        %v3122 = vld [vmem:[#allocation3 + $0x40] sm:$0xff]
        %v3123 = vld [vmem:[#allocation3 + $0x48] sm:$0xff]
        %v3124 = vld [vmem:[#allocation3 + $0x50] sm:$0xff]
        %v3125 = vld [vmem:[#allocation3 + $0x58] sm:$0xff]
        %v3126 = vld [vmem:[#allocation3 + $0x60] sm:$0xff]
        %v3127 = vld [vmem:[#allocation3 + $0x68] sm:$0xff]
        %v3128 = vld [vmem:[#allocation3 + $0x70] sm:$0xff]
        %v3129 = vld [vmem:[#allocation3 + $0x78] sm:$0xff]
        %v3130 = vld [vmem:[#allocation3 + $0x80] sm:$0xff]
        %v3131 = vld [vmem:[#allocation3 + $0x88] sm:$0xff]
        %v3132 = vld [vmem:[#allocation3 + $0x90] sm:$0xff]
        %v3133 = vld [vmem:[#allocation3 + $0x98] sm:$0xff]
        %v3134 = vld [vmem:[#allocation3 + $0xa0] sm:$0xff]
        %v3135 = vld [vmem:[#allocation3 + $0xa8] sm:$0xff]
        %v3136 = vld [vmem:[#allocation3 + $0xb0] sm:$0xff]
        %v3137 = vld [vmem:[#allocation3 + $0xb8] sm:$0xff]
        %v3138 = vld [vmem:[#allocation3 + $0xc0] sm:$0xff]
        %v3139 = vld [vmem:[#allocation3 + $0xc8] sm:$0xff]
        %v3140 = vld [vmem:[#allocation3 + $0xd0] sm:$0xff]
        %v3141 = vld [vmem:[#allocation3 + $0xd8] sm:$0xff]
        %v3142 = vld [vmem:[#allocation3 + $0xe0] sm:$0xff]
        %v3143 = vld [vmem:[#allocation3 + $0xe8] sm:$0xff]
        %v3144 = vld [vmem:[#allocation3 + $0xf0] sm:$0xff]
        %v3145 = vld [vmem:[#allocation3 + $0xf8] sm:$0xff]
        %v3146 = vrot.slane %v3114, 7
        %v3147 = vrot.slane %v3116, 7
        %v3148 = vrot.slane %v3118, 7
        %v3149 = vrot.slane %v3120, 7
        %v3150 = vrot.slane %v3122, 7
        %v3151 = vrot.slane %v3124, 7
        %v3152 = vrot.slane %v3126, 7
        %v3153 = vrot.slane %v3128, 7
        %v3154 = vrot.slane %v3130, 7
        %v3155 = vrot.slane %v3132, 7
        %v3156 = vrot.slane %v3134, 7
        %v3157 = vrot.slane %v3136, 7
        %v3158 = vrot.slane %v3138, 7
        %v3159 = vrot.slane %v3140, 7
        %v3160 = vrot.slane %v3142, 7
        %v3161 = vrot.slane %v3144, 7
        %v3162 = vrot.slane %v3115, 7
        %v3163 = vrot.slane %v3117, 7
        %v3164 = vrot.slane %v3119, 7
        %v3165 = vrot.slane %v3121, 7
        %v3166 = vrot.slane %v3123, 7
        %v3167 = vrot.slane %v3125, 7
        %v3168 = vrot.slane %v3127, 7
        %v3169 = vrot.slane %v3129, 7
        %v3170 = vrot.slane %v3131, 7
        %v3171 = vrot.slane %v3133, 7
        %v3172 = vrot.slane %v3135, 7
        %v3173 = vrot.slane %v3137, 7
        %v3174 = vrot.slane %v3139, 7
        %v3175 = vrot.slane %v3141, 7
        %v3176 = vrot.slane %v3143, 7
        %v3177 = vrot.slane %v3145, 7
        %v3178 = vsel %vm654, %v3146, %v3162
        %v3179 = vsel %vm654, %v3147, %v3163
        %v3180 = vsel %vm654, %v3148, %v3164
        %v3181 = vsel %vm654, %v3149, %v3165
        %v3182 = vsel %vm654, %v3150, %v3166
        %v3183 = vsel %vm654, %v3151, %v3167
        %v3184 = vsel %vm654, %v3152, %v3168
        %v3185 = vsel %vm654, %v3153, %v3169
        %v3186 = vsel %vm654, %v3154, %v3170
        %v3187 = vsel %vm654, %v3155, %v3171
        %v3188 = vsel %vm654, %v3156, %v3172
        %v3189 = vsel %vm654, %v3157, %v3173
        %v3190 = vsel %vm654, %v3158, %v3174
        %v3191 = vsel %vm654, %v3159, %v3175
        %v3192 = vsel %vm654, %v3160, %v3176
        %v3193 = vsel %vm654, %v3161, %v3177
        %v3194 = vsel %vm654, %v3162, %v3146
        %v3195 = vsel %vm654, %v3163, %v3147
        %v3196 = vsel %vm654, %v3164, %v3148
        %v3197 = vsel %vm654, %v3165, %v3149
        %v3198 = vsel %vm654, %v3166, %v3150
        %v3199 = vsel %vm654, %v3167, %v3151
        %v3200 = vsel %vm654, %v3168, %v3152
        %v3201 = vsel %vm654, %v3169, %v3153
        %v3202 = vsel %vm654, %v3170, %v3154
        %v3203 = vsel %vm654, %v3171, %v3155
        %v3204 = vsel %vm654, %v3172, %v3156
        %v3205 = vsel %vm654, %v3173, %v3157
        %v3206 = vsel %vm654, %v3174, %v3158
        %v3207 = vsel %vm654, %v3175, %v3159
        %v3208 = vsel %vm654, %v3176, %v3160
        %v3209 = vsel %vm654, %v3177, %v3161
        %v3210 = vsel %vm687, 0.0, %v3194
        %v3211 = vsel %vm688, 0.0, %v3178
        %v3212 = vsel %vm687, 0.0, %v3195
        %v3213 = vsel %vm688, 0.0, %v3179
        %v3214 = vsel %vm687, 0.0, %v3196
        %v3215 = vsel %vm688, 0.0, %v3180
        %v3216 = vsel %vm687, 0.0, %v3197
        %v3217 = vsel %vm688, 0.0, %v3181
        %v3218 = vsel %vm687, 0.0, %v3198
        %v3219 = vsel %vm688, 0.0, %v3182
        %v3220 = vsel %vm687, 0.0, %v3199
        %v3221 = vsel %vm688, 0.0, %v3183
        %v3222 = vsel %vm687, 0.0, %v3200
        %v3223 = vsel %vm688, 0.0, %v3184
        %v3224 = vsel %vm687, 0.0, %v3201
        %v3225 = vsel %vm688, 0.0, %v3185
        %v3226 = vsel %vm687, 0.0, %v3202
        %v3227 = vsel %vm688, 0.0, %v3186
        %v3228 = vsel %vm687, 0.0, %v3203
        %v3229 = vsel %vm688, 0.0, %v3187
        %v3230 = vsel %vm687, 0.0, %v3204
        %v3231 = vsel %vm688, 0.0, %v3188
        %v3232 = vsel %vm687, 0.0, %v3205
        %v3233 = vsel %vm688, 0.0, %v3189
        %v3234 = vsel %vm687, 0.0, %v3206
        %v3235 = vsel %vm688, 0.0, %v3190
        %v3236 = vsel %vm687, 0.0, %v3207
        %v3237 = vsel %vm688, 0.0, %v3191
        %v3238 = vsel %vm687, 0.0, %v3208
        %v3239 = vsel %vm688, 0.0, %v3192
        %v3240 = vsel %vm687, 0.0, %v3209
        %v3241 = vsel %vm688, 0.0, %v3193
        %v3242 = vrot.slane %v3114, 1
        %v3243 = vrot.slane %v3116, 1
        %v3244 = vrot.slane %v3118, 1
        %v3245 = vrot.slane %v3120, 1
        %v3246 = vrot.slane %v3122, 1
        %v3247 = vrot.slane %v3124, 1
        %v3248 = vrot.slane %v3126, 1
        %v3249 = vrot.slane %v3128, 1
        %v3250 = vrot.slane %v3130, 1
        %v3251 = vrot.slane %v3132, 1
        %v3252 = vrot.slane %v3134, 1
        %v3253 = vrot.slane %v3136, 1
        %v3254 = vrot.slane %v3138, 1
        %v3255 = vrot.slane %v3140, 1
        %v3256 = vrot.slane %v3142, 1
        %v3257 = vrot.slane %v3144, 1
        %v3258 = vrot.slane %v3115, 1
        %v3259 = vrot.slane %v3117, 1
        %v3260 = vrot.slane %v3119, 1
        %v3261 = vrot.slane %v3121, 1
        %v3262 = vrot.slane %v3123, 1
        %v3263 = vrot.slane %v3125, 1
        %v3264 = vrot.slane %v3127, 1
        %v3265 = vrot.slane %v3129, 1
        %v3266 = vrot.slane %v3131, 1
        %v3267 = vrot.slane %v3133, 1
        %v3268 = vrot.slane %v3135, 1
        %v3269 = vrot.slane %v3137, 1
        %v3270 = vrot.slane %v3139, 1
        %v3271 = vrot.slane %v3141, 1
        %v3272 = vrot.slane %v3143, 1
        %v3273 = vrot.slane %v3145, 1
        %v3274 = vsel %vm753, %v3242, %v3258
        %v3275 = vsel %vm753, %v3243, %v3259
        %v3276 = vsel %vm753, %v3244, %v3260
        %v3277 = vsel %vm753, %v3245, %v3261
        %v3278 = vsel %vm753, %v3246, %v3262
        %v3279 = vsel %vm753, %v3247, %v3263
        %v3280 = vsel %vm753, %v3248, %v3264
        %v3281 = vsel %vm753, %v3249, %v3265
        %v3282 = vsel %vm753, %v3250, %v3266
        %v3283 = vsel %vm753, %v3251, %v3267
        %v3284 = vsel %vm753, %v3252, %v3268
        %v3285 = vsel %vm753, %v3253, %v3269
        %v3286 = vsel %vm753, %v3254, %v3270
        %v3287 = vsel %vm753, %v3255, %v3271
        %v3288 = vsel %vm753, %v3256, %v3272
        %v3289 = vsel %vm753, %v3257, %v3273
        %v3290 = vsel %vm753, %v3258, %v3242
        %v3291 = vsel %vm753, %v3259, %v3243
        %v3292 = vsel %vm753, %v3260, %v3244
        %v3293 = vsel %vm753, %v3261, %v3245
        %v3294 = vsel %vm753, %v3262, %v3246
        %v3295 = vsel %vm753, %v3263, %v3247
        %v3296 = vsel %vm753, %v3264, %v3248
        %v3297 = vsel %vm753, %v3265, %v3249
        %v3298 = vsel %vm753, %v3266, %v3250
        %v3299 = vsel %vm753, %v3267, %v3251
        %v3300 = vsel %vm753, %v3268, %v3252
        %v3301 = vsel %vm753, %v3269, %v3253
        %v3302 = vsel %vm753, %v3270, %v3254
        %v3303 = vsel %vm753, %v3271, %v3255
        %v3304 = vsel %vm753, %v3272, %v3256
        %v3305 = vsel %vm753, %v3273, %v3257
        %v3306 = vsel %vm786, 0.0, %v3274
        %v3307 = vsel %vm787, 0.0, %v3290
        %v3308 = vsel %vm786, 0.0, %v3275
        %v3309 = vsel %vm787, 0.0, %v3291
        %v3310 = vsel %vm786, 0.0, %v3276
        %v3311 = vsel %vm787, 0.0, %v3292
        %v3312 = vsel %vm786, 0.0, %v3277
        %v3313 = vsel %vm787, 0.0, %v3293
        %v3314 = vsel %vm786, 0.0, %v3278
        %v3315 = vsel %vm787, 0.0, %v3294
        %v3316 = vsel %vm786, 0.0, %v3279
        %v3317 = vsel %vm787, 0.0, %v3295
        %v3318 = vsel %vm786, 0.0, %v3280
        %v3319 = vsel %vm787, 0.0, %v3296
        %v3320 = vsel %vm786, 0.0, %v3281
        %v3321 = vsel %vm787, 0.0, %v3297
        %v3322 = vsel %vm786, 0.0, %v3282
        %v3323 = vsel %vm787, 0.0, %v3298
        %v3324 = vsel %vm786, 0.0, %v3283
        %v3325 = vsel %vm787, 0.0, %v3299
        %v3326 = vsel %vm786, 0.0, %v3284
        %v3327 = vsel %vm787, 0.0, %v3300
        %v3328 = vsel %vm786, 0.0, %v3285
        %v3329 = vsel %vm787, 0.0, %v3301
        %v3330 = vsel %vm786, 0.0, %v3286
        %v3331 = vsel %vm787, 0.0, %v3302
        %v3332 = vsel %vm786, 0.0, %v3287
        %v3333 = vsel %vm787, 0.0, %v3303
        %v3334 = vsel %vm786, 0.0, %v3288
        %v3335 = vsel %vm787, 0.0, %v3304
        %v3336 = vsel %vm786, 0.0, %v3289
        %v3337 = vsel %vm787, 0.0, %v3305
        %v3338 = vld [vmem:[%s3081] sm:$0xff]
        %v3339 = vld [vmem:[%s3081 + $0x8] sm:$0xff]
        %v3340 = vld [vmem:[%s3081 + $0x10] sm:$0xff]
        %v3341 = vld [vmem:[%s3081 + $0x18] sm:$0xff]
        %v3342 = vld [vmem:[%s3081 + $0x20] sm:$0xff]
        %v3343 = vld [vmem:[%s3081 + $0x28] sm:$0xff]
        %v3344 = vld [vmem:[%s3081 + $0x30] sm:$0xff]
        %v3345 = vld [vmem:[%s3081 + $0x38] sm:$0xff]
        %v3346 = vld [vmem:[%s3081 + $0x40] sm:$0xff]
        %v3347 = vld [vmem:[%s3081 + $0x48] sm:$0xff]
        %v3348 = vld [vmem:[%s3081 + $0x50] sm:$0xff]
        %v3349 = vld [vmem:[%s3081 + $0x58] sm:$0xff]
        %v3350 = vld [vmem:[%s3081 + $0x60] sm:$0xff]
        %v3351 = vld [vmem:[%s3081 + $0x68] sm:$0xff]
        %v3352 = vld [vmem:[%s3081 + $0x70] sm:$0xff]
        %v3353 = vld [vmem:[%s3081 + $0x78] sm:$0xff]
        %v3354 = vld [vmem:[%s3081 + $0x80] sm:$0xff]
        %v3355 = vld [vmem:[%s3081 + $0x88] sm:$0xff]
        %v3356 = vld [vmem:[%s3081 + $0x90] sm:$0xff]
        %v3357 = vld [vmem:[%s3081 + $0x98] sm:$0xff]
        %v3358 = vld [vmem:[%s3081 + $0xa0] sm:$0xff]
        %v3359 = vld [vmem:[%s3081 + $0xa8] sm:$0xff]
        %v3360 = vld [vmem:[%s3081 + $0xb0] sm:$0xff]
        %v3361 = vld [vmem:[%s3081 + $0xb8] sm:$0xff]
        %v3362 = vld [vmem:[%s3081 + $0xc0] sm:$0xff]
        %v3363 = vld [vmem:[%s3081 + $0xc8] sm:$0xff]
        %v3364 = vld [vmem:[%s3081 + $0xd0] sm:$0xff]
        %v3365 = vld [vmem:[%s3081 + $0xd8] sm:$0xff]
        %v3366 = vld [vmem:[%s3081 + $0xe0] sm:$0xff]
        %v3367 = vld [vmem:[%s3081 + $0xe8] sm:$0xff]
        %v3368 = vld [vmem:[%s3081 + $0xf0] sm:$0xff]
        %v3369 = vld [vmem:[%s3081 + $0xf8] sm:$0xff]
        %v3370 = vrot.slane %v3338, 7
        %v3371 = vrot.slane %v3340, 7
        %v3372 = vrot.slane %v3342, 7
        %v3373 = vrot.slane %v3344, 7
        %v3374 = vrot.slane %v3346, 7
        %v3375 = vrot.slane %v3348, 7
        %v3376 = vrot.slane %v3350, 7
        %v3377 = vrot.slane %v3352, 7
        %v3378 = vrot.slane %v3354, 7
        %v3379 = vrot.slane %v3356, 7
        %v3380 = vrot.slane %v3358, 7
        %v3381 = vrot.slane %v3360, 7
        %v3382 = vrot.slane %v3362, 7
        %v3383 = vrot.slane %v3364, 7
        %v3384 = vrot.slane %v3366, 7
        %v3385 = vrot.slane %v3368, 7
        %v3386 = vrot.slane %v3339, 7
        %v3387 = vrot.slane %v3341, 7
        %v3388 = vrot.slane %v3343, 7
        %v3389 = vrot.slane %v3345, 7
        %v3390 = vrot.slane %v3347, 7
        %v3391 = vrot.slane %v3349, 7
        %v3392 = vrot.slane %v3351, 7
        %v3393 = vrot.slane %v3353, 7
        %v3394 = vrot.slane %v3355, 7
        %v3395 = vrot.slane %v3357, 7
        %v3396 = vrot.slane %v3359, 7
        %v3397 = vrot.slane %v3361, 7
        %v3398 = vrot.slane %v3363, 7
        %v3399 = vrot.slane %v3365, 7
        %v3400 = vrot.slane %v3367, 7
        %v3401 = vrot.slane %v3369, 7
        %v3402 = vsel %vm654, %v3370, %v3386
        %v3403 = vsel %vm654, %v3371, %v3387
        %v3404 = vsel %vm654, %v3372, %v3388
        %v3405 = vsel %vm654, %v3373, %v3389
        %v3406 = vsel %vm654, %v3374, %v3390
        %v3407 = vsel %vm654, %v3375, %v3391
        %v3408 = vsel %vm654, %v3376, %v3392
        %v3409 = vsel %vm654, %v3377, %v3393
        %v3410 = vsel %vm654, %v3378, %v3394
        %v3411 = vsel %vm654, %v3379, %v3395
        %v3412 = vsel %vm654, %v3380, %v3396
        %v3413 = vsel %vm654, %v3381, %v3397
        %v3414 = vsel %vm654, %v3382, %v3398
        %v3415 = vsel %vm654, %v3383, %v3399
        %v3416 = vsel %vm654, %v3384, %v3400
        %v3417 = vsel %vm654, %v3385, %v3401
        %v3418 = vsel %vm654, %v3386, %v3370
        %v3419 = vsel %vm654, %v3387, %v3371
        %v3420 = vsel %vm654, %v3388, %v3372
        %v3421 = vsel %vm654, %v3389, %v3373
        %v3422 = vsel %vm654, %v3390, %v3374
        %v3423 = vsel %vm654, %v3391, %v3375
        %v3424 = vsel %vm654, %v3392, %v3376
        %v3425 = vsel %vm654, %v3393, %v3377
        %v3426 = vsel %vm654, %v3394, %v3378
        %v3427 = vsel %vm654, %v3395, %v3379
        %v3428 = vsel %vm654, %v3396, %v3380
        %v3429 = vsel %vm654, %v3397, %v3381
        %v3430 = vsel %vm654, %v3398, %v3382
        %v3431 = vsel %vm654, %v3399, %v3383
        %v3432 = vsel %vm654, %v3400, %v3384
        %v3433 = vsel %vm654, %v3401, %v3385
        %v3434 = vsel %vm687, 0.0, %v3418
        %v3435 = vsel %vm688, 0.0, %v3402
        %v3436 = vsel %vm687, 0.0, %v3419
        %v3437 = vsel %vm688, 0.0, %v3403
        %v3438 = vsel %vm687, 0.0, %v3420
        %v3439 = vsel %vm688, 0.0, %v3404
        %v3440 = vsel %vm687, 0.0, %v3421
        %v3441 = vsel %vm688, 0.0, %v3405
        %v3442 = vsel %vm687, 0.0, %v3422
        %v3443 = vsel %vm688, 0.0, %v3406
        %v3444 = vsel %vm687, 0.0, %v3423
        %v3445 = vsel %vm688, 0.0, %v3407
        %v3446 = vsel %vm687, 0.0, %v3424
        %v3447 = vsel %vm688, 0.0, %v3408
        %v3448 = vsel %vm687, 0.0, %v3425
        %v3449 = vsel %vm688, 0.0, %v3409
        %v3450 = vsel %vm687, 0.0, %v3426
        %v3451 = vsel %vm688, 0.0, %v3410
        %v3452 = vsel %vm687, 0.0, %v3427
        %v3453 = vsel %vm688, 0.0, %v3411
        %v3454 = vsel %vm687, 0.0, %v3428
        %v3455 = vsel %vm688, 0.0, %v3412
        %v3456 = vsel %vm687, 0.0, %v3429
        %v3457 = vsel %vm688, 0.0, %v3413
        %v3458 = vsel %vm687, 0.0, %v3430
        %v3459 = vsel %vm688, 0.0, %v3414
        %v3460 = vsel %vm687, 0.0, %v3431
        %v3461 = vsel %vm688, 0.0, %v3415
        %v3462 = vsel %vm687, 0.0, %v3432
        %v3463 = vsel %vm688, 0.0, %v3416
        %v3464 = vsel %vm687, 0.0, %v3433
        %v3465 = vsel %vm688, 0.0, %v3417
        %v3466 = vrot.slane %v3338, 1
        %v3467 = vrot.slane %v3340, 1
        %v3468 = vrot.slane %v3342, 1
        %v3469 = vrot.slane %v3344, 1
        %v3470 = vrot.slane %v3346, 1
        %v3471 = vrot.slane %v3348, 1
        %v3472 = vrot.slane %v3350, 1
        %v3473 = vrot.slane %v3352, 1
        %v3474 = vrot.slane %v3354, 1
        %v3475 = vrot.slane %v3356, 1
        %v3476 = vrot.slane %v3358, 1
        %v3477 = vrot.slane %v3360, 1
        %v3478 = vrot.slane %v3362, 1
        %v3479 = vrot.slane %v3364, 1
        %v3480 = vrot.slane %v3366, 1
        %v3481 = vrot.slane %v3368, 1
        %v3482 = vrot.slane %v3339, 1
        %v3483 = vrot.slane %v3341, 1
        %v3484 = vrot.slane %v3343, 1
        %v3485 = vrot.slane %v3345, 1
        %v3486 = vrot.slane %v3347, 1
        %v3487 = vrot.slane %v3349, 1
        %v3488 = vrot.slane %v3351, 1
        %v3489 = vrot.slane %v3353, 1
        %v3490 = vrot.slane %v3355, 1
        %v3491 = vrot.slane %v3357, 1
        %v3492 = vrot.slane %v3359, 1
        %v3493 = vrot.slane %v3361, 1
        %v3494 = vrot.slane %v3363, 1
        %v3495 = vrot.slane %v3365, 1
        %v3496 = vrot.slane %v3367, 1
        %v3497 = vrot.slane %v3369, 1
        %v3498 = vsel %vm753, %v3466, %v3482
        %v3499 = vsel %vm753, %v3467, %v3483
        %v3500 = vsel %vm753, %v3468, %v3484
        %v3501 = vsel %vm753, %v3469, %v3485
        %v3502 = vsel %vm753, %v3470, %v3486
        %v3503 = vsel %vm753, %v3471, %v3487
        %v3504 = vsel %vm753, %v3472, %v3488
        %v3505 = vsel %vm753, %v3473, %v3489
        %v3506 = vsel %vm753, %v3474, %v3490
        %v3507 = vsel %vm753, %v3475, %v3491
        %v3508 = vsel %vm753, %v3476, %v3492
        %v3509 = vsel %vm753, %v3477, %v3493
        %v3510 = vsel %vm753, %v3478, %v3494
        %v3511 = vsel %vm753, %v3479, %v3495
        %v3512 = vsel %vm753, %v3480, %v3496
        %v3513 = vsel %vm753, %v3481, %v3497
        %v3514 = vsel %vm753, %v3482, %v3466
        %v3515 = vsel %vm753, %v3483, %v3467
        %v3516 = vsel %vm753, %v3484, %v3468
        %v3517 = vsel %vm753, %v3485, %v3469
        %v3518 = vsel %vm753, %v3486, %v3470
        %v3519 = vsel %vm753, %v3487, %v3471
        %v3520 = vsel %vm753, %v3488, %v3472
        %v3521 = vsel %vm753, %v3489, %v3473
        %v3522 = vsel %vm753, %v3490, %v3474
        %v3523 = vsel %vm753, %v3491, %v3475
        %v3524 = vsel %vm753, %v3492, %v3476
        %v3525 = vsel %vm753, %v3493, %v3477
        %v3526 = vsel %vm753, %v3494, %v3478
        %v3527 = vsel %vm753, %v3495, %v3479
        %v3528 = vsel %vm753, %v3496, %v3480
        %v3529 = vsel %vm753, %v3497, %v3481
        %v3530 = vsel %vm786, 0.0, %v3498
        %v3531 = vsel %vm787, 0.0, %v3514
        %v3532 = vsel %vm786, 0.0, %v3499
        %v3533 = vsel %vm787, 0.0, %v3515
        %v3534 = vsel %vm786, 0.0, %v3500
        %v3535 = vsel %vm787, 0.0, %v3516
        %v3536 = vsel %vm786, 0.0, %v3501
        %v3537 = vsel %vm787, 0.0, %v3517
        %v3538 = vsel %vm786, 0.0, %v3502
        %v3539 = vsel %vm787, 0.0, %v3518
        %v3540 = vsel %vm786, 0.0, %v3503
        %v3541 = vsel %vm787, 0.0, %v3519
        %v3542 = vsel %vm786, 0.0, %v3504
        %v3543 = vsel %vm787, 0.0, %v3520
        %v3544 = vsel %vm786, 0.0, %v3505
        %v3545 = vsel %vm787, 0.0, %v3521
        %v3546 = vsel %vm786, 0.0, %v3506
        %v3547 = vsel %vm787, 0.0, %v3522
        %v3548 = vsel %vm786, 0.0, %v3507
        %v3549 = vsel %vm787, 0.0, %v3523
        %v3550 = vsel %vm786, 0.0, %v3508
        %v3551 = vsel %vm787, 0.0, %v3524
        %v3552 = vsel %vm786, 0.0, %v3509
        %v3553 = vsel %vm787, 0.0, %v3525
        %v3554 = vsel %vm786, 0.0, %v3510
        %v3555 = vsel %vm787, 0.0, %v3526
        %v3556 = vsel %vm786, 0.0, %v3511
        %v3557 = vsel %vm787, 0.0, %v3527
        %v3558 = vsel %vm786, 0.0, %v3512
        %v3559 = vsel %vm787, 0.0, %v3528
        %v3560 = vsel %vm786, 0.0, %v3513
        %v3561 = vsel %vm787, 0.0, %v3529
        %s3562 = scalar_lea.vmem [#allocation3], 32
        %v3563 = vld [vmem:[%s3562] sm:$0xff]
        %v3564 = vld [vmem:[%s3562 + $0x8] sm:$0xff]
        %v3565 = vld [vmem:[%s3562 + $0x10] sm:$0xff]
        %v3566 = vld [vmem:[%s3562 + $0x18] sm:$0xff]
        %v3567 = vld [vmem:[%s3562 + $0x20] sm:$0xff]
        %v3568 = vld [vmem:[%s3562 + $0x28] sm:$0xff]
        %v3569 = vld [vmem:[%s3562 + $0x30] sm:$0xff]
        %v3570 = vld [vmem:[%s3562 + $0x38] sm:$0xff]
        %v3571 = vld [vmem:[%s3562 + $0x40] sm:$0xff]
        %v3572 = vld [vmem:[%s3562 + $0x48] sm:$0xff]
        %v3573 = vld [vmem:[%s3562 + $0x50] sm:$0xff]
        %v3574 = vld [vmem:[%s3562 + $0x58] sm:$0xff]
        %v3575 = vld [vmem:[%s3562 + $0x60] sm:$0xff]
        %v3576 = vld [vmem:[%s3562 + $0x68] sm:$0xff]
        %v3577 = vld [vmem:[%s3562 + $0x70] sm:$0xff]
        %v3578 = vld [vmem:[%s3562 + $0x78] sm:$0xff]
        %v3579 = vld [vmem:[%s3562 + $0x80] sm:$0xff]
        %v3580 = vld [vmem:[%s3562 + $0x88] sm:$0xff]
        %v3581 = vld [vmem:[%s3562 + $0x90] sm:$0xff]
        %v3582 = vld [vmem:[%s3562 + $0x98] sm:$0xff]
        %v3583 = vld [vmem:[%s3562 + $0xa0] sm:$0xff]
        %v3584 = vld [vmem:[%s3562 + $0xa8] sm:$0xff]
        %v3585 = vld [vmem:[%s3562 + $0xb0] sm:$0xff]
        %v3586 = vld [vmem:[%s3562 + $0xb8] sm:$0xff]
        %v3587 = vld [vmem:[%s3562 + $0xc0] sm:$0xff]
        %v3588 = vld [vmem:[%s3562 + $0xc8] sm:$0xff]
        %v3589 = vld [vmem:[%s3562 + $0xd0] sm:$0xff]
        %v3590 = vld [vmem:[%s3562 + $0xd8] sm:$0xff]
        %v3591 = vld [vmem:[%s3562 + $0xe0] sm:$0xff]
        %v3592 = vld [vmem:[%s3562 + $0xe8] sm:$0xff]
        %v3593 = vld [vmem:[%s3562 + $0xf0] sm:$0xff]
        %v3594 = vld [vmem:[%s3562 + $0xf8] sm:$0xff]
        %v3595 = vrot.slane %v3563, 7
        %v3596 = vrot.slane %v3565, 7
        %v3597 = vrot.slane %v3567, 7
        %v3598 = vrot.slane %v3569, 7
        %v3599 = vrot.slane %v3571, 7
        %v3600 = vrot.slane %v3573, 7
        %v3601 = vrot.slane %v3575, 7
        %v3602 = vrot.slane %v3577, 7
        %v3603 = vrot.slane %v3579, 7
        %v3604 = vrot.slane %v3581, 7
        %v3605 = vrot.slane %v3583, 7
        %v3606 = vrot.slane %v3585, 7
        %v3607 = vrot.slane %v3587, 7
        %v3608 = vrot.slane %v3589, 7
        %v3609 = vrot.slane %v3591, 7
        %v3610 = vrot.slane %v3593, 7
        %v3611 = vrot.slane %v3564, 7
        %v3612 = vrot.slane %v3566, 7
        %v3613 = vrot.slane %v3568, 7
        %v3614 = vrot.slane %v3570, 7
        %v3615 = vrot.slane %v3572, 7
        %v3616 = vrot.slane %v3574, 7
        %v3617 = vrot.slane %v3576, 7
        %v3618 = vrot.slane %v3578, 7
        %v3619 = vrot.slane %v3580, 7
        %v3620 = vrot.slane %v3582, 7
        %v3621 = vrot.slane %v3584, 7
        %v3622 = vrot.slane %v3586, 7
        %v3623 = vrot.slane %v3588, 7
        %v3624 = vrot.slane %v3590, 7
        %v3625 = vrot.slane %v3592, 7
        %v3626 = vrot.slane %v3594, 7
        %v3627 = vsel %vm654, %v3595, %v3611
        %v3628 = vsel %vm654, %v3596, %v3612
        %v3629 = vsel %vm654, %v3597, %v3613
        %v3630 = vsel %vm654, %v3598, %v3614
        %v3631 = vsel %vm654, %v3599, %v3615
        %v3632 = vsel %vm654, %v3600, %v3616
        %v3633 = vsel %vm654, %v3601, %v3617
        %v3634 = vsel %vm654, %v3602, %v3618
        %v3635 = vsel %vm654, %v3603, %v3619
        %v3636 = vsel %vm654, %v3604, %v3620
        %v3637 = vsel %vm654, %v3605, %v3621
        %v3638 = vsel %vm654, %v3606, %v3622
        %v3639 = vsel %vm654, %v3607, %v3623
        %v3640 = vsel %vm654, %v3608, %v3624
        %v3641 = vsel %vm654, %v3609, %v3625
        %v3642 = vsel %vm654, %v3610, %v3626
        %v3643 = vsel %vm654, %v3611, %v3595
        %v3644 = vsel %vm654, %v3612, %v3596
        %v3645 = vsel %vm654, %v3613, %v3597
        %v3646 = vsel %vm654, %v3614, %v3598
        %v3647 = vsel %vm654, %v3615, %v3599
        %v3648 = vsel %vm654, %v3616, %v3600
        %v3649 = vsel %vm654, %v3617, %v3601
        %v3650 = vsel %vm654, %v3618, %v3602
        %v3651 = vsel %vm654, %v3619, %v3603
        %v3652 = vsel %vm654, %v3620, %v3604
        %v3653 = vsel %vm654, %v3621, %v3605
        %v3654 = vsel %vm654, %v3622, %v3606
        %v3655 = vsel %vm654, %v3623, %v3607
        %v3656 = vsel %vm654, %v3624, %v3608
        %v3657 = vsel %vm654, %v3625, %v3609
        %v3658 = vsel %vm654, %v3626, %v3610
        %v3659 = vsel %vm687, 0.0, %v3643
        %v3660 = vsel %vm688, 0.0, %v3627
        %v3661 = vsel %vm687, 0.0, %v3644
        %v3662 = vsel %vm688, 0.0, %v3628
        %v3663 = vsel %vm687, 0.0, %v3645
        %v3664 = vsel %vm688, 0.0, %v3629
        %v3665 = vsel %vm687, 0.0, %v3646
        %v3666 = vsel %vm688, 0.0, %v3630
        %v3667 = vsel %vm687, 0.0, %v3647
        %v3668 = vsel %vm688, 0.0, %v3631
        %v3669 = vsel %vm687, 0.0, %v3648
        %v3670 = vsel %vm688, 0.0, %v3632
        %v3671 = vsel %vm687, 0.0, %v3649
        %v3672 = vsel %vm688, 0.0, %v3633
        %v3673 = vsel %vm687, 0.0, %v3650
        %v3674 = vsel %vm688, 0.0, %v3634
        %v3675 = vsel %vm687, 0.0, %v3651
        %v3676 = vsel %vm688, 0.0, %v3635
        %v3677 = vsel %vm687, 0.0, %v3652
        %v3678 = vsel %vm688, 0.0, %v3636
        %v3679 = vsel %vm687, 0.0, %v3653
        %v3680 = vsel %vm688, 0.0, %v3637
        %v3681 = vsel %vm687, 0.0, %v3654
        %v3682 = vsel %vm688, 0.0, %v3638
        %v3683 = vsel %vm687, 0.0, %v3655
        %v3684 = vsel %vm688, 0.0, %v3639
        %v3685 = vsel %vm687, 0.0, %v3656
        %v3686 = vsel %vm688, 0.0, %v3640
        %v3687 = vsel %vm687, 0.0, %v3657
        %v3688 = vsel %vm688, 0.0, %v3641
        %v3689 = vsel %vm687, 0.0, %v3658
        %v3690 = vsel %vm688, 0.0, %v3642
        %v3691 = vrot.slane %v3563, 1
        %v3692 = vrot.slane %v3565, 1
        %v3693 = vrot.slane %v3567, 1
        %v3694 = vrot.slane %v3569, 1
        %v3695 = vrot.slane %v3571, 1
        %v3696 = vrot.slane %v3573, 1
        %v3697 = vrot.slane %v3575, 1
        %v3698 = vrot.slane %v3577, 1
        %v3699 = vrot.slane %v3579, 1
        %v3700 = vrot.slane %v3581, 1
        %v3701 = vrot.slane %v3583, 1
        %v3702 = vrot.slane %v3585, 1
        %v3703 = vrot.slane %v3587, 1
        %v3704 = vrot.slane %v3589, 1
        %v3705 = vrot.slane %v3591, 1
        %v3706 = vrot.slane %v3593, 1
        %v3707 = vrot.slane %v3564, 1
        %v3708 = vrot.slane %v3566, 1
        %v3709 = vrot.slane %v3568, 1
        %v3710 = vrot.slane %v3570, 1
        %v3711 = vrot.slane %v3572, 1
        %v3712 = vrot.slane %v3574, 1
        %v3713 = vrot.slane %v3576, 1
        %v3714 = vrot.slane %v3578, 1
        %v3715 = vrot.slane %v3580, 1
        %v3716 = vrot.slane %v3582, 1
        %v3717 = vrot.slane %v3584, 1
        %v3718 = vrot.slane %v3586, 1
        %v3719 = vrot.slane %v3588, 1
        %v3720 = vrot.slane %v3590, 1
        %v3721 = vrot.slane %v3592, 1
        %v3722 = vrot.slane %v3594, 1
        %v3723 = vsel %vm753, %v3691, %v3707
        %v3724 = vsel %vm753, %v3692, %v3708
        %v3725 = vsel %vm753, %v3693, %v3709
        %v3726 = vsel %vm753, %v3694, %v3710
        %v3727 = vsel %vm753, %v3695, %v3711
        %v3728 = vsel %vm753, %v3696, %v3712
        %v3729 = vsel %vm753, %v3697, %v3713
        %v3730 = vsel %vm753, %v3698, %v3714
        %v3731 = vsel %vm753, %v3699, %v3715
        %v3732 = vsel %vm753, %v3700, %v3716
        %v3733 = vsel %vm753, %v3701, %v3717
        %v3734 = vsel %vm753, %v3702, %v3718
        %v3735 = vsel %vm753, %v3703, %v3719
        %v3736 = vsel %vm753, %v3704, %v3720
        %v3737 = vsel %vm753, %v3705, %v3721
        %v3738 = vsel %vm753, %v3706, %v3722
        %v3739 = vsel %vm753, %v3707, %v3691
        %v3740 = vsel %vm753, %v3708, %v3692
        %v3741 = vsel %vm753, %v3709, %v3693
        %v3742 = vsel %vm753, %v3710, %v3694
        %v3743 = vsel %vm753, %v3711, %v3695
        %v3744 = vsel %vm753, %v3712, %v3696
        %v3745 = vsel %vm753, %v3713, %v3697
        %v3746 = vsel %vm753, %v3714, %v3698
        %v3747 = vsel %vm753, %v3715, %v3699
        %v3748 = vsel %vm753, %v3716, %v3700
        %v3749 = vsel %vm753, %v3717, %v3701
        %v3750 = vsel %vm753, %v3718, %v3702
        %v3751 = vsel %vm753, %v3719, %v3703
        %v3752 = vsel %vm753, %v3720, %v3704
        %v3753 = vsel %vm753, %v3721, %v3705
        %v3754 = vsel %vm753, %v3722, %v3706
        %v3755 = vsel %vm786, 0.0, %v3723
        %v3756 = vsel %vm787, 0.0, %v3739
        %v3757 = vsel %vm786, 0.0, %v3724
        %v3758 = vsel %vm787, 0.0, %v3740
        %v3759 = vsel %vm786, 0.0, %v3725
        %v3760 = vsel %vm787, 0.0, %v3741
        %v3761 = vsel %vm786, 0.0, %v3726
        %v3762 = vsel %vm787, 0.0, %v3742
        %v3763 = vsel %vm786, 0.0, %v3727
        %v3764 = vsel %vm787, 0.0, %v3743
        %v3765 = vsel %vm786, 0.0, %v3728
        %v3766 = vsel %vm787, 0.0, %v3744
        %v3767 = vsel %vm786, 0.0, %v3729
        %v3768 = vsel %vm787, 0.0, %v3745
        %v3769 = vsel %vm786, 0.0, %v3730
        %v3770 = vsel %vm787, 0.0, %v3746
        %v3771 = vsel %vm786, 0.0, %v3731
        %v3772 = vsel %vm787, 0.0, %v3747
        %v3773 = vsel %vm786, 0.0, %v3732
        %v3774 = vsel %vm787, 0.0, %v3748
        %v3775 = vsel %vm786, 0.0, %v3733
        %v3776 = vsel %vm787, 0.0, %v3749
        %v3777 = vsel %vm786, 0.0, %v3734
        %v3778 = vsel %vm787, 0.0, %v3750
        %v3779 = vsel %vm786, 0.0, %v3735
        %v3780 = vsel %vm787, 0.0, %v3751
        %v3781 = vsel %vm786, 0.0, %v3736
        %v3782 = vsel %vm787, 0.0, %v3752
        %v3783 = vsel %vm786, 0.0, %v3737
        %v3784 = vsel %vm787, 0.0, %v3753
        %v3785 = vsel %vm786, 0.0, %v3738
        %v3786 = vsel %vm787, 0.0, %v3754
        %3819 = vrot.lane.b32.xlu0 %v3114, 32
        %v3820 = vpop.permute.xlu0 %3819
        %3821 = vrot.lane.b32.xlu0 %v3115, 32
        %v3822 = vpop.permute.xlu0 %3821
        %3823 = vrot.lane.b32.xlu0 %v3116, 32
        %v3824 = vpop.permute.xlu0 %3823
        %3825 = vrot.lane.b32.xlu0 %v3117, 32
        %v3826 = vpop.permute.xlu0 %3825
        %3827 = vrot.lane.b32.xlu0 %v3118, 32
        %v3828 = vpop.permute.xlu0 %3827
        %3829 = vrot.lane.b32.xlu0 %v3119, 32
        %v3830 = vpop.permute.xlu0 %3829
        %3831 = vrot.lane.b32.xlu0 %v3120, 32
        %v3832 = vpop.permute.xlu0 %3831
        %3833 = vrot.lane.b32.xlu0 %v3121, 32
        %v3834 = vpop.permute.xlu0 %3833
        %3835 = vrot.lane.b32.xlu0 %v3122, 32
        %v3836 = vpop.permute.xlu0 %3835
        %3837 = vrot.lane.b32.xlu0 %v3123, 32
        %v3838 = vpop.permute.xlu0 %3837
        %3839 = vrot.lane.b32.xlu0 %v3124, 32
        %v3840 = vpop.permute.xlu0 %3839
        %3841 = vrot.lane.b32.xlu0 %v3125, 32
        %v3842 = vpop.permute.xlu0 %3841
        %3843 = vrot.lane.b32.xlu0 %v3126, 32
        %v3844 = vpop.permute.xlu0 %3843
        %3845 = vrot.lane.b32.xlu0 %v3127, 32
        %v3846 = vpop.permute.xlu0 %3845
        %3847 = vrot.lane.b32.xlu0 %v3128, 32
        %v3848 = vpop.permute.xlu0 %3847
        %3849 = vrot.lane.b32.xlu0 %v3129, 32
        %v3850 = vpop.permute.xlu0 %3849
        %3851 = vrot.lane.b32.xlu0 %v3130, 32
        %v3852 = vpop.permute.xlu0 %3851
        %3853 = vrot.lane.b32.xlu0 %v3131, 32
        %v3854 = vpop.permute.xlu0 %3853
        %3855 = vrot.lane.b32.xlu0 %v3132, 32
        %v3856 = vpop.permute.xlu0 %3855
        %3857 = vrot.lane.b32.xlu0 %v3133, 32
        %v3858 = vpop.permute.xlu0 %3857
        %3859 = vrot.lane.b32.xlu0 %v3134, 32
        %v3860 = vpop.permute.xlu0 %3859
        %3861 = vrot.lane.b32.xlu0 %v3135, 32
        %v3862 = vpop.permute.xlu0 %3861
        %3863 = vrot.lane.b32.xlu0 %v3136, 32
        %v3864 = vpop.permute.xlu0 %3863
        %3865 = vrot.lane.b32.xlu0 %v3137, 32
        %v3866 = vpop.permute.xlu0 %3865
        %3867 = vrot.lane.b32.xlu0 %v3138, 32
        %v3868 = vpop.permute.xlu0 %3867
        %3869 = vrot.lane.b32.xlu0 %v3139, 32
        %v3870 = vpop.permute.xlu0 %3869
        %3871 = vrot.lane.b32.xlu0 %v3140, 32
        %v3872 = vpop.permute.xlu0 %3871
        %3873 = vrot.lane.b32.xlu0 %v3141, 32
        %v3874 = vpop.permute.xlu0 %3873
        %3875 = vrot.lane.b32.xlu0 %v3142, 32
        %v3876 = vpop.permute.xlu0 %3875
        %3877 = vrot.lane.b32.xlu0 %v3143, 32
        %v3878 = vpop.permute.xlu0 %3877
        %3879 = vrot.lane.b32.xlu0 %v3144, 32
        %v3880 = vpop.permute.xlu0 %3879
        %3881 = vrot.lane.b32.xlu0 %v3145, 32
        %v3882 = vpop.permute.xlu0 %3881
        %3947 = vrot.lane.b32.xlu0 %v3306, 64
        %v3948 = vpop.permute.xlu0 %3947
        %3949 = vrot.lane.b32.xlu0 %v3307, 64
        %v3950 = vpop.permute.xlu0 %3949
        %3951 = vrot.lane.b32.xlu0 %v3308, 64
        %v3952 = vpop.permute.xlu0 %3951
        %3953 = vrot.lane.b32.xlu0 %v3309, 64
        %v3954 = vpop.permute.xlu0 %3953
        %3955 = vrot.lane.b32.xlu0 %v3310, 64
        %v3956 = vpop.permute.xlu0 %3955
        %3957 = vrot.lane.b32.xlu0 %v3311, 64
        %v3958 = vpop.permute.xlu0 %3957
        %3959 = vrot.lane.b32.xlu0 %v3312, 64
        %v3960 = vpop.permute.xlu0 %3959
        %3961 = vrot.lane.b32.xlu0 %v3313, 64
        %v3962 = vpop.permute.xlu0 %3961
        %3963 = vrot.lane.b32.xlu0 %v3314, 64
        %v3964 = vpop.permute.xlu0 %3963
        %3965 = vrot.lane.b32.xlu0 %v3315, 64
        %v3966 = vpop.permute.xlu0 %3965
        %3967 = vrot.lane.b32.xlu0 %v3316, 64
        %v3968 = vpop.permute.xlu0 %3967
        %3969 = vrot.lane.b32.xlu0 %v3317, 64
        %v3970 = vpop.permute.xlu0 %3969
        %3971 = vrot.lane.b32.xlu0 %v3318, 64
        %v3972 = vpop.permute.xlu0 %3971
        %3973 = vrot.lane.b32.xlu0 %v3319, 64
        %v3974 = vpop.permute.xlu0 %3973
        %3975 = vrot.lane.b32.xlu0 %v3320, 64
        %v3976 = vpop.permute.xlu0 %3975
        %3977 = vrot.lane.b32.xlu0 %v3321, 64
        %v3978 = vpop.permute.xlu0 %3977
        %3979 = vrot.lane.b32.xlu0 %v3322, 64
        %v3980 = vpop.permute.xlu0 %3979
        %3981 = vrot.lane.b32.xlu0 %v3323, 64
        %v3982 = vpop.permute.xlu0 %3981
        %3983 = vrot.lane.b32.xlu0 %v3324, 64
        %v3984 = vpop.permute.xlu0 %3983
        %3985 = vrot.lane.b32.xlu0 %v3325, 64
        %v3986 = vpop.permute.xlu0 %3985
        %3987 = vrot.lane.b32.xlu0 %v3326, 64
        %v3988 = vpop.permute.xlu0 %3987
        %3989 = vrot.lane.b32.xlu0 %v3327, 64
        %v3990 = vpop.permute.xlu0 %3989
        %3991 = vrot.lane.b32.xlu0 %v3328, 64
        %v3992 = vpop.permute.xlu0 %3991
        %3993 = vrot.lane.b32.xlu0 %v3329, 64
        %v3994 = vpop.permute.xlu0 %3993
        %3995 = vrot.lane.b32.xlu0 %v3330, 64
        %v3996 = vpop.permute.xlu0 %3995
        %3997 = vrot.lane.b32.xlu0 %v3331, 64
        %v3998 = vpop.permute.xlu0 %3997
        %3999 = vrot.lane.b32.xlu0 %v3332, 64
        %v4000 = vpop.permute.xlu0 %3999
        %4001 = vrot.lane.b32.xlu0 %v3333, 64
        %v4002 = vpop.permute.xlu0 %4001
        %4003 = vrot.lane.b32.xlu0 %v3334, 64
        %v4004 = vpop.permute.xlu0 %4003
        %4005 = vrot.lane.b32.xlu0 %v3335, 64
        %v4006 = vpop.permute.xlu0 %4005
        %4007 = vrot.lane.b32.xlu0 %v3336, 64
        %v4008 = vpop.permute.xlu0 %4007
        %4009 = vrot.lane.b32.xlu0 %v3337, 64
        %v4010 = vpop.permute.xlu0 %4009
        %4075 = vrot.lane.b32.xlu0 %v3434, 96
        %v4076 = vpop.permute.xlu0 %4075
        %4077 = vrot.lane.b32.xlu0 %v3435, 96
        %v4078 = vpop.permute.xlu0 %4077
        %4079 = vrot.lane.b32.xlu0 %v3436, 96
        %v4080 = vpop.permute.xlu0 %4079
        %4081 = vrot.lane.b32.xlu0 %v3437, 96
        %v4082 = vpop.permute.xlu0 %4081
        %4083 = vrot.lane.b32.xlu0 %v3438, 96
        %v4084 = vpop.permute.xlu0 %4083
        %4085 = vrot.lane.b32.xlu0 %v3439, 96
        %v4086 = vpop.permute.xlu0 %4085
        %4087 = vrot.lane.b32.xlu0 %v3440, 96
        %v4088 = vpop.permute.xlu0 %4087
        %4089 = vrot.lane.b32.xlu0 %v3441, 96
        %v4090 = vpop.permute.xlu0 %4089
        %4091 = vrot.lane.b32.xlu0 %v3442, 96
        %v4092 = vpop.permute.xlu0 %4091
        %4093 = vrot.lane.b32.xlu0 %v3443, 96
        %v4094 = vpop.permute.xlu0 %4093
        %4095 = vrot.lane.b32.xlu0 %v3444, 96
        %v4096 = vpop.permute.xlu0 %4095
        %4097 = vrot.lane.b32.xlu0 %v3445, 96
        %v4098 = vpop.permute.xlu0 %4097
        %4099 = vrot.lane.b32.xlu0 %v3446, 96
        %v4100 = vpop.permute.xlu0 %4099
        %4101 = vrot.lane.b32.xlu0 %v3447, 96
        %v4102 = vpop.permute.xlu0 %4101
        %4103 = vrot.lane.b32.xlu0 %v3448, 96
        %v4104 = vpop.permute.xlu0 %4103
        %4105 = vrot.lane.b32.xlu0 %v3449, 96
        %v4106 = vpop.permute.xlu0 %4105
        %4107 = vrot.lane.b32.xlu0 %v3450, 96
        %v4108 = vpop.permute.xlu0 %4107
        %4109 = vrot.lane.b32.xlu0 %v3451, 96
        %v4110 = vpop.permute.xlu0 %4109
        %4111 = vrot.lane.b32.xlu0 %v3452, 96
        %v4112 = vpop.permute.xlu0 %4111
        %4113 = vrot.lane.b32.xlu0 %v3453, 96
        %v4114 = vpop.permute.xlu0 %4113
        %4115 = vrot.lane.b32.xlu0 %v3454, 96
        %v4116 = vpop.permute.xlu0 %4115
        %4117 = vrot.lane.b32.xlu0 %v3455, 96
        %v4118 = vpop.permute.xlu0 %4117
        %4119 = vrot.lane.b32.xlu0 %v3456, 96
        %v4120 = vpop.permute.xlu0 %4119
        %4121 = vrot.lane.b32.xlu0 %v3457, 96
        %v4122 = vpop.permute.xlu0 %4121
        %4123 = vrot.lane.b32.xlu0 %v3458, 96
        %v4124 = vpop.permute.xlu0 %4123
        %4125 = vrot.lane.b32.xlu0 %v3459, 96
        %v4126 = vpop.permute.xlu0 %4125
        %4127 = vrot.lane.b32.xlu0 %v3460, 96
        %v4128 = vpop.permute.xlu0 %4127
        %4129 = vrot.lane.b32.xlu0 %v3461, 96
        %v4130 = vpop.permute.xlu0 %4129
        %4131 = vrot.lane.b32.xlu0 %v3462, 96
        %v4132 = vpop.permute.xlu0 %4131
        %4133 = vrot.lane.b32.xlu0 %v3463, 96
        %v4134 = vpop.permute.xlu0 %4133
        %4135 = vrot.lane.b32.xlu0 %v3464, 96
        %v4136 = vpop.permute.xlu0 %4135
        %4137 = vrot.lane.b32.xlu0 %v3465, 96
        %v4138 = vpop.permute.xlu0 %4137
        %4203 = vrot.lane.b32.xlu0 %v3530, 32
        %v4204 = vpop.permute.xlu0 %4203
        %4205 = vrot.lane.b32.xlu0 %v3531, 32
        %v4206 = vpop.permute.xlu0 %4205
        %4207 = vrot.lane.b32.xlu0 %v3532, 32
        %v4208 = vpop.permute.xlu0 %4207
        %4209 = vrot.lane.b32.xlu0 %v3533, 32
        %v4210 = vpop.permute.xlu0 %4209
        %4211 = vrot.lane.b32.xlu0 %v3534, 32
        %v4212 = vpop.permute.xlu0 %4211
        %4213 = vrot.lane.b32.xlu0 %v3535, 32
        %v4214 = vpop.permute.xlu0 %4213
        %4215 = vrot.lane.b32.xlu0 %v3536, 32
        %v4216 = vpop.permute.xlu0 %4215
        %4217 = vrot.lane.b32.xlu0 %v3537, 32
        %v4218 = vpop.permute.xlu0 %4217
        %4219 = vrot.lane.b32.xlu0 %v3538, 32
        %v4220 = vpop.permute.xlu0 %4219
        %4221 = vrot.lane.b32.xlu0 %v3539, 32
        %v4222 = vpop.permute.xlu0 %4221
        %4223 = vrot.lane.b32.xlu0 %v3540, 32
        %v4224 = vpop.permute.xlu0 %4223
        %4225 = vrot.lane.b32.xlu0 %v3541, 32
        %v4226 = vpop.permute.xlu0 %4225
        %4227 = vrot.lane.b32.xlu0 %v3542, 32
        %v4228 = vpop.permute.xlu0 %4227
        %4229 = vrot.lane.b32.xlu0 %v3543, 32
        %v4230 = vpop.permute.xlu0 %4229
        %4231 = vrot.lane.b32.xlu0 %v3544, 32
        %v4232 = vpop.permute.xlu0 %4231
        %4233 = vrot.lane.b32.xlu0 %v3545, 32
        %v4234 = vpop.permute.xlu0 %4233
        %4235 = vrot.lane.b32.xlu0 %v3546, 32
        %v4236 = vpop.permute.xlu0 %4235
        %4237 = vrot.lane.b32.xlu0 %v3547, 32
        %v4238 = vpop.permute.xlu0 %4237
        %4239 = vrot.lane.b32.xlu0 %v3548, 32
        %v4240 = vpop.permute.xlu0 %4239
        %4241 = vrot.lane.b32.xlu0 %v3549, 32
        %v4242 = vpop.permute.xlu0 %4241
        %4243 = vrot.lane.b32.xlu0 %v3550, 32
        %v4244 = vpop.permute.xlu0 %4243
        %4245 = vrot.lane.b32.xlu0 %v3551, 32
        %v4246 = vpop.permute.xlu0 %4245
        %4247 = vrot.lane.b32.xlu0 %v3552, 32
        %v4248 = vpop.permute.xlu0 %4247
        %4249 = vrot.lane.b32.xlu0 %v3553, 32
        %v4250 = vpop.permute.xlu0 %4249
        %4251 = vrot.lane.b32.xlu0 %v3554, 32
        %v4252 = vpop.permute.xlu0 %4251
        %4253 = vrot.lane.b32.xlu0 %v3555, 32
        %v4254 = vpop.permute.xlu0 %4253
        %4255 = vrot.lane.b32.xlu0 %v3556, 32
        %v4256 = vpop.permute.xlu0 %4255
        %4257 = vrot.lane.b32.xlu0 %v3557, 32
        %v4258 = vpop.permute.xlu0 %4257
        %4259 = vrot.lane.b32.xlu0 %v3558, 32
        %v4260 = vpop.permute.xlu0 %4259
        %4261 = vrot.lane.b32.xlu0 %v3559, 32
        %v4262 = vpop.permute.xlu0 %4261
        %4263 = vrot.lane.b32.xlu0 %v3560, 32
        %v4264 = vpop.permute.xlu0 %4263
        %4265 = vrot.lane.b32.xlu0 %v3561, 32
        %v4266 = vpop.permute.xlu0 %4265
        %4331 = vrot.lane.b32.xlu0 %v3659, 64
        %v4332 = vpop.permute.xlu0 %4331
        %4333 = vrot.lane.b32.xlu0 %v3660, 64
        %v4334 = vpop.permute.xlu0 %4333
        %4335 = vrot.lane.b32.xlu0 %v3661, 64
        %v4336 = vpop.permute.xlu0 %4335
        %4337 = vrot.lane.b32.xlu0 %v3662, 64
        %v4338 = vpop.permute.xlu0 %4337
        %4339 = vrot.lane.b32.xlu0 %v3663, 64
        %v4340 = vpop.permute.xlu0 %4339
        %4341 = vrot.lane.b32.xlu0 %v3664, 64
        %v4342 = vpop.permute.xlu0 %4341
        %4343 = vrot.lane.b32.xlu0 %v3665, 64
        %v4344 = vpop.permute.xlu0 %4343
        %4345 = vrot.lane.b32.xlu0 %v3666, 64
        %v4346 = vpop.permute.xlu0 %4345
        %4347 = vrot.lane.b32.xlu0 %v3667, 64
        %v4348 = vpop.permute.xlu0 %4347
        %4349 = vrot.lane.b32.xlu0 %v3668, 64
        %v4350 = vpop.permute.xlu0 %4349
        %4351 = vrot.lane.b32.xlu0 %v3669, 64
        %v4352 = vpop.permute.xlu0 %4351
        %4353 = vrot.lane.b32.xlu0 %v3670, 64
        %v4354 = vpop.permute.xlu0 %4353
        %4355 = vrot.lane.b32.xlu0 %v3671, 64
        %v4356 = vpop.permute.xlu0 %4355
        %4357 = vrot.lane.b32.xlu0 %v3672, 64
        %v4358 = vpop.permute.xlu0 %4357
        %4359 = vrot.lane.b32.xlu0 %v3673, 64
        %v4360 = vpop.permute.xlu0 %4359
        %4361 = vrot.lane.b32.xlu0 %v3674, 64
        %v4362 = vpop.permute.xlu0 %4361
        %4363 = vrot.lane.b32.xlu0 %v3675, 64
        %v4364 = vpop.permute.xlu0 %4363
        %4365 = vrot.lane.b32.xlu0 %v3676, 64
        %v4366 = vpop.permute.xlu0 %4365
        %4367 = vrot.lane.b32.xlu0 %v3677, 64
        %v4368 = vpop.permute.xlu0 %4367
        %4369 = vrot.lane.b32.xlu0 %v3678, 64
        %v4370 = vpop.permute.xlu0 %4369
        %4371 = vrot.lane.b32.xlu0 %v3679, 64
        %v4372 = vpop.permute.xlu0 %4371
        %4373 = vrot.lane.b32.xlu0 %v3680, 64
        %v4374 = vpop.permute.xlu0 %4373
        %4375 = vrot.lane.b32.xlu0 %v3681, 64
        %v4376 = vpop.permute.xlu0 %4375
        %4377 = vrot.lane.b32.xlu0 %v3682, 64
        %v4378 = vpop.permute.xlu0 %4377
        %4379 = vrot.lane.b32.xlu0 %v3683, 64
        %v4380 = vpop.permute.xlu0 %4379
        %4381 = vrot.lane.b32.xlu0 %v3684, 64
        %v4382 = vpop.permute.xlu0 %4381
        %4383 = vrot.lane.b32.xlu0 %v3685, 64
        %v4384 = vpop.permute.xlu0 %4383
        %4385 = vrot.lane.b32.xlu0 %v3686, 64
        %v4386 = vpop.permute.xlu0 %4385
        %4387 = vrot.lane.b32.xlu0 %v3687, 64
        %v4388 = vpop.permute.xlu0 %4387
        %4389 = vrot.lane.b32.xlu0 %v3688, 64
        %v4390 = vpop.permute.xlu0 %4389
        %4391 = vrot.lane.b32.xlu0 %v3689, 64
        %v4392 = vpop.permute.xlu0 %4391
        %4393 = vrot.lane.b32.xlu0 %v3690, 64
        %v4394 = vpop.permute.xlu0 %4393
        %4459 = vrot.lane.b32.xlu0 %v3563, 96
        %v4460 = vpop.permute.xlu0 %4459
        %4461 = vrot.lane.b32.xlu0 %v3564, 96
        %v4462 = vpop.permute.xlu0 %4461
        %4463 = vrot.lane.b32.xlu0 %v3565, 96
        %v4464 = vpop.permute.xlu0 %4463
        %4465 = vrot.lane.b32.xlu0 %v3566, 96
        %v4466 = vpop.permute.xlu0 %4465
        %4467 = vrot.lane.b32.xlu0 %v3567, 96
        %v4468 = vpop.permute.xlu0 %4467
        %4469 = vrot.lane.b32.xlu0 %v3568, 96
        %v4470 = vpop.permute.xlu0 %4469
        %4471 = vrot.lane.b32.xlu0 %v3569, 96
        %v4472 = vpop.permute.xlu0 %4471
        %4473 = vrot.lane.b32.xlu0 %v3570, 96
        %v4474 = vpop.permute.xlu0 %4473
        %4475 = vrot.lane.b32.xlu0 %v3571, 96
        %v4476 = vpop.permute.xlu0 %4475
        %4477 = vrot.lane.b32.xlu0 %v3572, 96
        %v4478 = vpop.permute.xlu0 %4477
        %4479 = vrot.lane.b32.xlu0 %v3573, 96
        %v4480 = vpop.permute.xlu0 %4479
        %4481 = vrot.lane.b32.xlu0 %v3574, 96
        %v4482 = vpop.permute.xlu0 %4481
        %4483 = vrot.lane.b32.xlu0 %v3575, 96
        %v4484 = vpop.permute.xlu0 %4483
        %4485 = vrot.lane.b32.xlu0 %v3576, 96
        %v4486 = vpop.permute.xlu0 %4485
        %4487 = vrot.lane.b32.xlu0 %v3577, 96
        %v4488 = vpop.permute.xlu0 %4487
        %4489 = vrot.lane.b32.xlu0 %v3578, 96
        %v4490 = vpop.permute.xlu0 %4489
        %4491 = vrot.lane.b32.xlu0 %v3579, 96
        %v4492 = vpop.permute.xlu0 %4491
        %4493 = vrot.lane.b32.xlu0 %v3580, 96
        %v4494 = vpop.permute.xlu0 %4493
        %4495 = vrot.lane.b32.xlu0 %v3581, 96
        %v4496 = vpop.permute.xlu0 %4495
        %4497 = vrot.lane.b32.xlu0 %v3582, 96
        %v4498 = vpop.permute.xlu0 %4497
        %4499 = vrot.lane.b32.xlu0 %v3583, 96
        %v4500 = vpop.permute.xlu0 %4499
        %4501 = vrot.lane.b32.xlu0 %v3584, 96
        %v4502 = vpop.permute.xlu0 %4501
        %4503 = vrot.lane.b32.xlu0 %v3585, 96
        %v4504 = vpop.permute.xlu0 %4503
        %4505 = vrot.lane.b32.xlu0 %v3586, 96
        %v4506 = vpop.permute.xlu0 %4505
        %4507 = vrot.lane.b32.xlu0 %v3587, 96
        %v4508 = vpop.permute.xlu0 %4507
        %4509 = vrot.lane.b32.xlu0 %v3588, 96
        %v4510 = vpop.permute.xlu0 %4509
        %4511 = vrot.lane.b32.xlu0 %v3589, 96
        %v4512 = vpop.permute.xlu0 %4511
        %4513 = vrot.lane.b32.xlu0 %v3590, 96
        %v4514 = vpop.permute.xlu0 %4513
        %4515 = vrot.lane.b32.xlu0 %v3591, 96
        %v4516 = vpop.permute.xlu0 %4515
        %4517 = vrot.lane.b32.xlu0 %v3592, 96
        %v4518 = vpop.permute.xlu0 %4517
        %4519 = vrot.lane.b32.xlu0 %v3593, 96
        %v4520 = vpop.permute.xlu0 %4519
        %4521 = vrot.lane.b32.xlu0 %v3594, 96
        %v4522 = vpop.permute.xlu0 %4521
        %v4555 = vsel %vm3004, %v3210, %v3820
        %v4556 = vsel %vm3004, %v3211, %v3822
        %v4557 = vsel %vm3004, %v3212, %v3824
        %v4558 = vsel %vm3004, %v3213, %v3826
        %v4559 = vsel %vm3004, %v3214, %v3828
        %v4560 = vsel %vm3004, %v3215, %v3830
        %v4561 = vsel %vm3004, %v3216, %v3832
        %v4562 = vsel %vm3004, %v3217, %v3834
        %v4563 = vsel %vm3004, %v3218, %v3836
        %v4564 = vsel %vm3004, %v3219, %v3838
        %v4565 = vsel %vm3004, %v3220, %v3840
        %v4566 = vsel %vm3004, %v3221, %v3842
        %v4567 = vsel %vm3004, %v3222, %v3844
        %v4568 = vsel %vm3004, %v3223, %v3846
        %v4569 = vsel %vm3004, %v3224, %v3848
        %v4570 = vsel %vm3004, %v3225, %v3850
        %v4571 = vsel %vm3004, %v3226, %v3852
        %v4572 = vsel %vm3004, %v3227, %v3854
        %v4573 = vsel %vm3004, %v3228, %v3856
        %v4574 = vsel %vm3004, %v3229, %v3858
        %v4575 = vsel %vm3004, %v3230, %v3860
        %v4576 = vsel %vm3004, %v3231, %v3862
        %v4577 = vsel %vm3004, %v3232, %v3864
        %v4578 = vsel %vm3004, %v3233, %v3866
        %v4579 = vsel %vm3004, %v3234, %v3868
        %v4580 = vsel %vm3004, %v3235, %v3870
        %v4581 = vsel %vm3004, %v3236, %v3872
        %v4582 = vsel %vm3004, %v3237, %v3874
        %v4583 = vsel %vm3004, %v3238, %v3876
        %v4584 = vsel %vm3004, %v3239, %v3878
        %v4585 = vsel %vm3004, %v3240, %v3880
        %v4586 = vsel %vm3004, %v3241, %v3882
        %vm4587 = vcmask 523264
        %v4588 = vsel %vm4587, %v4555, %v3948
        %v4589 = vsel %vm4587, %v4556, %v3950
        %v4590 = vsel %vm4587, %v4557, %v3952
        %v4591 = vsel %vm4587, %v4558, %v3954
        %v4592 = vsel %vm4587, %v4559, %v3956
        %v4593 = vsel %vm4587, %v4560, %v3958
        %v4594 = vsel %vm4587, %v4561, %v3960
        %v4595 = vsel %vm4587, %v4562, %v3962
        %v4596 = vsel %vm4587, %v4563, %v3964
        %v4597 = vsel %vm4587, %v4564, %v3966
        %v4598 = vsel %vm4587, %v4565, %v3968
        %v4599 = vsel %vm4587, %v4566, %v3970
        %v4600 = vsel %vm4587, %v4567, %v3972
        %v4601 = vsel %vm4587, %v4568, %v3974
        %v4602 = vsel %vm4587, %v4569, %v3976
        %v4603 = vsel %vm4587, %v4570, %v3978
        %v4604 = vsel %vm4587, %v4571, %v3980
        %v4605 = vsel %vm4587, %v4572, %v3982
        %v4606 = vsel %vm4587, %v4573, %v3984
        %v4607 = vsel %vm4587, %v4574, %v3986
        %v4608 = vsel %vm4587, %v4575, %v3988
        %v4609 = vsel %vm4587, %v4576, %v3990
        %v4610 = vsel %vm4587, %v4577, %v3992
        %v4611 = vsel %vm4587, %v4578, %v3994
        %v4612 = vsel %vm4587, %v4579, %v3996
        %v4613 = vsel %vm4587, %v4580, %v3998
        %v4614 = vsel %vm4587, %v4581, %v4000
        %v4615 = vsel %vm4587, %v4582, %v4002
        %v4616 = vsel %vm4587, %v4583, %v4004
        %v4617 = vsel %vm4587, %v4584, %v4006
        %v4618 = vsel %vm4587, %v4585, %v4008
        %v4619 = vsel %vm4587, %v4586, %v4010
        %vm4620 = vcmask 785408
        %v4621 = vsel %vm4620, %v4588, %v4076
        %v4622 = vsel %vm4620, %v4589, %v4078
        %v4623 = vsel %vm4620, %v4590, %v4080
        %v4624 = vsel %vm4620, %v4591, %v4082
        %v4625 = vsel %vm4620, %v4592, %v4084
        %v4626 = vsel %vm4620, %v4593, %v4086
        %v4627 = vsel %vm4620, %v4594, %v4088
        %v4628 = vsel %vm4620, %v4595, %v4090
        %v4629 = vsel %vm4620, %v4596, %v4092
        %v4630 = vsel %vm4620, %v4597, %v4094
        %v4631 = vsel %vm4620, %v4598, %v4096
        %v4632 = vsel %vm4620, %v4599, %v4098
        %v4633 = vsel %vm4620, %v4600, %v4100
        %v4634 = vsel %vm4620, %v4601, %v4102
        %v4635 = vsel %vm4620, %v4602, %v4104
        %v4636 = vsel %vm4620, %v4603, %v4106
        %v4637 = vsel %vm4620, %v4604, %v4108
        %v4638 = vsel %vm4620, %v4605, %v4110
        %v4639 = vsel %vm4620, %v4606, %v4112
        %v4640 = vsel %vm4620, %v4607, %v4114
        %v4641 = vsel %vm4620, %v4608, %v4116
        %v4642 = vsel %vm4620, %v4609, %v4118
        %v4643 = vsel %vm4620, %v4610, %v4120
        %v4644 = vsel %vm4620, %v4611, %v4122
        %v4645 = vsel %vm4620, %v4612, %v4124
        %v4646 = vsel %vm4620, %v4613, %v4126
        %v4647 = vsel %vm4620, %v4614, %v4128
        %v4648 = vsel %vm4620, %v4615, %v4130
        %v4649 = vsel %vm4620, %v4616, %v4132
        %v4650 = vsel %vm4620, %v4617, %v4134
        %v4651 = vsel %vm4620, %v4618, %v4136
        %v4652 = vsel %vm4620, %v4619, %v4138
        %v4653 = vsel %vm3004, %v3338, %v4204
        %v4654 = vsel %vm3004, %v3339, %v4206
        %v4655 = vsel %vm3004, %v3340, %v4208
        %v4656 = vsel %vm3004, %v3341, %v4210
        %v4657 = vsel %vm3004, %v3342, %v4212
        %v4658 = vsel %vm3004, %v3343, %v4214
        %v4659 = vsel %vm3004, %v3344, %v4216
        %v4660 = vsel %vm3004, %v3345, %v4218
        %v4661 = vsel %vm3004, %v3346, %v4220
        %v4662 = vsel %vm3004, %v3347, %v4222
        %v4663 = vsel %vm3004, %v3348, %v4224
        %v4664 = vsel %vm3004, %v3349, %v4226
        %v4665 = vsel %vm3004, %v3350, %v4228
        %v4666 = vsel %vm3004, %v3351, %v4230
        %v4667 = vsel %vm3004, %v3352, %v4232
        %v4668 = vsel %vm3004, %v3353, %v4234
        %v4669 = vsel %vm3004, %v3354, %v4236
        %v4670 = vsel %vm3004, %v3355, %v4238
        %v4671 = vsel %vm3004, %v3356, %v4240
        %v4672 = vsel %vm3004, %v3357, %v4242
        %v4673 = vsel %vm3004, %v3358, %v4244
        %v4674 = vsel %vm3004, %v3359, %v4246
        %v4675 = vsel %vm3004, %v3360, %v4248
        %v4676 = vsel %vm3004, %v3361, %v4250
        %v4677 = vsel %vm3004, %v3362, %v4252
        %v4678 = vsel %vm3004, %v3363, %v4254
        %v4679 = vsel %vm3004, %v3364, %v4256
        %v4680 = vsel %vm3004, %v3365, %v4258
        %v4681 = vsel %vm3004, %v3366, %v4260
        %v4682 = vsel %vm3004, %v3367, %v4262
        %v4683 = vsel %vm3004, %v3368, %v4264
        %v4684 = vsel %vm3004, %v3369, %v4266
        %v4685 = vsel %vm4587, %v4653, %v4332
        %v4686 = vsel %vm4587, %v4654, %v4334
        %v4687 = vsel %vm4587, %v4655, %v4336
        %v4688 = vsel %vm4587, %v4656, %v4338
        %v4689 = vsel %vm4587, %v4657, %v4340
        %v4690 = vsel %vm4587, %v4658, %v4342
        %v4691 = vsel %vm4587, %v4659, %v4344
        %v4692 = vsel %vm4587, %v4660, %v4346
        %v4693 = vsel %vm4587, %v4661, %v4348
        %v4694 = vsel %vm4587, %v4662, %v4350
        %v4695 = vsel %vm4587, %v4663, %v4352
        %v4696 = vsel %vm4587, %v4664, %v4354
        %v4697 = vsel %vm4587, %v4665, %v4356
        %v4698 = vsel %vm4587, %v4666, %v4358
        %v4699 = vsel %vm4587, %v4667, %v4360
        %v4700 = vsel %vm4587, %v4668, %v4362
        %v4701 = vsel %vm4587, %v4669, %v4364
        %v4702 = vsel %vm4587, %v4670, %v4366
        %v4703 = vsel %vm4587, %v4671, %v4368
        %v4704 = vsel %vm4587, %v4672, %v4370
        %v4705 = vsel %vm4587, %v4673, %v4372
        %v4706 = vsel %vm4587, %v4674, %v4374
        %v4707 = vsel %vm4587, %v4675, %v4376
        %v4708 = vsel %vm4587, %v4676, %v4378
        %v4709 = vsel %vm4587, %v4677, %v4380
        %v4710 = vsel %vm4587, %v4678, %v4382
        %v4711 = vsel %vm4587, %v4679, %v4384
        %v4712 = vsel %vm4587, %v4680, %v4386
        %v4713 = vsel %vm4587, %v4681, %v4388
        %v4714 = vsel %vm4587, %v4682, %v4390
        %v4715 = vsel %vm4587, %v4683, %v4392
        %v4716 = vsel %vm4587, %v4684, %v4394
        %v4717 = vsel %vm4620, %v4685, %v4460
        %v4718 = vsel %vm4620, %v4686, %v4462
        %v4719 = vsel %vm4620, %v4687, %v4464
        %v4720 = vsel %vm4620, %v4688, %v4466
        %v4721 = vsel %vm4620, %v4689, %v4468
        %v4722 = vsel %vm4620, %v4690, %v4470
        %v4723 = vsel %vm4620, %v4691, %v4472
        %v4724 = vsel %vm4620, %v4692, %v4474
        %v4725 = vsel %vm4620, %v4693, %v4476
        %v4726 = vsel %vm4620, %v4694, %v4478
        %v4727 = vsel %vm4620, %v4695, %v4480
        %v4728 = vsel %vm4620, %v4696, %v4482
        %v4729 = vsel %vm4620, %v4697, %v4484
        %v4730 = vsel %vm4620, %v4698, %v4486
        %v4731 = vsel %vm4620, %v4699, %v4488
        %v4732 = vsel %vm4620, %v4700, %v4490
        %v4733 = vsel %vm4620, %v4701, %v4492
        %v4734 = vsel %vm4620, %v4702, %v4494
        %v4735 = vsel %vm4620, %v4703, %v4496
        %v4736 = vsel %vm4620, %v4704, %v4498
        %v4737 = vsel %vm4620, %v4705, %v4500
        %v4738 = vsel %vm4620, %v4706, %v4502
        %v4739 = vsel %vm4620, %v4707, %v4504
        %v4740 = vsel %vm4620, %v4708, %v4506
        %v4741 = vsel %vm4620, %v4709, %v4508
        %v4742 = vsel %vm4620, %v4710, %v4510
        %v4743 = vsel %vm4620, %v4711, %v4512
        %v4744 = vsel %vm4620, %v4712, %v4514
        %v4745 = vsel %vm4620, %v4713, %v4516
        %v4746 = vsel %vm4620, %v4714, %v4518
        %v4747 = vsel %vm4620, %v4715, %v4520
        %v4748 = vsel %vm4620, %v4716, %v4522
        %v4749 = vpack.c.bf16 %v4622, %v4621
        %v4750 = vpack.c.bf16 %v4718, %v4717
        %v4751 = vpack.c.bf16 %v3756, %v3755
        %v4752 = vpack.c.bf16 %v4624, %v4623
        %v4753 = vpack.c.bf16 %v4720, %v4719
        %v4754 = vpack.c.bf16 %v3758, %v3757
        %v4755 = vpack.c.bf16 %v4626, %v4625
        %v4756 = vpack.c.bf16 %v4722, %v4721
        %v4757 = vpack.c.bf16 %v3760, %v3759
        %v4758 = vpack.c.bf16 %v4628, %v4627
        %v4759 = vpack.c.bf16 %v4724, %v4723
        %v4760 = vpack.c.bf16 %v3762, %v3761
        %v4761 = vpack.c.bf16 %v4630, %v4629
        %v4762 = vpack.c.bf16 %v4726, %v4725
        %v4763 = vpack.c.bf16 %v3764, %v3763
        %v4764 = vpack.c.bf16 %v4632, %v4631
        %v4765 = vpack.c.bf16 %v4728, %v4727
        %v4766 = vpack.c.bf16 %v3766, %v3765
        %v4767 = vpack.c.bf16 %v4634, %v4633
        %v4768 = vpack.c.bf16 %v4730, %v4729
        %v4769 = vpack.c.bf16 %v3768, %v3767
        %v4770 = vpack.c.bf16 %v4636, %v4635
        %v4771 = vpack.c.bf16 %v4732, %v4731
        %v4772 = vpack.c.bf16 %v3770, %v3769
        %v4773 = vpack.c.bf16 %v4638, %v4637
        %v4774 = vpack.c.bf16 %v4734, %v4733
        %v4775 = vpack.c.bf16 %v3772, %v3771
        %v4776 = vpack.c.bf16 %v4640, %v4639
        %v4777 = vpack.c.bf16 %v4736, %v4735
        %v4778 = vpack.c.bf16 %v3774, %v3773
        %v4779 = vpack.c.bf16 %v4642, %v4641
        %v4780 = vpack.c.bf16 %v4738, %v4737
        %v4781 = vpack.c.bf16 %v3776, %v3775
        %v4782 = vpack.c.bf16 %v4644, %v4643
        %v4783 = vpack.c.bf16 %v4740, %v4739
        %v4784 = vpack.c.bf16 %v3778, %v3777
        %v4785 = vpack.c.bf16 %v4646, %v4645
        %v4786 = vpack.c.bf16 %v4742, %v4741
        %v4787 = vpack.c.bf16 %v3780, %v3779
        %v4788 = vpack.c.bf16 %v4648, %v4647
        %v4789 = vpack.c.bf16 %v4744, %v4743
        %v4790 = vpack.c.bf16 %v3782, %v3781
        %v4791 = vpack.c.bf16 %v4650, %v4649
        %v4792 = vpack.c.bf16 %v4746, %v4745
        %v4793 = vpack.c.bf16 %v3784, %v3783
        %v4794 = vpack.c.bf16 %v4652, %v4651
        %v4795 = vpack.c.bf16 %v4748, %v4747
        %v4796 = vpack.c.bf16 %v3786, %v3785
        %v4797 = vld [vmem:[%s3] sm:$0xf]
        %v4798 = vld [vmem:[%s3 + $0x4] sm:$0xf]
        %v4799 = vld [vmem:[%s3 + $0x8] sm:$0xf]
        %v4800 = vld [vmem:[%s3 + $0xc] sm:$0xf]
        %v4801 = vld [vmem:[%s3 + $0x10] sm:$0xf]
        %v4802 = vld [vmem:[%s3 + $0x14] sm:$0xf]
        %v4803 = vld [vmem:[%s3 + $0x18] sm:$0xf]
        %v4804 = vld [vmem:[%s3 + $0x1c] sm:$0xf]
        %v4805 = vld [vmem:[%s3 + $0x20] sm:$0xf]
        %v4806 = vld [vmem:[%s3 + $0x24] sm:$0xf]
        %v4807 = vld [vmem:[%s3 + $0x28] sm:$0xf]
        %v4808 = vld [vmem:[%s3 + $0x2c] sm:$0xf]
        %v4809 = vld [vmem:[%s3 + $0x30] sm:$0xf]
        %v4810 = vld [vmem:[%s3 + $0x34] sm:$0xf]
        %v4811 = vld [vmem:[%s3 + $0x38] sm:$0xf]
        %v4812 = vld [vmem:[%s3 + $0x3c] sm:$0xf]
        %v4813 = vld [vmem:[%s3 + $0x40] sm:$0xf]
        %v4814 = vld [vmem:[%s3 + $0x44] sm:$0xf]
        %v4815 = vld [vmem:[%s3 + $0x48] sm:$0xf]
        %v4816 = vld [vmem:[%s3 + $0x4c] sm:$0xf]
        %v4817 = vld [vmem:[%s3 + $0x50] sm:$0xf]
        %v4818 = vld [vmem:[%s3 + $0x54] sm:$0xf]
        %v4819 = vld [vmem:[%s3 + $0x58] sm:$0xf]
        %v4820 = vld [vmem:[%s3 + $0x5c] sm:$0xf]
        %v4821 = vld [vmem:[%s3 + $0x60] sm:$0xf]
        %v4822 = vld [vmem:[%s3 + $0x64] sm:$0xf]
        %v4823 = vld [vmem:[%s3 + $0x68] sm:$0xf]
        %v4824 = vld [vmem:[%s3 + $0x6c] sm:$0xf]
        %v4825 = vld [vmem:[%s3 + $0x70] sm:$0xf]
        %v4826 = vld [vmem:[%s3 + $0x74] sm:$0xf]
        %v4827 = vld [vmem:[%s3 + $0x78] sm:$0xf]
        %v4828 = vld [vmem:[%s3 + $0x7c] sm:$0xf]
        %v4829 = vld [vmem:[%s3 + $0x80] sm:$0xf]
        %v4830 = vld [vmem:[%s3 + $0x84] sm:$0xf]
        %v4831 = vld [vmem:[%s3 + $0x88] sm:$0xf]
        %v4832 = vld [vmem:[%s3 + $0x8c] sm:$0xf]
        %v4833 = vld [vmem:[%s4] sm:$0x1]
        %v4835 = vlaneseq
        %v4836 = vshrl.u32 %v4835, 7
        %v4837 = vsub.s32 0, %v4836
        %v4838 = vrot.slane %v4833, %v4837
        %v4876 = vunpack.c.l.b16 %v4797
        %v4877 = vunpack.c.l.b16 %v4798
        %v4878 = vunpack.c.l.b16 %v4799
        %v4879 = vunpack.c.l.b16 %v4800
        %v4880 = vunpack.c.l.b16 %v4801
        %v4881 = vunpack.c.l.b16 %v4802
        %v4882 = vunpack.c.l.b16 %v4803
        %v4883 = vunpack.c.l.b16 %v4804
        %v4884 = vunpack.c.l.b16 %v4805
        %v4885 = vunpack.c.l.b16 %v4806
        %v4886 = vunpack.c.l.b16 %v4807
        %v4887 = vunpack.c.l.b16 %v4808
        %v4888 = vunpack.c.l.b16 %v4809
        %v4889 = vunpack.c.l.b16 %v4810
        %v4890 = vunpack.c.l.b16 %v4811
        %v4891 = vunpack.c.l.b16 %v4812
        %v4892 = vunpack.c.l.b16 %v4813
        %v4893 = vunpack.c.l.b16 %v4814
        %v4894 = vunpack.c.l.b16 %v4815
        %v4895 = vunpack.c.l.b16 %v4816
        %v4896 = vunpack.c.l.b16 %v4817
        %v4897 = vunpack.c.l.b16 %v4818
        %v4898 = vunpack.c.l.b16 %v4819
        %v4899 = vunpack.c.l.b16 %v4820
        %v4900 = vunpack.c.l.b16 %v4821
        %v4901 = vunpack.c.l.b16 %v4822
        %v4902 = vunpack.c.l.b16 %v4823
        %v4903 = vunpack.c.l.b16 %v4824
        %v4904 = vunpack.c.l.b16 %v4825
        %v4905 = vunpack.c.l.b16 %v4826
        %v4906 = vunpack.c.l.b16 %v4827
        %v4907 = vunpack.c.l.b16 %v4828
        %v4908 = vunpack.c.l.b16 %v4829
        %v4909 = vunpack.c.l.b16 %v4830
        %v4910 = vunpack.c.l.b16 %v4831
        %v4911 = vunpack.c.l.b16 %v4832
        %v4912 = vpack.c.b16 %v4877, %v4876
        %v4913 = vpack.c.b16 %v4879, %v4878
        %v4914 = vpack.c.b16 %v4881, %v4880
        %v4915 = vpack.c.b16 %v4883, %v4882
        %v4916 = vpack.c.b16 %v4885, %v4884
        %v4917 = vpack.c.b16 %v4887, %v4886
        %v4918 = vpack.c.b16 %v4889, %v4888
        %v4919 = vpack.c.b16 %v4891, %v4890
        %v4920 = vpack.c.b16 %v4893, %v4892
        %v4921 = vpack.c.b16 %v4895, %v4894
        %v4922 = vpack.c.b16 %v4897, %v4896
        %v4923 = vpack.c.b16 %v4899, %v4898
        %v4924 = vpack.c.b16 %v4901, %v4900
        %v4925 = vpack.c.b16 %v4903, %v4902
        %v4926 = vpack.c.b16 %v4905, %v4904
        %v4927 = vpack.c.b16 %v4907, %v4906
        %v4928 = vpack.c.b16 %v4909, %v4908
        %v4929 = vpack.c.b16 %v4911, %v4910
        %v4949 = vsel %vm3004, %v4751, 0
        %v4952 = vsel %vm3004, %v4754, 0
        %v4955 = vsel %vm3004, %v4757, 0
        %v4958 = vsel %vm3004, %v4760, 0
        %v4961 = vsel %vm3004, %v4763, 0
        %v4964 = vsel %vm3004, %v4766, 0
        %v4967 = vsel %vm3004, %v4769, 0
        %v4970 = vsel %vm3004, %v4772, 0
        %v4973 = vsel %vm3004, %v4775, 0
        %v4976 = vsel %vm3004, %v4778, 0
        %v4979 = vsel %vm3004, %v4781, 0
        %v4982 = vsel %vm3004, %v4784, 0
        %v4985 = vsel %vm3004, %v4787, 0
        %v4988 = vsel %vm3004, %v4790, 0
        %v4991 = vsel %vm3004, %v4793, 0
        %v4994 = vsel %vm3004, %v4796, 0
        %4996 = vmatprep.subr.bf16.mxu0 0
        %4997 = vmatpush1.bf16.msra.mxu0 %v4912
        %4998 = vmatprep.subr.bf16.mxu0 0
        %4999 = vmatpush1.bf16.msra.mxu0 %v4913
        %5000 = vmatprep.subr.bf16.mxu0 0
        %5001 = vmatpush1.bf16.msra.mxu0 %v4914
        %5002 = vmatprep.subr.bf16.mxu0 0
        %5003 = vmatpush1.bf16.msra.mxu0 %v4915
        %5004 = vmatprep.subr.bf16.mxu0 0
        %5005 = vmatpush1.bf16.msra.mxu0 %v4916
        %5006 = vmatprep.subr.bf16.mxu0 0
        %5007 = vmatpush1.bf16.msra.mxu0 %v4917
        %5008 = vmatprep.subr.bf16.mxu0 0
        %5009 = vmatpush1.bf16.msra.mxu0 %v4918
        %5010 = vmatprep.subr.bf16.mxu0 0
        %5011 = vmatpush1.bf16.msra.mxu0 %v4919
        %5012 = vmatprep.subr.bf16.mxu0 0
        %5013 = vmatpush1.bf16.msra.mxu0 %v4920
        %5014 = vmatprep.subr.bf16.mxu0 0
        %5015 = vmatpush1.bf16.msra.mxu0 %v4921
        %5016 = vmatprep.subr.bf16.mxu0 0
        %5017 = vmatpush1.bf16.msra.mxu0 %v4922
        %5018 = vmatprep.subr.bf16.mxu0 0
        %5019 = vmatpush1.bf16.msra.mxu0 %v4923
        %5020 = vmatprep.subr.bf16.mxu0 0
        %5021 = vmatpush1.bf16.msra.mxu0 %v4924
        %5022 = vmatprep.subr.bf16.mxu0 0
        %5023 = vmatpush1.bf16.msra.mxu0 %v4925
        %5024 = vmatprep.subr.bf16.mxu0 0
        %5025 = vmatpush1.bf16.msra.mxu0 %v4926
        %5026 = vmatprep.subr.bf16.mxu0 0
        %5027 = vmatpush1.bf16.msra.mxu0 %v4927
        %5028 = vmatprep.mubr.bf16.mxu0 %v4750
        %5029 = vmatmul.mubr.bf16.gmra.mrb[0].mxu0 %v4749
        %v5030 = vpop.f32.mrb[0].mxu0
        %v5031 = vadd.f32 %v4838, %v5030
        %v5032 = vpop.f32.mrb[0].mxu0
        %v5033 = vpop.f32.mrb[0].mxu0
        %v5034 = vadd.f32 %v4838, %v5033
        %v5035 = vpop.f32.mrb[0].mxu0
        %5036 = vmatprep.mubr.bf16.mxu0 %v4753
        %5037 = vmatmul.mubr.bf16.gmra.mrb[0].mxu0 %v4752
        %v5038 = vpop.f32.mrb[0].mxu0
        %v5039 = vadd.f32 %v4838, %v5038
        %v5040 = vpop.f32.mrb[0].mxu0
        %v5041 = vpop.f32.mrb[0].mxu0
        %v5042 = vadd.f32 %v4838, %v5041
        %v5043 = vpop.f32.mrb[0].mxu0
        %5044 = vmatprep.mubr.bf16.mxu0 %v4756
        %5045 = vmatmul.mubr.bf16.gmra.mrb[0].mxu0 %v4755
        %v5046 = vpop.f32.mrb[0].mxu0
        %v5047 = vadd.f32 %v4838, %v5046
        %v5048 = vpop.f32.mrb[0].mxu0
        %v5049 = vpop.f32.mrb[0].mxu0
        %v5050 = vadd.f32 %v4838, %v5049
        %v5051 = vpop.f32.mrb[0].mxu0
        %5052 = vmatprep.mubr.bf16.mxu0 %v4759
        %5053 = vmatmul.mubr.bf16.gmra.mrb[0].mxu0 %v4758
        %v5054 = vpop.f32.mrb[0].mxu0
        %v5055 = vadd.f32 %v4838, %v5054
        %v5056 = vpop.f32.mrb[0].mxu0
        %v5057 = vpop.f32.mrb[0].mxu0
        %v5058 = vadd.f32 %v4838, %v5057
        %v5059 = vpop.f32.mrb[0].mxu0
        %5060 = vmatprep.mubr.bf16.mxu0 %v4762
        %5061 = vmatmul.mubr.bf16.gmra.mrb[0].mxu0 %v4761
        %v5062 = vpop.f32.mrb[0].mxu0
        %v5063 = vadd.f32 %v4838, %v5062
        %v5064 = vpop.f32.mrb[0].mxu0
        %v5065 = vpop.f32.mrb[0].mxu0
        %v5066 = vadd.f32 %v4838, %v5065
        %v5067 = vpop.f32.mrb[0].mxu0
        %5068 = vmatprep.mubr.bf16.mxu0 %v4765
        %5069 = vmatmul.mubr.bf16.gmra.mrb[0].mxu0 %v4764
        %v5070 = vpop.f32.mrb[0].mxu0
        %v5071 = vadd.f32 %v4838, %v5070
        %v5072 = vpop.f32.mrb[0].mxu0
        %v5073 = vpop.f32.mrb[0].mxu0
        %v5074 = vadd.f32 %v4838, %v5073
        %v5075 = vpop.f32.mrb[0].mxu0
        %5076 = vmatprep.mubr.bf16.mxu0 %v4768
        %5077 = vmatmul.mubr.bf16.gmra.mrb[0].mxu0 %v4767
        %v5078 = vpop.f32.mrb[0].mxu0
        %v5079 = vadd.f32 %v4838, %v5078
        %v5080 = vpop.f32.mrb[0].mxu0
        %v5081 = vpop.f32.mrb[0].mxu0
        %v5082 = vadd.f32 %v4838, %v5081
        %v5083 = vpop.f32.mrb[0].mxu0
        %5084 = vmatprep.mubr.bf16.mxu0 %v4771
        %5085 = vmatmul.mubr.bf16.gmra.mrb[0].mxu0 %v4770
        %v5086 = vpop.f32.mrb[0].mxu0
        %v5087 = vadd.f32 %v4838, %v5086
        %v5088 = vpop.f32.mrb[0].mxu0
        %v5089 = vpop.f32.mrb[0].mxu0
        %v5090 = vadd.f32 %v4838, %v5089
        %v5091 = vpop.f32.mrb[0].mxu0
        %5092 = vmatprep.mubr.bf16.mxu0 %v4774
        %5093 = vmatmul.mubr.bf16.gmra.mrb[0].mxu0 %v4773
        %v5094 = vpop.f32.mrb[0].mxu0
        %v5095 = vadd.f32 %v4838, %v5094
        %v5096 = vpop.f32.mrb[0].mxu0
        %v5097 = vpop.f32.mrb[0].mxu0
        %v5098 = vadd.f32 %v4838, %v5097
        %v5099 = vpop.f32.mrb[0].mxu0
        %5100 = vmatprep.mubr.bf16.mxu0 %v4777
        %5101 = vmatmul.mubr.bf16.gmra.mrb[0].mxu0 %v4776
        %v5102 = vpop.f32.mrb[0].mxu0
        %v5103 = vadd.f32 %v4838, %v5102
        %v5104 = vpop.f32.mrb[0].mxu0
        %v5105 = vpop.f32.mrb[0].mxu0
        %v5106 = vadd.f32 %v4838, %v5105
        %v5107 = vpop.f32.mrb[0].mxu0
        %5108 = vmatprep.mubr.bf16.mxu0 %v4780
        %5109 = vmatmul.mubr.bf16.gmra.mrb[0].mxu0 %v4779
        %v5110 = vpop.f32.mrb[0].mxu0
        %v5111 = vadd.f32 %v4838, %v5110
        %v5112 = vpop.f32.mrb[0].mxu0
        %v5113 = vpop.f32.mrb[0].mxu0
        %v5114 = vadd.f32 %v4838, %v5113
        %v5115 = vpop.f32.mrb[0].mxu0
        %5116 = vmatprep.mubr.bf16.mxu0 %v4783
        %5117 = vmatmul.mubr.bf16.gmra.mrb[0].mxu0 %v4782
        %v5118 = vpop.f32.mrb[0].mxu0
        %v5119 = vadd.f32 %v4838, %v5118
        %v5120 = vpop.f32.mrb[0].mxu0
        %v5121 = vpop.f32.mrb[0].mxu0
        %v5122 = vadd.f32 %v4838, %v5121
        %v5123 = vpop.f32.mrb[0].mxu0
        %5124 = vmatprep.mubr.bf16.mxu0 %v4786
        %5125 = vmatmul.mubr.bf16.gmra.mrb[0].mxu0 %v4785
        %v5126 = vpop.f32.mrb[0].mxu0
        %v5127 = vadd.f32 %v4838, %v5126
        %v5128 = vpop.f32.mrb[0].mxu0
        %v5129 = vpop.f32.mrb[0].mxu0
        %v5130 = vadd.f32 %v4838, %v5129
        %v5131 = vpop.f32.mrb[0].mxu0
        %5132 = vmatprep.mubr.bf16.mxu0 %v4789
        %5133 = vmatmul.mubr.bf16.gmra.mrb[0].mxu0 %v4788
        %v5134 = vpop.f32.mrb[0].mxu0
        %v5135 = vadd.f32 %v4838, %v5134
        %v5136 = vpop.f32.mrb[0].mxu0
        %v5137 = vpop.f32.mrb[0].mxu0
        %v5138 = vadd.f32 %v4838, %v5137
        %v5139 = vpop.f32.mrb[0].mxu0
        %5140 = vmatprep.mubr.bf16.mxu0 %v4792
        %5141 = vmatmul.mubr.bf16.gmra.mrb[0].mxu0 %v4791
        %v5142 = vpop.f32.mrb[0].mxu0
        %v5143 = vadd.f32 %v4838, %v5142
        %v5144 = vpop.f32.mrb[0].mxu0
        %v5145 = vpop.f32.mrb[0].mxu0
        %v5146 = vadd.f32 %v4838, %v5145
        %v5147 = vpop.f32.mrb[0].mxu0
        %5148 = vmatprep.mubr.bf16.mxu0 %v4795
        %5149 = vmatmul.mubr.bf16.gmra.mrb[0].mxu0 %v4794
        %v5150 = vpop.f32.mrb[0].mxu0
        %v5151 = vadd.f32 %v4838, %v5150
        %v5152 = vpop.f32.mrb[0].mxu0
        %v5153 = vpop.f32.mrb[0].mxu0
        %v5154 = vadd.f32 %v4838, %v5153
        %v5155 = vpop.f32.mrb[0].mxu0
        %5156 = vdwg.mxu0
        %5157 = vmatprep.subr.bf16.mxu0 0
        %5158 = vmatpush1.bf16.msra.mxu0 %v4928
        %5159 = vmatprep.subr.bf16.mxu0 0
        %5160 = vmatpush1.bf16.msra.mxu0 %v4929
        %5161 = vmatprep.subr.bf16.mxu0 0
        %5162 = vmatpush1.bf16.msra.mxu0 0
        %5163 = vmatprep.subr.bf16.mxu0 0
        %5164 = vmatpush1.bf16.msra.mxu0 0
        %5165 = vmatprep.subr.bf16.mxu0 0
        %5166 = vmatpush1.bf16.msra.mxu0 0
        %5167 = vmatprep.subr.bf16.mxu0 0
        %5168 = vmatpush1.bf16.msra.mxu0 0
        %5169 = vmatprep.subr.bf16.mxu0 0
        %5170 = vmatpush1.bf16.msra.mxu0 0
        %5171 = vmatprep.subr.bf16.mxu0 0
        %5172 = vmatpush1.bf16.msra.mxu0 0
        %5173 = vmatprep.subr.bf16.mxu0 0
        %5174 = vmatpush1.bf16.msra.mxu0 0
        %5175 = vmatprep.subr.bf16.mxu0 0
        %5176 = vmatpush1.bf16.msra.mxu0 0
        %5177 = vmatprep.subr.bf16.mxu0 0
        %5178 = vmatpush1.bf16.msra.mxu0 0
        %5179 = vmatprep.subr.bf16.mxu0 0
        %5180 = vmatpush1.bf16.msra.mxu0 0
        %5181 = vmatprep.subr.bf16.mxu0 0
        %5182 = vmatpush1.bf16.msra.mxu0 0
        %5183 = vmatprep.subr.bf16.mxu0 0
        %5184 = vmatpush1.bf16.msra.mxu0 0
        %5185 = vmatprep.subr.bf16.mxu0 0
        %5186 = vmatpush1.bf16.msra.mxu0 0
        %5187 = vmatprep.subr.bf16.mxu0 0
        %5188 = vmatpush1.bf16.msra.mxu0 0
        %5189 = vmatprep.mubr.bf16.mxu0 0
        %5190 = vmatmul.mubr.bf16.gmra.mrb[0].mxu0 %v4949
        %v5191 = vpop.f32.mrb[0].mxu0
        %v5192 = vadd.f32 %v5031, %v5191
        %v5193 = vpop.f32.mrb[0].mxu0
        %v5194 = vpop.f32.mrb[0].mxu0
        %v5195 = vadd.f32 %v5034, %v5194
        %v5196 = vpop.f32.mrb[0].mxu0
        %5197 = vmatprep.mubr.bf16.mxu0 0
        %5198 = vmatmul.mubr.bf16.gmra.mrb[0].mxu0 %v4952
        %v5199 = vpop.f32.mrb[0].mxu0
        %v5200 = vadd.f32 %v5039, %v5199
        %v5201 = vpop.f32.mrb[0].mxu0
        %v5202 = vpop.f32.mrb[0].mxu0
        %v5203 = vadd.f32 %v5042, %v5202
        %v5204 = vpop.f32.mrb[0].mxu0
        %5205 = vmatprep.mubr.bf16.mxu0 0
        %5206 = vmatmul.mubr.bf16.gmra.mrb[0].mxu0 %v4955
        %v5207 = vpop.f32.mrb[0].mxu0
        %v5208 = vadd.f32 %v5047, %v5207
        %v5209 = vpop.f32.mrb[0].mxu0
        %v5210 = vpop.f32.mrb[0].mxu0
        %v5211 = vadd.f32 %v5050, %v5210
        %v5212 = vpop.f32.mrb[0].mxu0
        %5213 = vmatprep.mubr.bf16.mxu0 0
        %5214 = vmatmul.mubr.bf16.gmra.mrb[0].mxu0 %v4958
        %v5215 = vpop.f32.mrb[0].mxu0
        %v5216 = vadd.f32 %v5055, %v5215
        %v5217 = vpop.f32.mrb[0].mxu0
        %v5218 = vpop.f32.mrb[0].mxu0
        %v5219 = vadd.f32 %v5058, %v5218
        %v5220 = vpop.f32.mrb[0].mxu0
        %5221 = vmatprep.mubr.bf16.mxu0 0
        %5222 = vmatmul.mubr.bf16.gmra.mrb[0].mxu0 %v4961
        %v5223 = vpop.f32.mrb[0].mxu0
        %v5224 = vadd.f32 %v5063, %v5223
        %v5225 = vpop.f32.mrb[0].mxu0
        %v5226 = vpop.f32.mrb[0].mxu0
        %v5227 = vadd.f32 %v5066, %v5226
        %v5228 = vpop.f32.mrb[0].mxu0
        %5229 = vmatprep.mubr.bf16.mxu0 0
        %5230 = vmatmul.mubr.bf16.gmra.mrb[0].mxu0 %v4964
        %v5231 = vpop.f32.mrb[0].mxu0
        %v5232 = vadd.f32 %v5071, %v5231
        %v5233 = vpop.f32.mrb[0].mxu0
        %v5234 = vpop.f32.mrb[0].mxu0
        %v5235 = vadd.f32 %v5074, %v5234
        %v5236 = vpop.f32.mrb[0].mxu0
        %5237 = vmatprep.mubr.bf16.mxu0 0
        %5238 = vmatmul.mubr.bf16.gmra.mrb[0].mxu0 %v4967
        %v5239 = vpop.f32.mrb[0].mxu0
        %v5240 = vadd.f32 %v5079, %v5239
        %v5241 = vpop.f32.mrb[0].mxu0
        %v5242 = vpop.f32.mrb[0].mxu0
        %v5243 = vadd.f32 %v5082, %v5242
        %v5244 = vpop.f32.mrb[0].mxu0
        %5245 = vmatprep.mubr.bf16.mxu0 0
        %5246 = vmatmul.mubr.bf16.gmra.mrb[0].mxu0 %v4970
        %v5247 = vpop.f32.mrb[0].mxu0
        %v5248 = vadd.f32 %v5087, %v5247
        %v5249 = vpop.f32.mrb[0].mxu0
        %v5250 = vpop.f32.mrb[0].mxu0
        %v5251 = vadd.f32 %v5090, %v5250
        %v5252 = vpop.f32.mrb[0].mxu0
        %5253 = vmatprep.mubr.bf16.mxu0 0
        %5254 = vmatmul.mubr.bf16.gmra.mrb[0].mxu0 %v4973
        %v5255 = vpop.f32.mrb[0].mxu0
        %v5256 = vadd.f32 %v5095, %v5255
        %v5257 = vpop.f32.mrb[0].mxu0
        %v5258 = vpop.f32.mrb[0].mxu0
        %v5259 = vadd.f32 %v5098, %v5258
        %v5260 = vpop.f32.mrb[0].mxu0
        %5261 = vmatprep.mubr.bf16.mxu0 0
        %5262 = vmatmul.mubr.bf16.gmra.mrb[0].mxu0 %v4976
        %v5263 = vpop.f32.mrb[0].mxu0
        %v5264 = vadd.f32 %v5103, %v5263
        %v5265 = vpop.f32.mrb[0].mxu0
        %v5266 = vpop.f32.mrb[0].mxu0
        %v5267 = vadd.f32 %v5106, %v5266
        %v5268 = vpop.f32.mrb[0].mxu0
        %5269 = vmatprep.mubr.bf16.mxu0 0
        %5270 = vmatmul.mubr.bf16.gmra.mrb[0].mxu0 %v4979
        %v5271 = vpop.f32.mrb[0].mxu0
        %v5272 = vadd.f32 %v5111, %v5271
        %v5273 = vpop.f32.mrb[0].mxu0
        %v5274 = vpop.f32.mrb[0].mxu0
        %v5275 = vadd.f32 %v5114, %v5274
        %v5276 = vpop.f32.mrb[0].mxu0
        %5277 = vmatprep.mubr.bf16.mxu0 0
        %5278 = vmatmul.mubr.bf16.gmra.mrb[0].mxu0 %v4982
        %v5279 = vpop.f32.mrb[0].mxu0
        %v5280 = vadd.f32 %v5119, %v5279
        %v5281 = vpop.f32.mrb[0].mxu0
        %v5282 = vpop.f32.mrb[0].mxu0
        %v5283 = vadd.f32 %v5122, %v5282
        %v5284 = vpop.f32.mrb[0].mxu0
        %5285 = vmatprep.mubr.bf16.mxu0 0
        %5286 = vmatmul.mubr.bf16.gmra.mrb[0].mxu0 %v4985
        %v5287 = vpop.f32.mrb[0].mxu0
        %v5288 = vadd.f32 %v5127, %v5287
        %v5289 = vpop.f32.mrb[0].mxu0
        %v5290 = vpop.f32.mrb[0].mxu0
        %v5291 = vadd.f32 %v5130, %v5290
        %v5292 = vpop.f32.mrb[0].mxu0
        %5293 = vmatprep.mubr.bf16.mxu0 0
        %5294 = vmatmul.mubr.bf16.gmra.mrb[0].mxu0 %v4988
        %v5295 = vpop.f32.mrb[0].mxu0
        %v5296 = vadd.f32 %v5135, %v5295
        %v5297 = vpop.f32.mrb[0].mxu0
        %v5298 = vpop.f32.mrb[0].mxu0
        %v5299 = vadd.f32 %v5138, %v5298
        %v5300 = vpop.f32.mrb[0].mxu0
        %5301 = vmatprep.mubr.bf16.mxu0 0
        %5302 = vmatmul.mubr.bf16.gmra.mrb[0].mxu0 %v4991
        %v5303 = vpop.f32.mrb[0].mxu0
        %v5304 = vadd.f32 %v5143, %v5303
        %v5305 = vpop.f32.mrb[0].mxu0
        %v5306 = vpop.f32.mrb[0].mxu0
        %v5307 = vadd.f32 %v5146, %v5306
        %v5308 = vpop.f32.mrb[0].mxu0
        %5309 = vmatprep.mubr.bf16.mxu0 0
        %5310 = vmatmul.mubr.bf16.gmra.mrb[0].mxu0 %v4994
        %v5311 = vpop.f32.mrb[0].mxu0
        %v5312 = vadd.f32 %v5151, %v5311
        %v5313 = vpop.f32.mrb[0].mxu0
        %v5314 = vpop.f32.mrb[0].mxu0
        %v5315 = vadd.f32 %v5154, %v5314
        %v5316 = vpop.f32.mrb[0].mxu0
        %5317 = vdwg.mxu0
        %v5318 = vmax.f32 %v5192, 0.0
        %v5319 = vmax.f32 %v5195, 0.0
        %v5320 = vmax.f32 %v5200, 0.0
        %v5321 = vmax.f32 %v5203, 0.0
        %v5322 = vmax.f32 %v5208, 0.0
        %v5323 = vmax.f32 %v5211, 0.0
        %v5324 = vmax.f32 %v5216, 0.0
        %v5325 = vmax.f32 %v5219, 0.0
        %v5326 = vmax.f32 %v5224, 0.0
        %v5327 = vmax.f32 %v5227, 0.0
        %v5328 = vmax.f32 %v5232, 0.0
        %v5329 = vmax.f32 %v5235, 0.0
        %v5330 = vmax.f32 %v5240, 0.0
        %v5331 = vmax.f32 %v5243, 0.0
        %v5332 = vmax.f32 %v5248, 0.0
        %v5333 = vmax.f32 %v5251, 0.0
        %v5334 = vmax.f32 %v5256, 0.0
        %v5335 = vmax.f32 %v5259, 0.0
        %v5336 = vmax.f32 %v5264, 0.0
        %v5337 = vmax.f32 %v5267, 0.0
        %v5338 = vmax.f32 %v5272, 0.0
        %v5339 = vmax.f32 %v5275, 0.0
        %v5340 = vmax.f32 %v5280, 0.0
        %v5341 = vmax.f32 %v5283, 0.0
        %v5342 = vmax.f32 %v5288, 0.0
        %v5343 = vmax.f32 %v5291, 0.0
        %v5344 = vmax.f32 %v5296, 0.0
        %v5345 = vmax.f32 %v5299, 0.0
        %v5346 = vmax.f32 %v5304, 0.0
        %v5347 = vmax.f32 %v5307, 0.0
        %v5348 = vmax.f32 %v5312, 0.0
        %v5349 = vmax.f32 %v5315, 0.0
        %v5350 = vpack.c.bf16 %v5319, %v5318
        %v5351 = vpack.c.bf16 %v5321, %v5320
        %v5352 = vpack.c.bf16 %v5323, %v5322
        %v5353 = vpack.c.bf16 %v5325, %v5324
        %v5354 = vpack.c.bf16 %v5327, %v5326
        %v5355 = vpack.c.bf16 %v5329, %v5328
        %v5356 = vpack.c.bf16 %v5331, %v5330
        %v5357 = vpack.c.bf16 %v5333, %v5332
        %v5358 = vpack.c.bf16 %v5335, %v5334
        %v5359 = vpack.c.bf16 %v5337, %v5336
        %v5360 = vpack.c.bf16 %v5339, %v5338
        %v5361 = vpack.c.bf16 %v5341, %v5340
        %v5362 = vpack.c.bf16 %v5343, %v5342
        %v5363 = vpack.c.bf16 %v5345, %v5344
        %v5364 = vpack.c.bf16 %v5347, %v5346
        %v5365 = vpack.c.bf16 %v5349, %v5348
        %v5366 = vld [vmem:[%s5] sm:$0xf]
        %v5367 = vld [vmem:[%s5 + $0x4] sm:$0xf]
        %v5368 = vld [vmem:[%s5 + $0x8] sm:$0xf]
        %v5369 = vld [vmem:[%s5 + $0xc] sm:$0xf]
        %v5370 = vld [vmem:[%s6] sm:$0x1]
        %v5372 = vlaneseq
        %v5373 = vshrl.u32 %v5372, 7
        %v5374 = vsub.s32 0, %v5373
        %v5375 = vrot.slane %v5370, %v5374
        %v5381 = vunpack.c.l.b16 %v5366
        %v5382 = vunpack.c.l.b16 %v5367
        %v5383 = vunpack.c.l.b16 %v5368
        %v5384 = vunpack.c.l.b16 %v5369
        %v5385 = vpack.c.b16 %v5382, %v5381
        %v5386 = vpack.c.b16 %v5384, %v5383
        %v5390 = vsel %vm3004, %v5350, 0
        %v5393 = vsel %vm3004, %v5351, 0
        %v5396 = vsel %vm3004, %v5352, 0
        %v5399 = vsel %vm3004, %v5353, 0
        %v5402 = vsel %vm3004, %v5354, 0
        %v5405 = vsel %vm3004, %v5355, 0
        %v5408 = vsel %vm3004, %v5356, 0
        %v5411 = vsel %vm3004, %v5357, 0
        %v5414 = vsel %vm3004, %v5358, 0
        %v5417 = vsel %vm3004, %v5359, 0
        %v5420 = vsel %vm3004, %v5360, 0
        %v5423 = vsel %vm3004, %v5361, 0
        %v5426 = vsel %vm3004, %v5362, 0
        %v5429 = vsel %vm3004, %v5363, 0
        %v5432 = vsel %vm3004, %v5364, 0
        %v5435 = vsel %vm3004, %v5365, 0
        %5437 = vmatprep.subr.bf16.mxu0 0
        %5438 = vmatpush1.bf16.msra.mxu0 %v5385
        %5439 = vmatprep.subr.bf16.mxu0 0
        %5440 = vmatpush1.bf16.msra.mxu0 %v5386
        %5441 = vmatprep.subr.bf16.mxu0 0
        %5442 = vmatpush1.bf16.msra.mxu0 0
        %5443 = vmatprep.subr.bf16.mxu0 0
        %5444 = vmatpush1.bf16.msra.mxu0 0
        %5445 = vmatprep.subr.bf16.mxu0 0
        %5446 = vmatpush1.bf16.msra.mxu0 0
        %5447 = vmatprep.subr.bf16.mxu0 0
        %5448 = vmatpush1.bf16.msra.mxu0 0
        %5449 = vmatprep.subr.bf16.mxu0 0
        %5450 = vmatpush1.bf16.msra.mxu0 0
        %5451 = vmatprep.subr.bf16.mxu0 0
        %5452 = vmatpush1.bf16.msra.mxu0 0
        %5453 = vmatprep.subr.bf16.mxu0 0
        %5454 = vmatpush1.bf16.msra.mxu0 0
        %5455 = vmatprep.subr.bf16.mxu0 0
        %5456 = vmatpush1.bf16.msra.mxu0 0
        %5457 = vmatprep.subr.bf16.mxu0 0
        %5458 = vmatpush1.bf16.msra.mxu0 0
        %5459 = vmatprep.subr.bf16.mxu0 0
        %5460 = vmatpush1.bf16.msra.mxu0 0
        %5461 = vmatprep.subr.bf16.mxu0 0
        %5462 = vmatpush1.bf16.msra.mxu0 0
        %5463 = vmatprep.subr.bf16.mxu0 0
        %5464 = vmatpush1.bf16.msra.mxu0 0
        %5465 = vmatprep.subr.bf16.mxu0 0
        %5466 = vmatpush1.bf16.msra.mxu0 0
        %5467 = vmatprep.subr.bf16.mxu0 0
        %5468 = vmatpush1.bf16.msra.mxu0 0
        %5469 = vmatprep.mubr.bf16.mxu0 0
        %5470 = vmatmul.mubr.bf16.gmra.mrb[0].mxu0 %v5390
        %v5471 = vpop.f32.mrb[0].mxu0
        %v5472 = vadd.f32 %v5375, %v5471
        %v5473 = vpop.f32.mrb[0].mxu0
        %v5474 = vpop.f32.mrb[0].mxu0
        %v5475 = vadd.f32 %v5375, %v5474
        %v5476 = vpop.f32.mrb[0].mxu0
        %5477 = vmatprep.mubr.bf16.mxu0 0
        %5478 = vmatmul.mubr.bf16.gmra.mrb[0].mxu0 %v5393
        %v5479 = vpop.f32.mrb[0].mxu0
        %v5480 = vadd.f32 %v5375, %v5479
        %v5481 = vpop.f32.mrb[0].mxu0
        %v5482 = vpop.f32.mrb[0].mxu0
        %v5483 = vadd.f32 %v5375, %v5482
        %v5484 = vpop.f32.mrb[0].mxu0
        %5485 = vmatprep.mubr.bf16.mxu0 0
        %5486 = vmatmul.mubr.bf16.gmra.mrb[0].mxu0 %v5396
        %v5487 = vpop.f32.mrb[0].mxu0
        %v5488 = vadd.f32 %v5375, %v5487
        %v5489 = vpop.f32.mrb[0].mxu0
        %v5490 = vpop.f32.mrb[0].mxu0
        %v5491 = vadd.f32 %v5375, %v5490
        %v5492 = vpop.f32.mrb[0].mxu0
        %5493 = vmatprep.mubr.bf16.mxu0 0
        %5494 = vmatmul.mubr.bf16.gmra.mrb[0].mxu0 %v5399
        %v5495 = vpop.f32.mrb[0].mxu0
        %v5496 = vadd.f32 %v5375, %v5495
        %v5497 = vpop.f32.mrb[0].mxu0
        %v5498 = vpop.f32.mrb[0].mxu0
        %v5499 = vadd.f32 %v5375, %v5498
        %v5500 = vpop.f32.mrb[0].mxu0
        %5501 = vmatprep.mubr.bf16.mxu0 0
        %5502 = vmatmul.mubr.bf16.gmra.mrb[0].mxu0 %v5402
        %v5503 = vpop.f32.mrb[0].mxu0
        %v5504 = vadd.f32 %v5375, %v5503
        %v5505 = vpop.f32.mrb[0].mxu0
        %v5506 = vpop.f32.mrb[0].mxu0
        %v5507 = vadd.f32 %v5375, %v5506
        %v5508 = vpop.f32.mrb[0].mxu0
        %5509 = vmatprep.mubr.bf16.mxu0 0
        %5510 = vmatmul.mubr.bf16.gmra.mrb[0].mxu0 %v5405
        %v5511 = vpop.f32.mrb[0].mxu0
        %v5512 = vadd.f32 %v5375, %v5511
        %v5513 = vpop.f32.mrb[0].mxu0
        %v5514 = vpop.f32.mrb[0].mxu0
        %v5515 = vadd.f32 %v5375, %v5514
        %v5516 = vpop.f32.mrb[0].mxu0
        %5517 = vmatprep.mubr.bf16.mxu0 0
        %5518 = vmatmul.mubr.bf16.gmra.mrb[0].mxu0 %v5408
        %v5519 = vpop.f32.mrb[0].mxu0
        %v5520 = vadd.f32 %v5375, %v5519
        %v5521 = vpop.f32.mrb[0].mxu0
        %v5522 = vpop.f32.mrb[0].mxu0
        %v5523 = vadd.f32 %v5375, %v5522
        %v5524 = vpop.f32.mrb[0].mxu0
        %5525 = vmatprep.mubr.bf16.mxu0 0
        %5526 = vmatmul.mubr.bf16.gmra.mrb[0].mxu0 %v5411
        %v5527 = vpop.f32.mrb[0].mxu0
        %v5528 = vadd.f32 %v5375, %v5527
        %v5529 = vpop.f32.mrb[0].mxu0
        %v5530 = vpop.f32.mrb[0].mxu0
        %v5531 = vadd.f32 %v5375, %v5530
        %v5532 = vpop.f32.mrb[0].mxu0
        %5533 = vmatprep.mubr.bf16.mxu0 0
        %5534 = vmatmul.mubr.bf16.gmra.mrb[0].mxu0 %v5414
        %v5535 = vpop.f32.mrb[0].mxu0
        %v5536 = vadd.f32 %v5375, %v5535
        %v5537 = vpop.f32.mrb[0].mxu0
        %v5538 = vpop.f32.mrb[0].mxu0
        %v5539 = vadd.f32 %v5375, %v5538
        %v5540 = vpop.f32.mrb[0].mxu0
        %5541 = vmatprep.mubr.bf16.mxu0 0
        %5542 = vmatmul.mubr.bf16.gmra.mrb[0].mxu0 %v5417
        %v5543 = vpop.f32.mrb[0].mxu0
        %v5544 = vadd.f32 %v5375, %v5543
        %v5545 = vpop.f32.mrb[0].mxu0
        %v5546 = vpop.f32.mrb[0].mxu0
        %v5547 = vadd.f32 %v5375, %v5546
        %v5548 = vpop.f32.mrb[0].mxu0
        %5549 = vmatprep.mubr.bf16.mxu0 0
        %5550 = vmatmul.mubr.bf16.gmra.mrb[0].mxu0 %v5420
        %v5551 = vpop.f32.mrb[0].mxu0
        %v5552 = vadd.f32 %v5375, %v5551
        %v5553 = vpop.f32.mrb[0].mxu0
        %v5554 = vpop.f32.mrb[0].mxu0
        %v5555 = vadd.f32 %v5375, %v5554
        %v5556 = vpop.f32.mrb[0].mxu0
        %5557 = vmatprep.mubr.bf16.mxu0 0
        %5558 = vmatmul.mubr.bf16.gmra.mrb[0].mxu0 %v5423
        %v5559 = vpop.f32.mrb[0].mxu0
        %v5560 = vadd.f32 %v5375, %v5559
        %v5561 = vpop.f32.mrb[0].mxu0
        %v5562 = vpop.f32.mrb[0].mxu0
        %v5563 = vadd.f32 %v5375, %v5562
        %v5564 = vpop.f32.mrb[0].mxu0
        %5565 = vmatprep.mubr.bf16.mxu0 0
        %5566 = vmatmul.mubr.bf16.gmra.mrb[0].mxu0 %v5426
        %v5567 = vpop.f32.mrb[0].mxu0
        %v5568 = vadd.f32 %v5375, %v5567
        %v5569 = vpop.f32.mrb[0].mxu0
        %v5570 = vpop.f32.mrb[0].mxu0
        %v5571 = vadd.f32 %v5375, %v5570
        %v5572 = vpop.f32.mrb[0].mxu0
        %5573 = vmatprep.mubr.bf16.mxu0 0
        %5574 = vmatmul.mubr.bf16.gmra.mrb[0].mxu0 %v5429
        %v5575 = vpop.f32.mrb[0].mxu0
        %v5576 = vadd.f32 %v5375, %v5575
        %v5577 = vpop.f32.mrb[0].mxu0
        %v5578 = vpop.f32.mrb[0].mxu0
        %v5579 = vadd.f32 %v5375, %v5578
        %v5580 = vpop.f32.mrb[0].mxu0
        %5581 = vmatprep.mubr.bf16.mxu0 0
        %5582 = vmatmul.mubr.bf16.gmra.mrb[0].mxu0 %v5432
        %v5583 = vpop.f32.mrb[0].mxu0
        %v5584 = vadd.f32 %v5375, %v5583
        %v5585 = vpop.f32.mrb[0].mxu0
        %v5586 = vpop.f32.mrb[0].mxu0
        %v5587 = vadd.f32 %v5375, %v5586
        %v5588 = vpop.f32.mrb[0].mxu0
        %5589 = vmatprep.mubr.bf16.mxu0 0
        %5590 = vmatmul.mubr.bf16.gmra.mrb[0].mxu0 %v5435
        %v5591 = vpop.f32.mrb[0].mxu0
        %v5592 = vadd.f32 %v5375, %v5591
        %v5593 = vpop.f32.mrb[0].mxu0
        %v5594 = vpop.f32.mrb[0].mxu0
        %v5595 = vadd.f32 %v5375, %v5594
        %v5596 = vpop.f32.mrb[0].mxu0
        %5597 = vdwg.mxu0
        %v5598 = vlaneseq
        %v5599 = vand.u32 %v5598, 127
        %v5600 = vsub.f32 0.0, %v5472
        %v5601 = vsub.f32 0.0, %v5475
        %v5602 = vsub.f32 0.0, %v5480
        %v5603 = vsub.f32 0.0, %v5483
        %v5604 = vsub.f32 0.0, %v5488
        %v5605 = vsub.f32 0.0, %v5491
        %v5606 = vsub.f32 0.0, %v5496
        %v5607 = vsub.f32 0.0, %v5499
        %v5608 = vsub.f32 0.0, %v5504
        %v5609 = vsub.f32 0.0, %v5507
        %v5610 = vsub.f32 0.0, %v5512
        %v5611 = vsub.f32 0.0, %v5515
        %v5612 = vsub.f32 0.0, %v5520
        %v5613 = vsub.f32 0.0, %v5523
        %v5614 = vsub.f32 0.0, %v5528
        %v5615 = vsub.f32 0.0, %v5531
        %v5616 = vsub.f32 0.0, %v5536
        %v5617 = vsub.f32 0.0, %v5539
        %v5618 = vsub.f32 0.0, %v5544
        %v5619 = vsub.f32 0.0, %v5547
        %v5620 = vsub.f32 0.0, %v5552
        %v5621 = vsub.f32 0.0, %v5555
        %v5622 = vsub.f32 0.0, %v5560
        %v5623 = vsub.f32 0.0, %v5563
        %v5624 = vsub.f32 0.0, %v5568
        %v5625 = vsub.f32 0.0, %v5571
        %v5626 = vsub.f32 0.0, %v5576
        %v5627 = vsub.f32 0.0, %v5579
        %v5628 = vsub.f32 0.0, %v5584
        %v5629 = vsub.f32 0.0, %v5587
        %v5630 = vsub.f32 0.0, %v5592
        %v5631 = vsub.f32 0.0, %v5595
        %v5632 = vmul.f32 %v5600, 1.442695
        %v5633 = vpow.pop %v5632
        %v5634 = vmul.f32 %v5601, 1.442695
        %v5635 = vpow.pop %v5634
        %v5636 = vmul.f32 %v5602, 1.442695
        %v5637 = vpow.pop %v5636
        %v5638 = vmul.f32 %v5603, 1.442695
        %v5639 = vpow.pop %v5638
        %v5640 = vmul.f32 %v5604, 1.442695
        %v5641 = vpow.pop %v5640
        %v5642 = vmul.f32 %v5605, 1.442695
        %v5643 = vpow.pop %v5642
        %v5644 = vmul.f32 %v5606, 1.442695
        %v5645 = vpow.pop %v5644
        %v5646 = vmul.f32 %v5607, 1.442695
        %v5647 = vpow.pop %v5646
        %v5648 = vmul.f32 %v5608, 1.442695
        %v5649 = vpow.pop %v5648
        %v5650 = vmul.f32 %v5609, 1.442695
        %v5651 = vpow.pop %v5650
        %v5652 = vmul.f32 %v5610, 1.442695
        %v5653 = vpow.pop %v5652
        %v5654 = vmul.f32 %v5611, 1.442695
        %v5655 = vpow.pop %v5654
        %v5656 = vmul.f32 %v5612, 1.442695
        %v5657 = vpow.pop %v5656
        %v5658 = vmul.f32 %v5613, 1.442695
        %v5659 = vpow.pop %v5658
        %v5660 = vmul.f32 %v5614, 1.442695
        %v5661 = vpow.pop %v5660
        %v5662 = vmul.f32 %v5615, 1.442695
        %v5663 = vpow.pop %v5662
        %v5664 = vmul.f32 %v5616, 1.442695
        %v5665 = vpow.pop %v5664
        %v5666 = vmul.f32 %v5617, 1.442695
        %v5667 = vpow.pop %v5666
        %v5668 = vmul.f32 %v5618, 1.442695
        %v5669 = vpow.pop %v5668
        %v5670 = vmul.f32 %v5619, 1.442695
        %v5671 = vpow.pop %v5670
        %v5672 = vmul.f32 %v5620, 1.442695
        %v5673 = vpow.pop %v5672
        %v5674 = vmul.f32 %v5621, 1.442695
        %v5675 = vpow.pop %v5674
        %v5676 = vmul.f32 %v5622, 1.442695
        %v5677 = vpow.pop %v5676
        %v5678 = vmul.f32 %v5623, 1.442695
        %v5679 = vpow.pop %v5678
        %v5680 = vmul.f32 %v5624, 1.442695
        %v5681 = vpow.pop %v5680
        %v5682 = vmul.f32 %v5625, 1.442695
        %v5683 = vpow.pop %v5682
        %v5684 = vmul.f32 %v5626, 1.442695
        %v5685 = vpow.pop %v5684
        %v5686 = vmul.f32 %v5627, 1.442695
        %v5687 = vpow.pop %v5686
        %v5688 = vmul.f32 %v5628, 1.442695
        %v5689 = vpow.pop %v5688
        %v5690 = vmul.f32 %v5629, 1.442695
        %v5691 = vpow.pop %v5690
        %v5692 = vmul.f32 %v5630, 1.442695
        %v5693 = vpow.pop %v5692
        %v5694 = vmul.f32 %v5631, 1.442695
        %v5695 = vpow.pop %v5694
        %v5696 = vadd.f32 %v5633, 1.0
        %v5697 = vadd.f32 %v5635, 1.0
        %v5698 = vadd.f32 %v5637, 1.0
        %v5699 = vadd.f32 %v5639, 1.0
        %v5700 = vadd.f32 %v5641, 1.0
        %v5701 = vadd.f32 %v5643, 1.0
        %v5702 = vadd.f32 %v5645, 1.0
        %v5703 = vadd.f32 %v5647, 1.0
        %v5704 = vadd.f32 %v5649, 1.0
        %v5705 = vadd.f32 %v5651, 1.0
        %v5706 = vadd.f32 %v5653, 1.0
        %v5707 = vadd.f32 %v5655, 1.0
        %v5708 = vadd.f32 %v5657, 1.0
        %v5709 = vadd.f32 %v5659, 1.0
        %v5710 = vadd.f32 %v5661, 1.0
        %v5711 = vadd.f32 %v5663, 1.0
        %v5712 = vadd.f32 %v5665, 1.0
        %v5713 = vadd.f32 %v5667, 1.0
        %v5714 = vadd.f32 %v5669, 1.0
        %v5715 = vadd.f32 %v5671, 1.0
        %v5716 = vadd.f32 %v5673, 1.0
        %v5717 = vadd.f32 %v5675, 1.0
        %v5718 = vadd.f32 %v5677, 1.0
        %v5719 = vadd.f32 %v5679, 1.0
        %v5720 = vadd.f32 %v5681, 1.0
        %v5721 = vadd.f32 %v5683, 1.0
        %v5722 = vadd.f32 %v5685, 1.0
        %v5723 = vadd.f32 %v5687, 1.0
        %v5724 = vadd.f32 %v5689, 1.0
        %v5725 = vadd.f32 %v5691, 1.0
        %v5726 = vadd.f32 %v5693, 1.0
        %v5727 = vadd.f32 %v5695, 1.0
        %v5728 = vrcp.pop %v5696
        %v5729 = vrcp.pop %v5697
        %v5730 = vrcp.pop %v5698
        %v5731 = vrcp.pop %v5699
        %v5732 = vrcp.pop %v5700
        %v5733 = vrcp.pop %v5701
        %v5734 = vrcp.pop %v5702
        %v5735 = vrcp.pop %v5703
        %v5736 = vrcp.pop %v5704
        %v5737 = vrcp.pop %v5705
        %v5738 = vrcp.pop %v5706
        %v5739 = vrcp.pop %v5707
        %v5740 = vrcp.pop %v5708
        %v5741 = vrcp.pop %v5709
        %v5742 = vrcp.pop %v5710
        %v5743 = vrcp.pop %v5711
        %v5744 = vrcp.pop %v5712
        %v5745 = vrcp.pop %v5713
        %v5746 = vrcp.pop %v5714
        %v5747 = vrcp.pop %v5715
        %v5748 = vrcp.pop %v5716
        %v5749 = vrcp.pop %v5717
        %v5750 = vrcp.pop %v5718
        %v5751 = vrcp.pop %v5719
        %v5752 = vrcp.pop %v5720
        %v5753 = vrcp.pop %v5721
        %v5754 = vrcp.pop %v5722
        %v5755 = vrcp.pop %v5723
        %v5756 = vrcp.pop %v5724
        %v5757 = vrcp.pop %v5725
        %v5758 = vrcp.pop %v5726
        %v5759 = vrcp.pop %v5727
        %vm5760 = vcmp.lt.s32.totalorder %v5599, 3
        %v5761 = vsel %vm5760, %v5728, %v5472
        %v5762 = vsel %vm5760, %v5729, %v5475
        %v5763 = vsel %vm5760, %v5730, %v5480
        %v5764 = vsel %vm5760, %v5731, %v5483
        %v5765 = vsel %vm5760, %v5732, %v5488
        %v5766 = vsel %vm5760, %v5733, %v5491
        %v5767 = vsel %vm5760, %v5734, %v5496
        %v5768 = vsel %vm5760, %v5735, %v5499
        %v5769 = vsel %vm5760, %v5736, %v5504
        %v5770 = vsel %vm5760, %v5737, %v5507
        %v5771 = vsel %vm5760, %v5738, %v5512
        %v5772 = vsel %vm5760, %v5739, %v5515
        %v5773 = vsel %vm5760, %v5740, %v5520
        %v5774 = vsel %vm5760, %v5741, %v5523
        %v5775 = vsel %vm5760, %v5742, %v5528
        %v5776 = vsel %vm5760, %v5743, %v5531
        %v5777 = vsel %vm5760, %v5744, %v5536
        %v5778 = vsel %vm5760, %v5745, %v5539
        %v5779 = vsel %vm5760, %v5746, %v5544
        %v5780 = vsel %vm5760, %v5747, %v5547
        %v5781 = vsel %vm5760, %v5748, %v5552
        %v5782 = vsel %vm5760, %v5749, %v5555
        %v5783 = vsel %vm5760, %v5750, %v5560
        %v5784 = vsel %vm5760, %v5751, %v5563
        %v5785 = vsel %vm5760, %v5752, %v5568
        %v5786 = vsel %vm5760, %v5753, %v5571
        %v5787 = vsel %vm5760, %v5754, %v5576
        %v5788 = vsel %vm5760, %v5755, %v5579
        %v5789 = vsel %vm5760, %v5756, %v5584
        %v5790 = vsel %vm5760, %v5757, %v5587
        %v5791 = vsel %vm5760, %v5758, %v5592
        %v5792 = vsel %vm5760, %v5759, %v5595
        %v5793 = vpack.c.bf16 %v5762, %v5761
        %v5794 = vpack.c.bf16 %v5764, %v5763
        %v5795 = vpack.c.bf16 %v5766, %v5765
        %v5796 = vpack.c.bf16 %v5768, %v5767
        %v5797 = vpack.c.bf16 %v5770, %v5769
        %v5798 = vpack.c.bf16 %v5772, %v5771
        %v5799 = vpack.c.bf16 %v5774, %v5773
        %v5800 = vpack.c.bf16 %v5776, %v5775
        %v5801 = vpack.c.bf16 %v5778, %v5777
        %v5802 = vpack.c.bf16 %v5780, %v5779
        %v5803 = vpack.c.bf16 %v5782, %v5781
        %v5804 = vpack.c.bf16 %v5784, %v5783
        %v5805 = vpack.c.bf16 %v5786, %v5785
        %v5806 = vpack.c.bf16 %v5788, %v5787
        %v5807 = vpack.c.bf16 %v5790, %v5789
        %v5808 = vpack.c.bf16 %v5792, %v5791
        %v5825 = vunpack.c.l.b16 %v5793
        %v5826 = vunpack.c.h.b16 %v5793
        %v5827 = vunpack.c.l.b16 %v5794
        %v5828 = vunpack.c.h.b16 %v5794
        %v5829 = vunpack.c.l.b16 %v5795
        %v5830 = vunpack.c.h.b16 %v5795
        %v5831 = vunpack.c.l.b16 %v5796
        %v5832 = vunpack.c.h.b16 %v5796
        %v5833 = vunpack.c.l.b16 %v5797
        %v5834 = vunpack.c.h.b16 %v5797
        %v5835 = vunpack.c.l.b16 %v5798
        %v5836 = vunpack.c.h.b16 %v5798
        %v5837 = vunpack.c.l.b16 %v5799
        %v5838 = vunpack.c.h.b16 %v5799
        %v5839 = vunpack.c.l.b16 %v5800
        %v5840 = vunpack.c.h.b16 %v5800
        %v5841 = vunpack.c.l.b16 %v5801
        %v5842 = vunpack.c.h.b16 %v5801
        %v5843 = vunpack.c.l.b16 %v5802
        %v5844 = vunpack.c.h.b16 %v5802
        %v5845 = vunpack.c.l.b16 %v5803
        %v5846 = vunpack.c.h.b16 %v5803
        %v5847 = vunpack.c.l.b16 %v5804
        %v5848 = vunpack.c.h.b16 %v5804
        %v5849 = vunpack.c.l.b16 %v5805
        %v5850 = vunpack.c.h.b16 %v5805
        %v5851 = vunpack.c.l.b16 %v5806
        %v5852 = vunpack.c.h.b16 %v5806
        %v5853 = vunpack.c.l.b16 %v5807
        %v5854 = vunpack.c.h.b16 %v5807
        %v5855 = vunpack.c.l.b16 %v5808
        %v5856 = vunpack.c.h.b16 %v5808
        %v5857 = vpack.c.b16 %v5825, %v5825
        %v5858 = vpack.c.b16 %v5826, %v5826
        %v5859 = vpack.c.b16 %v5827, %v5827
        %v5860 = vpack.c.b16 %v5828, %v5828
        %v5861 = vpack.c.b16 %v5829, %v5829
        %v5862 = vpack.c.b16 %v5830, %v5830
        %v5863 = vpack.c.b16 %v5831, %v5831
        %v5864 = vpack.c.b16 %v5832, %v5832
        %v5865 = vpack.c.b16 %v5833, %v5833
        %v5866 = vpack.c.b16 %v5834, %v5834
        %v5867 = vpack.c.b16 %v5835, %v5835
        %v5868 = vpack.c.b16 %v5836, %v5836
        %v5869 = vpack.c.b16 %v5837, %v5837
        %v5870 = vpack.c.b16 %v5838, %v5838
        %v5871 = vpack.c.b16 %v5839, %v5839
        %v5872 = vpack.c.b16 %v5840, %v5840
        %v5873 = vpack.c.b16 %v5841, %v5841
        %v5874 = vpack.c.b16 %v5842, %v5842
        %v5875 = vpack.c.b16 %v5843, %v5843
        %v5876 = vpack.c.b16 %v5844, %v5844
        %v5877 = vpack.c.b16 %v5845, %v5845
        %v5878 = vpack.c.b16 %v5846, %v5846
        %v5879 = vpack.c.b16 %v5847, %v5847
        %v5880 = vpack.c.b16 %v5848, %v5848
        %v5881 = vpack.c.b16 %v5849, %v5849
        %v5882 = vpack.c.b16 %v5850, %v5850
        %v5883 = vpack.c.b16 %v5851, %v5851
        %v5884 = vpack.c.b16 %v5852, %v5852
        %v5885 = vpack.c.b16 %v5853, %v5853
        %v5886 = vpack.c.b16 %v5854, %v5854
        %v5887 = vpack.c.b16 %v5855, %v5855
        %v5888 = vpack.c.b16 %v5856, %v5856
        %5921 = vst [vmem:[%s498] sm:$0xf] %v5857
        %5922 = vst [vmem:[%s498 + $0x4] sm:$0xf] %v5858
        %5923 = vst [vmem:[%s498 + $0x8] sm:$0xf] %v5859
        %5924 = vst [vmem:[%s498 + $0xc] sm:$0xf] %v5860
        %5925 = vst [vmem:[%s498 + $0x10] sm:$0xf] %v5861
        %5926 = vst [vmem:[%s498 + $0x14] sm:$0xf] %v5862
        %5927 = vst [vmem:[%s498 + $0x18] sm:$0xf] %v5863
        %5928 = vst [vmem:[%s498 + $0x1c] sm:$0xf] %v5864
        %5929 = vst [vmem:[%s498 + $0x20] sm:$0xf] %v5865
        %5930 = vst [vmem:[%s498 + $0x24] sm:$0xf] %v5866
        %5931 = vst [vmem:[%s498 + $0x28] sm:$0xf] %v5867
        %5932 = vst [vmem:[%s498 + $0x2c] sm:$0xf] %v5868
        %5933 = vst [vmem:[%s498 + $0x30] sm:$0xf] %v5869
        %5934 = vst [vmem:[%s498 + $0x34] sm:$0xf] %v5870
        %5935 = vst [vmem:[%s498 + $0x38] sm:$0xf] %v5871
        %5936 = vst [vmem:[%s498 + $0x3c] sm:$0xf] %v5872
        %5937 = vst [vmem:[%s498 + $0x40] sm:$0xf] %v5873
        %5938 = vst [vmem:[%s498 + $0x44] sm:$0xf] %v5874
        %5939 = vst [vmem:[%s498 + $0x48] sm:$0xf] %v5875
        %5940 = vst [vmem:[%s498 + $0x4c] sm:$0xf] %v5876
        %5941 = vst [vmem:[%s498 + $0x50] sm:$0xf] %v5877
        %5942 = vst [vmem:[%s498 + $0x54] sm:$0xf] %v5878
        %5943 = vst [vmem:[%s498 + $0x58] sm:$0xf] %v5879
        %5944 = vst [vmem:[%s498 + $0x5c] sm:$0xf] %v5880
        %5945 = vst [vmem:[%s498 + $0x60] sm:$0xf] %v5881
        %5946 = vst [vmem:[%s498 + $0x64] sm:$0xf] %v5882
        %5947 = vst [vmem:[%s498 + $0x68] sm:$0xf] %v5883
        %5948 = vst [vmem:[%s498 + $0x6c] sm:$0xf] %v5884
        %5949 = vst [vmem:[%s498 + $0x70] sm:$0xf] %v5885
        %5950 = vst [vmem:[%s498 + $0x74] sm:$0xf] %v5886
        %5951 = vst [vmem:[%s498 + $0x78] sm:$0xf] %v5887
        %5952 = vst [vmem:[%s498 + $0x7c] sm:$0xf] %v5888
        %v5953 = vpack.c.bf16 %v3075, %v3075
        %v5954 = vld [vmem:[%s7] sm:$0xf]
        %v5955 = vld [vmem:[%s7 + $0x4] sm:$0xf]
        %v5956 = vld [vmem:[%s7 + $0x8] sm:$0xf]
        %v5957 = vld [vmem:[%s7 + $0xc] sm:$0xf]
        %v5958 = vld [vmem:[%s8] sm:$0x1]
        %v5963 = vunpack.c.l.b16 %v5954
        %v5964 = vunpack.c.l.b16 %v5955
        %v5965 = vunpack.c.l.b16 %v5956
        %v5966 = vunpack.c.l.b16 %v5957
        %v5967 = vpack.c.b16 %v5964, %v5963
        %v5968 = vpack.c.b16 %v5966, %v5965
        %v5972 = vsel %vm3004, %v5953, 0
        %5974 = vmatprep.subr.bf16.mxu0 0
        %5975 = vmatpush1.bf16.msra.mxu0 %v5967
        %5976 = vmatprep.subr.bf16.mxu0 0
        %5977 = vmatpush1.bf16.msra.mxu0 %v5968
        %5978 = vmatprep.subr.bf16.mxu0 0
        %5979 = vmatpush1.bf16.msra.mxu0 0
        %5980 = vmatprep.subr.bf16.mxu0 0
        %5981 = vmatpush1.bf16.msra.mxu0 0
        %5982 = vmatprep.subr.bf16.mxu0 0
        %5983 = vmatpush1.bf16.msra.mxu0 0
        %5984 = vmatprep.subr.bf16.mxu0 0
        %5985 = vmatpush1.bf16.msra.mxu0 0
        %5986 = vmatprep.subr.bf16.mxu0 0
        %5987 = vmatpush1.bf16.msra.mxu0 0
        %5988 = vmatprep.subr.bf16.mxu0 0
        %5989 = vmatpush1.bf16.msra.mxu0 0
        %5990 = vmatprep.subr.bf16.mxu0 0
        %5991 = vmatpush1.bf16.msra.mxu0 0
        %5992 = vmatprep.subr.bf16.mxu0 0
        %5993 = vmatpush1.bf16.msra.mxu0 0
        %5994 = vmatprep.subr.bf16.mxu0 0
        %5995 = vmatpush1.bf16.msra.mxu0 0
        %5996 = vmatprep.subr.bf16.mxu0 0
        %5997 = vmatpush1.bf16.msra.mxu0 0
        %5998 = vmatprep.subr.bf16.mxu0 0
        %5999 = vmatpush1.bf16.msra.mxu0 0
        %6000 = vmatprep.subr.bf16.mxu0 0
        %6001 = vmatpush1.bf16.msra.mxu0 0
        %6002 = vmatprep.subr.bf16.mxu0 0
        %6003 = vmatpush1.bf16.msra.mxu0 0
        %6004 = vmatprep.subr.bf16.mxu0 0
        %6005 = vmatpush1.bf16.msra.mxu0 0
        %6006 = vmatprep.mubr.bf16.mxu0 0
        %6007 = vmatmul.mubr.bf16.gmra.mrb[0].mxu0 %v5972
        %v6008 = vpop.f32.mrb[0].mxu0
        %v6009 = vadd.f32 %v5958, %v6008
        %v6010 = vpop.f32.mrb[0].mxu0
        %v6011 = vpop.f32.mrb[0].mxu0
        %v6012 = vpop.f32.mrb[0].mxu0
        %6013 = vdwg.mxu0
        %v6014 = vmax.f32 %v6009, 0.0
        %v6015 = vpack.c.bf16 %v6014, %v6014
        %v6016 = vld [vmem:[%s9] sm:$0xf]
        %v6017 = vld [vmem:[%s9 + $0x4] sm:$0xf]
        %v6018 = vld [vmem:[%s9 + $0x8] sm:$0xf]
        %v6019 = vld [vmem:[%s9 + $0xc] sm:$0xf]
        %v6020 = vld [vmem:[%s9 + $0x10] sm:$0xf]
        %v6021 = vld [vmem:[%s9 + $0x14] sm:$0xf]
        %v6022 = vld [vmem:[%s9 + $0x18] sm:$0xf]
        %v6023 = vld [vmem:[%s9 + $0x1c] sm:$0xf]
        %v6024 = vld [vmem:[%s10] sm:$0x1]
        %v6033 = vunpack.c.l.b16 %v6016
        %v6034 = vunpack.c.l.b16 %v6017
        %v6035 = vunpack.c.l.b16 %v6018
        %v6036 = vunpack.c.l.b16 %v6019
        %v6037 = vunpack.c.l.b16 %v6020
        %v6038 = vunpack.c.l.b16 %v6021
        %v6039 = vunpack.c.l.b16 %v6022
        %v6040 = vunpack.c.l.b16 %v6023
        %v6041 = vpack.c.b16 %v6034, %v6033
        %v6042 = vpack.c.b16 %v6036, %v6035
        %v6043 = vpack.c.b16 %v6038, %v6037
        %v6044 = vpack.c.b16 %v6040, %v6039
        %v6050 = vsel %vm4587, %v6015, 0
        %6052 = vmatprep.subr.bf16.mxu0 0
        %6053 = vmatpush1.bf16.msra.mxu0 %v6041
        %6054 = vmatprep.subr.bf16.mxu0 0
        %6055 = vmatpush1.bf16.msra.mxu0 %v6042
        %6056 = vmatprep.subr.bf16.mxu0 0
        %6057 = vmatpush1.bf16.msra.mxu0 %v6043
        %6058 = vmatprep.subr.bf16.mxu0 0
        %6059 = vmatpush1.bf16.msra.mxu0 %v6044
        %6060 = vmatprep.subr.bf16.mxu0 0
        %6061 = vmatpush1.bf16.msra.mxu0 0
        %6062 = vmatprep.subr.bf16.mxu0 0
        %6063 = vmatpush1.bf16.msra.mxu0 0
        %6064 = vmatprep.subr.bf16.mxu0 0
        %6065 = vmatpush1.bf16.msra.mxu0 0
        %6066 = vmatprep.subr.bf16.mxu0 0
        %6067 = vmatpush1.bf16.msra.mxu0 0
        %6068 = vmatprep.subr.bf16.mxu0 0
        %6069 = vmatpush1.bf16.msra.mxu0 0
        %6070 = vmatprep.subr.bf16.mxu0 0
        %6071 = vmatpush1.bf16.msra.mxu0 0
        %6072 = vmatprep.subr.bf16.mxu0 0
        %6073 = vmatpush1.bf16.msra.mxu0 0
        %6074 = vmatprep.subr.bf16.mxu0 0
        %6075 = vmatpush1.bf16.msra.mxu0 0
        %6076 = vmatprep.subr.bf16.mxu0 0
        %6077 = vmatpush1.bf16.msra.mxu0 0
        %6078 = vmatprep.subr.bf16.mxu0 0
        %6079 = vmatpush1.bf16.msra.mxu0 0
        %6080 = vmatprep.subr.bf16.mxu0 0
        %6081 = vmatpush1.bf16.msra.mxu0 0
        %6082 = vmatprep.subr.bf16.mxu0 0
        %6083 = vmatpush1.bf16.msra.mxu0 0
        %6084 = vmatprep.mubr.bf16.mxu0 0
        %6085 = vmatmul.mubr.bf16.gmra.mrb[0].mxu0 %v6050
        %v6086 = vpop.f32.mrb[0].mxu0
        %v6087 = vadd.f32 %v6024, %v6086
        %v6088 = vpop.f32.mrb[0].mxu0
        %v6089 = vpop.f32.mrb[0].mxu0
        %v6090 = vpop.f32.mrb[0].mxu0
        %6091 = vdwg.mxu0
        %v6092 = vmax.f32 %v6087, 0.0
        %v6093 = vpack.c.bf16 %v6092, %v6092
        %v6094 = vld [vmem:[%s11] sm:$0xf]
        %v6095 = vld [vmem:[%s11 + $0x4] sm:$0xf]
        %v6096 = vld [vmem:[%s11 + $0x8] sm:$0xf]
        %v6097 = vld [vmem:[%s11 + $0xc] sm:$0xf]
        %v6098 = vld [vmem:[%s11 + $0x10] sm:$0xf]
        %v6099 = vld [vmem:[%s11 + $0x14] sm:$0xf]
        %v6100 = vld [vmem:[%s11 + $0x18] sm:$0xf]
        %v6101 = vld [vmem:[%s11 + $0x1c] sm:$0xf]
        %v6102 = vld [vmem:[%s12] sm:$0x1]
        %v6111 = vunpack.c.l.b16 %v6094
        %v6112 = vunpack.c.l.b16 %v6095
        %v6113 = vunpack.c.l.b16 %v6096
        %v6114 = vunpack.c.l.b16 %v6097
        %v6115 = vunpack.c.l.b16 %v6098
        %v6116 = vunpack.c.l.b16 %v6099
        %v6117 = vunpack.c.l.b16 %v6100
        %v6118 = vunpack.c.l.b16 %v6101
        %v6119 = vpack.c.b16 %v6112, %v6111
        %v6120 = vpack.c.b16 %v6114, %v6113
        %v6121 = vpack.c.b16 %v6116, %v6115
        %v6122 = vpack.c.b16 %v6118, %v6117
        %v6128 = vsel %vm4587, %v6093, 0
        %6130 = vmatprep.subr.bf16.mxu0 0
        %6131 = vmatpush1.bf16.msra.mxu0 %v6119
        %6132 = vmatprep.subr.bf16.mxu0 0
        %6133 = vmatpush1.bf16.msra.mxu0 %v6120
        %6134 = vmatprep.subr.bf16.mxu0 0
        %6135 = vmatpush1.bf16.msra.mxu0 %v6121
        %6136 = vmatprep.subr.bf16.mxu0 0
        %6137 = vmatpush1.bf16.msra.mxu0 %v6122
        %6138 = vmatprep.subr.bf16.mxu0 0
        %6139 = vmatpush1.bf16.msra.mxu0 0
        %6140 = vmatprep.subr.bf16.mxu0 0
        %6141 = vmatpush1.bf16.msra.mxu0 0
        %6142 = vmatprep.subr.bf16.mxu0 0
        %6143 = vmatpush1.bf16.msra.mxu0 0
        %6144 = vmatprep.subr.bf16.mxu0 0
        %6145 = vmatpush1.bf16.msra.mxu0 0
        %6146 = vmatprep.subr.bf16.mxu0 0
        %6147 = vmatpush1.bf16.msra.mxu0 0
        %6148 = vmatprep.subr.bf16.mxu0 0
        %6149 = vmatpush1.bf16.msra.mxu0 0
        %6150 = vmatprep.subr.bf16.mxu0 0
        %6151 = vmatpush1.bf16.msra.mxu0 0
        %6152 = vmatprep.subr.bf16.mxu0 0
        %6153 = vmatpush1.bf16.msra.mxu0 0
        %6154 = vmatprep.subr.bf16.mxu0 0
        %6155 = vmatpush1.bf16.msra.mxu0 0
        %6156 = vmatprep.subr.bf16.mxu0 0
        %6157 = vmatpush1.bf16.msra.mxu0 0
        %6158 = vmatprep.subr.bf16.mxu0 0
        %6159 = vmatpush1.bf16.msra.mxu0 0
        %6160 = vmatprep.subr.bf16.mxu0 0
        %6161 = vmatpush1.bf16.msra.mxu0 0
        %6162 = vmatprep.mubr.bf16.mxu0 0
        %6163 = vmatmul.mubr.bf16.gmra.mrb[0].mxu0 %v6128
        %v6164 = vpop.f32.mrb[0].mxu0
        %v6165 = vadd.f32 %v6102, %v6164
        %v6166 = vpop.f32.mrb[0].mxu0
        %v6167 = vpop.f32.mrb[0].mxu0
        %v6168 = vpop.f32.mrb[0].mxu0
        %6169 = vdwg.mxu0
        %vm6170 = vcmp.lt.s32.totalorder %v5599, 5
        %v6171 = vsel %vm6170, %v6165, -1e+30
        %vm6172 = vcmask 1040384
        %v6173 = vsel %vm6172, %v6171, -inf
        %6174 = vmax.xlane.f32.xlu0 %v6173
        %v6175 = vpop.xlane.xlu0 %6174
        %v6176 = vsub.f32 %v6171, %v6175
        %v6177 = vmul.f32 %v6176, 1.442695
        %v6178 = vpow.pop %v6177
        %v6179 = vsel %vm6172, %v6178, 0.0
        %6180 = vadd.xlane.f32.xlu0 %v6179
        %v6181 = vpop.xlane.xlu0 %6180
        %v6182 = vrcp.pop %v6181
        %v6183 = vmul.f32 %v6178, %v6182
        %v6184 = vsel %vm6170, %v6183, %v6165
        %6185 = vst [vmem:[%s504] sm:$0x1] %v6184
        %p6186 = scmp.lt.s32.totalorder %s33, 1
        %s6187 = scalar_select %p6186, %s33, 1
        %s6188 = smul.addr %s6187, 32
        %s6189 = smul.addr %s6188, 4
        %s6190 = scalar_lea.vmem %s13, %s6189
        %s6191 = sand.u32 %s345, 1
        %s6192 = scalar_lea.sflag [#allocation5], %s6191
        %s6193 = sand.u32 %s345, 1
        %s6194 = smul.addr %s6193, 128
        %s6195 = scalar_lea.vmem [#allocation4], %s6194
        %s6196 = sand.u32 %s371, 1
        %s6197 = scalar_lea.sflag [#allocation7], %s6196
        %s6198 = sand.u32 %s371, 1
        %s6199 = scalar_lea.vmem [#allocation6], %s6198
        // Predicated region
        $region73: #{tpu_custom_call.1} parent=71 // pred_check
          %p6200 = pneg %p329
        $region74: #{tpu_custom_call.1} parent=71 // pred_check_branch
          %6202 = sbr.rel (%p6200) target = $region76
        $region75: #{tpu_custom_call.1} parent=71 // pred_region
          _
        $region76: #{tpu_custom_call.1} parent=71 // pred_fallthru
          _
        // Predicated region
        $region77: #{tpu_custom_call.1} parent=71 // pred_check
          %p6203 = pneg %p355
        $region78: #{tpu_custom_call.1} parent=71 // pred_check_branch
          %6205 = sbr.rel (%p6203) target = $region80
        $region79: #{tpu_custom_call.1} parent=71 // pred_region
          %s6207 = ssub.s32 2048, 2048
          %6208 = vsyncadd %s6192, %s6207
          %s6209 = smul.addr %s33, 32
          %s6210 = smul.addr %s6209, 64
          %s6211 = scalar_lea.hbm %s14, %s6210
          %s6212 = sshll.u32 %s6195, 4
          %s6213 = int_to_ptr.vmem [resolvable:$true] %s6212
          %6218 = dma.vmem_to_hbm [thread:$0]  %s6213, 2048, %s6211, %s6192, 64, 64, 4
        $region80: #{tpu_custom_call.1} parent=71 // pred_fallthru
          _
        // Predicated region
        $region81: #{tpu_custom_call.1} parent=71 // pred_check
          %p6219 = pneg %p381
        $region82: #{tpu_custom_call.1} parent=71 // pred_check_branch
          %6221 = sbr.rel (%p6219) target = $region84
        $region83: #{tpu_custom_call.1} parent=71 // pred_region
          %s6223 = ssub.s32 16, 16
          %6224 = vsyncadd %s6197, %s6223
          %s6225 = smul.addr %s33, 16
          %s6226 = scalar_lea.hbm %s15, %s6225
          %s6228 = sshll.u32 %s6199, 4
          %s6229 = int_to_ptr.vmem [resolvable:$true] %s6228
          %6231 = dma.vmem_to_hbm [thread:$0]  %s6229, 16, %s6226, %s6197
        $region84: #{tpu_custom_call.1} parent=71 // pred_fallthru
          _
      $region72: #{tpu_custom_call.1} parent=5 // pred_fallthru
        _
      %p6232 = scmp.le.s32.totalorder 2, %s28
      // Predicated region
      $region85: #{tpu_custom_call.1} parent=5 // pred_check
        %p6233 = pneg %p6232
      $region86: #{tpu_custom_call.1} parent=5 // pred_check_branch
        %6235 = sbr.rel (%p6233) target = $region88
      $region87: #{tpu_custom_call.1} parent=5 // pred_region
        %s6236 = ssub.s32 %s28, 2
        // Predicated region
        $region89: #{tpu_custom_call.1} parent=87 // pred_check
          %p6237 = pneg %p335
        $region90: #{tpu_custom_call.1} parent=87 // pred_check_branch
          %6239 = sbr.rel (%p6237) target = $region92
        $region91: #{tpu_custom_call.1} parent=87 // pred_region
          %p6240 = scmp.lt.s32.totalorder %s34, 1
          %s6241 = scalar_select %p6240, %s34, 1
          %s6242 = smul.addr %s6241, 32
          %s6243 = smul.addr %s6242, 4
          %s6244 = scalar_lea.vmem %s13, %s6243
        $region92: #{tpu_custom_call.1} parent=87 // pred_fallthru
          _
        // Predicated region
        $region93: #{tpu_custom_call.1} parent=87 // pred_check
          %p6245 = pneg %p361
        $region94: #{tpu_custom_call.1} parent=87 // pred_check_branch
          %6247 = sbr.rel (%p6245) target = $region96
        $region95: #{tpu_custom_call.1} parent=87 // pred_region
          %s6248 = sand.u32 %s346, 1
          %s6249 = scalar_lea.sflag [#allocation5], %s6248
          %s6250 = sand.u32 %s346, 1
          %s6251 = smul.addr %s6250, 128
          %s6252 = scalar_lea.vmem [#allocation4], %s6251
          %6253 = dma.done %s6249, 2048
        $region96: #{tpu_custom_call.1} parent=87 // pred_fallthru
          _
        // Predicated region
        $region97: #{tpu_custom_call.1} parent=87 // pred_check
          %p6254 = pneg %p387
        $region98: #{tpu_custom_call.1} parent=87 // pred_check_branch
          %6256 = sbr.rel (%p6254) target = $region100
        $region99: #{tpu_custom_call.1} parent=87 // pred_region
          %s6257 = sand.u32 %s372, 1
          %s6258 = scalar_lea.sflag [#allocation7], %s6257
          %s6259 = sand.u32 %s372, 1
          %s6260 = scalar_lea.vmem [#allocation6], %s6259
          %6261 = dma.done %s6258, 16
        $region100: #{tpu_custom_call.1} parent=87 // pred_fallthru
          _
      $region88: #{tpu_custom_call.1} parent=5 // pred_fallthru
        _
    $region6: #{tpu_custom_call.1} parent=1 // loop_footer
      %s32 = sadd.s32 1, %s28
    $region7: #{tpu_custom_call.1} parent=1 // loop_footer_branch
      %27 = sbr.rel target = $region3
    $region8: #{tpu_custom_call.1} parent=1 // loop_exit
      _
    %6262 = vsyncpa [#allocation5], 1
    %s6263 = scalar_lea.sflag [#allocation5], 1
    %6264 = vsyncpa %s6263, 1
    %6265 = vsyncpa [#allocation7], 1
    %s6266 = scalar_lea.sflag [#allocation7], 1
    %6267 = vsyncpa %s6266, 1

</llo_original>
